<compile_context>
chip_gen: v6e
topology: v6e:2x2x1
jax: 0.10.0
libtpu: 0.0.40
codegen_flags: <defaults>
</compile_context>

<pallas_src>
import functools

import jax
import jax.numpy as jnp
import numpy as np
from jax import lax
from jax.experimental import pallas as pl
from jax.experimental.pallas import tpu as pltpu

EPS = 1e-8  # torch.cosine_similarity default eps


def _ceil_to(n, m):
    return ((n + m - 1) // m) * m


def adaptive_mem_kernel(xg_ref, trg_ref, w_hh_ref, w_out_ref, b_o_ref,
                        keys_t_ref, vals_ref, knorm_ref, h0_ref, c0_ref,
                        out_ref, h_scr, c_scr, err_scr, *, unroll):
    Tt, Bp, _ = xg_ref.shape
    H = h0_ref.shape[1]
    Ip = trg_ref.shape[2]
    bf16 = jnp.bfloat16

    # ---- carry init: only on the first time-chunk ----
    @pl.when(pl.program_id(0) == 0)
    def _():
        h_scr[...] = h0_ref[...]
        c_scr[...] = c0_ref[...]
        err_scr[...] = jnp.zeros_like(err_scr)

    # ---- loop-invariant loads / broadcasts, hoisted once (no CSE in JAX) ----
    w_hh = w_hh_ref[...]                                   # (H, 4H)  bf16
    w_out = w_out_ref[...]                                 # (H, Ip)  bf16
    b_o = jnp.broadcast_to(b_o_ref[...], (Bp, Ip))         # padded lanes = -30
    keys_t = keys_t_ref[...]                               # (Ip, S)
    vals = vals_ref[...]                                   # (S, Ip)
    knorm = knorm_ref[...]                                 # (1, S)
    first_chunk = pl.program_id(0) == 0

    def sigmoid_t(x):
        # sigmoid(x) = 0.5*tanh(x/2) + 0.5 : one EUP tanh instead of exp+recip.
        return 0.5 * jnp.tanh(0.5 * x) + 0.5

    def body(t, carry):
        h, c, err_prev = carry
        # Input-side projection (embedding + all biases folded) precomputed in
        # the wrapper; only the recurrent matmul is on the serial path.
        gates = xg_ref[t] + jnp.dot(h.astype(bf16), w_hh,
                                    preferred_element_type=jnp.float32)   # (Bp, 4H)
        sig = sigmoid_t(gates)        # packed vreg: i | f | . | o
        tnh = jnp.tanh(gates)         # packed vreg: . | . | g | .
        i_g = sig[:, 0 * H:1 * H]
        f_g = sig[:, 1 * H:2 * H]
        g_g = tnh[:, 2 * H:3 * H]
        o_g = sig[:, 3 * H:4 * H]
        c_new = f_g * c + i_g * g_g
        h_new = o_g * jnp.tanh(c_new)
        pred = sigmoid_t(jnp.dot(h_new.astype(bf16), w_out,
                                 preferred_element_type=jnp.float32) + b_o)
        # Padded feature lanes: b_out = -30 -> pred = 0 there -> err = 0 there,
        # so no per-step mask multiply is needed for the memory query.
        err = trg_ref[t] - pred

        # MemNetE2E.read_mem(query=err_prev, read_mode='softmax'):
        # cosine similarity vs keys, softmax over slots, weighted sum of values.
        q_norm = jnp.sqrt(jnp.sum(err_prev * err_prev, axis=-1, keepdims=True))  # (Bp,1)
        dots = jnp.dot(err_prev, keys_t, preferred_element_type=jnp.float32)      # (Bp,S)
        sim = dots * pl.reciprocal(jnp.maximum(q_norm * knorm, EPS))
        addr = jax.nn.softmax(sim, axis=-1)                                        # (Bp,S)
        contents = jnp.dot(addr, vals, preferred_element_type=jnp.float32)         # (Bp,Ip)

        # Global step 0 has no previous error -> no memory contribution.
        is_step0 = jnp.logical_and(first_chunk, t == 0)
        use_mem = jnp.where(is_step0, 0.0, 1.0)
        out_ref[t] = pred + use_mem * contents
        return h_new, c_new, err

    h, c, err = lax.fori_loop(0, Tt, body,
                              (h_scr[...], c_scr[...], err_scr[...]),
                              unroll=unroll)
    # Persist carries for the next time-chunk.
    h_scr[...] = h
    c_scr[...] = c
    err_scr[...] = err


def adaptive_mem_forward(inp_seq, trg_seq, params, h0, c0, *, t_chunk_cap=16):
    """inp_seq, trg_seq: (B, T, I) float32 (PyTorch batch_first). Returns (B, T, I)."""
    B, T, I = inp_seq.shape
    H = params["w_emb"].shape[1]
    S = params["keys"].shape[0]
    G = 4 * H                                   # H=32 -> G=128 = exactly one vreg

    Bp = _ceil_to(B, 8)
    Ip = _ceil_to(I, 128)
    Tt = min(T, t_chunk_cap)                    # time-chunk size (grid axis)
    Tp = _ceil_to(T, Tt)

    f32 = jnp.float32
    bf16 = jnp.bfloat16
    hi = jax.lax.Precision.HIGHEST

    # --- fold embedding into the gate projection and hoist the whole input-side
    #     projection (all T steps) out of the recurrence: one batched matmul ---
    w_xg = jnp.dot(params["w_emb"], params["w_ih"], precision=hi)                    # (I, G)
    b_xg = jnp.dot(params["b_emb"], params["w_ih"], precision=hi) + params["b_gates"]  # (1, G)
    xg = jnp.einsum("bti,ig->btg", inp_seq, w_xg, precision=hi) + b_xg               # (B, T, G)

    # Time-major, padded (padded rows / steps are zero -> finite, isolated, discarded).
    xg_tm = jnp.zeros((Tp, Bp, G), f32).at[:T, :B, :].set(jnp.transpose(xg, (1, 0, 2)))
    trg_tm = jnp.zeros((Tp, Bp, Ip), f32).at[:T, :B, :I].set(jnp.transpose(trg_seq, (1, 0, 2)))

    # Recurrent weights in bf16 (MXU-native), f32 accumulation in-kernel.
    w_hh_b = params["w_hh"].astype(bf16)                                             # (H, G)
    w_out_b = jnp.zeros((H, Ip), f32).at[:, :I].set(params["w_out"]).astype(bf16)    # (H, Ip)
    # Padded feature lanes get a large-negative bias -> sigmoid ~ 0 -> err ~ 0.
    b_out_p = jnp.full((1, Ip), -30.0, f32).at[:, :I].set(params["b_out"])

    # Memory: pre-transpose keys, precompute key norms once (grid-invariant).
    # (S=8 lanes is fine; if S ever grows, pad S to 128 and mask padded slots to
    #  -inf before the softmax.)
    keys_t_p = jnp.zeros((Ip, S), f32).at[:I, :].set(params["keys"].T)
    vals_p = jnp.zeros((S, Ip), f32).at[:, :I].set(params["values"])
    knorm = jnp.sqrt(jnp.sum(params["keys"] ** 2, axis=-1)).reshape(1, S)

    h0_p = jnp.zeros((Bp, H), f32).at[:B, :].set(h0)
    c0_p = jnp.zeros((Bp, H), f32).at[:B, :].set(c0)

    def chunked(shape):
        return pl.BlockSpec(shape, lambda i: (i, 0, 0))

    def full(shape):
        return pl.BlockSpec(shape, lambda i, n=len(shape): (0,) * n)

    kernel = functools.partial(adaptive_mem_kernel, unroll=min(Tt, 8))

    out_tm = pl.pallas_call(
        kernel,
        out_shape=jax.ShapeDtypeStruct((Tp, Bp, Ip), f32),
        grid_spec=pltpu.PrefetchScalarGridSpec(
            num_scalar_prefetch=0,
            grid=(Tp // Tt,),
            in_specs=[
                chunked((Tt, Bp, G)),    # xg  (input-side gate preactivations)
                chunked((Tt, Bp, Ip)),   # trg
                full((H, G)),            # W_hh (bf16)
                full((H, Ip)),           # W_out (bf16)
                full((1, Ip)),           # b_out (padded lanes = -30)
                full((Ip, S)),           # keys^T
                full((S, Ip)),           # values
                full((1, S)),            # key norms
                full((Bp, H)),           # h0
                full((Bp, H)),           # c0
            ],
            out_specs=chunked((Tt, Bp, Ip)),
            scratch_shapes=[
                pltpu.VMEM((Bp, H), f32),    # h carry (persists across grid steps)
                pltpu.VMEM((Bp, H), f32),    # c carry
                pltpu.VMEM((Bp, Ip), f32),   # err_prev carry
            ],
        ),
        compiler_params=pltpu.CompilerParams(
            dimension_semantics=("arbitrary",),   # serial recurrence: never parallelize
            vmem_limit_bytes=32 * 1024 * 1024),
    )(xg_tm, trg_tm, w_hh_b, w_out_b, b_out_p,
      keys_t_p, vals_p, knorm, h0_p, c0_p)

    return jnp.transpose(out_tm[:T, :B, :I], (1, 0, 2))    # back to (B, T, I)


def reference_forward(inp_seq, trg_seq, params, h0, c0):
    """Pure-JAX reference mirroring AdaptiveMemProcess.forward('test', ...)."""
    B, T, I = inp_seq.shape
    H = h0.shape[1]
    hi = jax.lax.Precision.HIGHEST
    emb = jnp.dot(inp_seq, params["w_emb"], precision=hi) + params["b_emb"]
    h, c = h0, c0
    preds, err_prev, pred_err = [], None, None
    for t in range(T):
        gates = (jnp.dot(emb[:, t], params["w_ih"], precision=hi)
                 + jnp.dot(h, params["w_hh"], precision=hi) + params["b_gates"])
        i_g = jax.nn.sigmoid(gates[:, :H])
        f_g = jax.nn.sigmoid(gates[:, H:2 * H])
        g_g = jnp.tanh(gates[:, 2 * H:3 * H])
        o_g = jax.nn.sigmoid(gates[:, 3 * H:])
        c = f_g * c + i_g * g_g
        h = o_g * jnp.tanh(c)
        pred = jax.nn.sigmoid(jnp.dot(h, params["w_out"], precision=hi) + params["b_out"])
        err = trg_seq[:, t] - pred
        if err_prev is not None:
            qn = jnp.sqrt(jnp.sum(err_prev ** 2, -1, keepdims=True))
            kn = jnp.sqrt(jnp.sum(params["keys"] ** 2, -1, keepdims=True))
            sim = jnp.dot(err_prev, params["keys"].T, precision=hi) / jnp.maximum(qn * kn.T, EPS)
            pred_err = jnp.dot(jax.nn.softmax(sim, axis=1), params["values"], precision=hi)
        err_prev = err
        if pred_err is not None:
            pred = pred + pred_err
        preds.append(pred)
    return jnp.stack(preds, axis=1)


def init_params(key, input_size, hidden_size, num_slots):
    ks = jax.random.split(key, 10)
    u = lambda k, shape, s=0.1: jax.random.uniform(k, shape, jnp.float32, -s, s)
    return {
        "w_emb": u(ks[0], (input_size, hidden_size)),
        "b_emb": u(ks[1], (1, hidden_size)),
        "w_ih": u(ks[2], (hidden_size, 4 * hidden_size)),
        "w_hh": u(ks[3], (hidden_size, 4 * hidden_size)),
        "b_gates": u(ks[4], (1, 4 * hidden_size)),        # b_ih + b_hh folded
        "w_out": u(ks[5], (hidden_size, input_size)),
        "b_out": u(ks[6], (1, input_size)),
        # MemNetE2E.reset_mem: keys/values ~ U[0, 1)
        "keys": jax.random.uniform(ks[7], (num_slots, input_size), jnp.float32),
        "values": jax.random.uniform(ks[8], (num_slots, input_size), jnp.float32),
    }


if __name__ == "__main__":
    B, T, I, H, S = 2, 8, 4, 32, 8   # batch, seq, input_size, hidden_size, num_slots

    key = jax.random.PRNGKey(0)
    k_p, k_x, k_y, k_h, k_c = jax.random.split(key, 5)
    params = init_params(k_p, I, H, S)

    inp_seq = jax.random.uniform(k_x, (B, T, I), jnp.float32)
    trg_seq = jax.random.uniform(k_y, (B, T, I), jnp.float32)
    h0 = jax.random.uniform(k_h, (B, H), jnp.float32)   # deterministic hidden_state
    c0 = jax.random.uniform(k_c, (B, H), jnp.float32)

    out = adaptive_mem_forward(inp_seq, trg_seq, params, h0, c0)
    out = jax.block_until_ready(out)

    ref = reference_forward(inp_seq, trg_seq, params, h0, c0)
    # Tolerance covers the bf16 recurrent-matmul operands (f32 accumulation) and
    # the tanh-based sigmoid; measured drift is O(1e-4) at these magnitudes.
    np.testing.assert_allclose(np.asarray(out), np.asarray(ref), rtol=2e-3, atol=2e-3)

    print("KERNEL_OK")
</pallas_src>

<mosaic_0001>
module attributes {stable_mosaic.version = 11 : i64} {
  func.func @adaptive_mem_kernel(%arg0: i32, %arg1: memref<8x8x128xf32, #tpu.memory_space<vmem>>, %arg2: memref<8x8x128xf32, #tpu.memory_space<vmem>>, %arg3: memref<32x128xbf16, #tpu.memory_space<vmem>>, %arg4: memref<32x128xbf16, #tpu.memory_space<vmem>>, %arg5: memref<1x128xf32, #tpu.memory_space<vmem>>, %arg6: memref<128x8xf32, #tpu.memory_space<vmem>>, %arg7: memref<8x128xf32, #tpu.memory_space<vmem>>, %arg8: memref<1x8xf32, #tpu.memory_space<vmem>>, %arg9: memref<8x32xf32, #tpu.memory_space<vmem>>, %arg10: memref<8x32xf32, #tpu.memory_space<vmem>>, %arg11: memref<8x8x128xf32, #tpu.memory_space<vmem>>, %arg12: memref<8x32xf32, #tpu.memory_space<vmem>>, %arg13: memref<8x32xf32, #tpu.memory_space<vmem>>, %arg14: memref<8x128xf32, #tpu.memory_space<vmem>>) attributes {dimension_semantics = [#tpu.dimension_semantics<arbitrary>], iteration_bounds = array<i64: 1>, scalar_prefetch = 0 : i64, scratch_operands = 3 : i64, tpu.core_type = #tpu.core_type<tc>, window_params = [{transform_indices = @transform_0, window_bounds = array<i64: 8, 8, 128>}, {transform_indices = @transform_1, window_bounds = array<i64: 8, 8, 128>}, {pipeline_mode = #tpu.pipeline_mode<synchronous>, transform_indices = @transform_2, window_bounds = array<i64: 32, 128>}, {pipeline_mode = #tpu.pipeline_mode<synchronous>, transform_indices = @transform_3, window_bounds = array<i64: 32, 128>}, {pipeline_mode = #tpu.pipeline_mode<synchronous>, transform_indices = @transform_4, window_bounds = array<i64: 1, 128>}, {pipeline_mode = #tpu.pipeline_mode<synchronous>, transform_indices = @transform_5, window_bounds = array<i64: 128, 8>}, {pipeline_mode = #tpu.pipeline_mode<synchronous>, transform_indices = @transform_6, window_bounds = array<i64: 8, 128>}, {pipeline_mode = #tpu.pipeline_mode<synchronous>, transform_indices = @transform_7, window_bounds = array<i64: 1, 8>}, {pipeline_mode = #tpu.pipeline_mode<synchronous>, transform_indices = @transform_8, window_bounds = array<i64: 8, 32>}, {pipeline_mode = #tpu.pipeline_mode<synchronous>, transform_indices = @transform_9, window_bounds = array<i64: 8, 32>}, {transform_indices = @transform_10, window_bounds = array<i64: 8, 8, 128>}]} {
    %c0_i32 = arith.constant 0 : i32
    %0 = arith.cmpi eq, %arg0, %c0_i32 : i32
    %1 = arith.extui %0 : i1 to i32
    %c0_i32_0 = arith.constant 0 : i32
    %2 = arith.cmpi ne, %1, %c0_i32_0 : i32
    scf.if %2 {
      %c0_217 = arith.constant 0 : index
      %c0_218 = arith.constant 0 : index
      %586 = vector.load %arg9[%c0_217, %c0_218] : memref<8x32xf32, #tpu.memory_space<vmem>>, vector<8x32xf32>
      %c0_219 = arith.constant 0 : index
      %c0_220 = arith.constant 0 : index
      %587 = vector.load %arg12[%c0_219, %c0_220] : memref<8x32xf32, #tpu.memory_space<vmem>>, vector<8x32xf32>
      tpu.vector_store %arg12[%c0_219, %c0_220], %586 {strides = array<i32>} : memref<8x32xf32, #tpu.memory_space<vmem>>, vector<8x32xf32>,
      %c0_221 = arith.constant 0 : index
      %c0_222 = arith.constant 0 : index
      %588 = vector.load %arg10[%c0_221, %c0_222] : memref<8x32xf32, #tpu.memory_space<vmem>>, vector<8x32xf32>
      %c0_223 = arith.constant 0 : index
      %c0_224 = arith.constant 0 : index
      %589 = vector.load %arg13[%c0_223, %c0_224] : memref<8x32xf32, #tpu.memory_space<vmem>>, vector<8x32xf32>
      tpu.vector_store %arg13[%c0_223, %c0_224], %588 {strides = array<i32>} : memref<8x32xf32, #tpu.memory_space<vmem>>, vector<8x32xf32>,
      %cst_225 = arith.constant 0.000000e+00 : f32
      %590 = vector.broadcast %cst_225 : f32 to vector<8x128xf32>
      %c0_226 = arith.constant 0 : index
      %c0_227 = arith.constant 0 : index
      %591 = vector.load %arg14[%c0_226, %c0_227] : memref<8x128xf32, #tpu.memory_space<vmem>>, vector<8x128xf32>
      tpu.vector_store %arg14[%c0_226, %c0_227], %590 {strides = array<i32>} : memref<8x128xf32, #tpu.memory_space<vmem>>, vector<8x128xf32>,
    } else {
    }
    %c0 = arith.constant 0 : index
    %c0_1 = arith.constant 0 : index
    %3 = vector.load %arg3[%c0, %c0_1] : memref<32x128xbf16, #tpu.memory_space<vmem>>, vector<32x128xbf16>
    %c0_2 = arith.constant 0 : index
    %c0_3 = arith.constant 0 : index
    %4 = vector.load %arg4[%c0_2, %c0_3] : memref<32x128xbf16, #tpu.memory_space<vmem>>, vector<32x128xbf16>
    %c0_4 = arith.constant 0 : index
    %c0_5 = arith.constant 0 : index
    %5 = vector.load %arg5[%c0_4, %c0_5] : memref<1x128xf32, #tpu.memory_space<vmem>>, vector<1x128xf32>
    %6 = vector.shape_cast %5 : vector<1x128xf32> to vector<1x128xf32>
    %7 = vector.broadcast %6 : vector<1x128xf32> to vector<8x128xf32>
    %c0_6 = arith.constant 0 : index
    %c0_7 = arith.constant 0 : index
    %8 = vector.load %arg6[%c0_6, %c0_7] : memref<128x8xf32, #tpu.memory_space<vmem>>, vector<128x8xf32>
    %c0_8 = arith.constant 0 : index
    %c0_9 = arith.constant 0 : index
    %9 = vector.load %arg7[%c0_8, %c0_9] : memref<8x128xf32, #tpu.memory_space<vmem>>, vector<8x128xf32>
    %c0_10 = arith.constant 0 : index
    %c0_11 = arith.constant 0 : index
    %10 = vector.load %arg8[%c0_10, %c0_11] : memref<1x8xf32, #tpu.memory_space<vmem>>, vector<1x8xf32>
    %c0_i32_12 = arith.constant 0 : i32
    %11 = arith.cmpi eq, %arg0, %c0_i32_12 : i32
    %c0_13 = arith.constant 0 : index
    %c0_14 = arith.constant 0 : index
    %12 = vector.load %arg12[%c0_13, %c0_14] : memref<8x32xf32, #tpu.memory_space<vmem>>, vector<8x32xf32>
    %c0_15 = arith.constant 0 : index
    %c0_16 = arith.constant 0 : index
    %13 = vector.load %arg13[%c0_15, %c0_16] : memref<8x32xf32, #tpu.memory_space<vmem>>, vector<8x32xf32>
    %c0_17 = arith.constant 0 : index
    %c0_18 = arith.constant 0 : index
    %14 = vector.load %arg14[%c0_17, %c0_18] : memref<8x128xf32, #tpu.memory_space<vmem>>, vector<8x128xf32>
    %c0_i32_19 = arith.constant 0 : i32
    %15 = arith.index_cast %c0_i32_19 : i32 to index
    %c0_20 = arith.constant 0 : index
    %c0_21 = arith.constant 0 : index
    %16 = vector.load %arg1[%15, %c0_20, %c0_21] : memref<8x8x128xf32, #tpu.memory_space<vmem>>, vector<1x8x128xf32>
    %17 = vector.shape_cast %16 : vector<1x8x128xf32> to vector<8x128xf32>
    %18 = arith.truncf %12 : vector<8x32xf32> to vector<8x32xbf16>
    %cst = arith.constant dense<0.000000e+00> : vector<8x128xf32>
    %19 = tpu.matmul %18, %3, %cst {dimension_numbers = #tpu.dot_dimension_numbers<[1], [0], [0], [1], [0, 0, 1, 1], [], []>} : vector<8x32xbf16>, vector<32x128xbf16>, vector<8x128xf32> -> vector<8x128xf32>
    %20 = arith.addf %17, %19 : vector<8x128xf32>
    %cst_22 = arith.constant 5.000000e-01 : f32
    %21 = vector.broadcast %cst_22 : f32 to vector<8x128xf32>
    %22 = arith.mulf %21, %20 : vector<8x128xf32>
    %23 = math.tanh %22 : vector<8x128xf32>
    %cst_23 = arith.constant 5.000000e-01 : f32
    %24 = vector.broadcast %cst_23 : f32 to vector<8x128xf32>
    %25 = arith.mulf %24, %23 : vector<8x128xf32>
    %cst_24 = arith.constant 5.000000e-01 : f32
    %26 = vector.broadcast %cst_24 : f32 to vector<8x128xf32>
    %27 = arith.addf %25, %26 : vector<8x128xf32>
    %28 = math.tanh %20 : vector<8x128xf32>
    %29 = vector.extract_strided_slice %27 {offsets = [0, 0], sizes = [8, 32], strides = [1, 1]} : vector<8x128xf32> to vector<8x32xf32>
    %30 = vector.extract_strided_slice %27 {offsets = [0, 32], sizes = [8, 32], strides = [1, 1]} : vector<8x128xf32> to vector<8x32xf32>
    %31 = vector.extract_strided_slice %28 {offsets = [0, 64], sizes = [8, 32], strides = [1, 1]} : vector<8x128xf32> to vector<8x32xf32>
    %32 = vector.extract_strided_slice %27 {offsets = [0, 96], sizes = [8, 32], strides = [1, 1]} : vector<8x128xf32> to vector<8x32xf32>
    %33 = arith.mulf %30, %13 : vector<8x32xf32>
    %34 = arith.mulf %29, %31 : vector<8x32xf32>
    %35 = arith.addf %33, %34 : vector<8x32xf32>
    %36 = math.tanh %35 : vector<8x32xf32>
    %37 = arith.mulf %32, %36 : vector<8x32xf32>
    %38 = arith.truncf %37 : vector<8x32xf32> to vector<8x32xbf16>
    %cst_25 = arith.constant dense<0.000000e+00> : vector<8x128xf32>
    %39 = tpu.matmul %38, %4, %cst_25 {dimension_numbers = #tpu.dot_dimension_numbers<[1], [0], [0], [1], [0, 0, 1, 1], [], []>} : vector<8x32xbf16>, vector<32x128xbf16>, vector<8x128xf32> -> vector<8x128xf32>
    %40 = arith.addf %39, %7 : vector<8x128xf32>
    %cst_26 = arith.constant 5.000000e-01 : f32
    %41 = vector.broadcast %cst_26 : f32 to vector<8x128xf32>
    %42 = arith.mulf %41, %40 : vector<8x128xf32>
    %43 = math.tanh %42 : vector<8x128xf32>
    %cst_27 = arith.constant 5.000000e-01 : f32
    %44 = vector.broadcast %cst_27 : f32 to vector<8x128xf32>
    %45 = arith.mulf %44, %43 : vector<8x128xf32>
    %cst_28 = arith.constant 5.000000e-01 : f32
    %46 = vector.broadcast %cst_28 : f32 to vector<8x128xf32>
    %47 = arith.addf %45, %46 : vector<8x128xf32>
    %48 = arith.index_cast %c0_i32_19 : i32 to index
    %c0_29 = arith.constant 0 : index
    %c0_30 = arith.constant 0 : index
    %49 = vector.load %arg2[%48, %c0_29, %c0_30] : memref<8x8x128xf32, #tpu.memory_space<vmem>>, vector<1x8x128xf32>
    %50 = vector.shape_cast %49 : vector<1x8x128xf32> to vector<8x128xf32>
    %51 = arith.subf %50, %47 : vector<8x128xf32>
    %52 = arith.mulf %14, %14 : vector<8x128xf32>
    %cst_31 = arith.constant dense<0.000000e+00> : vector<8xf32>
    %53 = vector.multi_reduction <add>, %52, %cst_31 [1] : vector<8x128xf32> to vector<8xf32>
    %54 = vector.shape_cast %53 : vector<8xf32> to vector<8x1xf32>
    %55 = math.sqrt %54 : vector<8x1xf32>
    %cst_32 = arith.constant dense<0.000000e+00> : vector<8x8xf32>
    %56 = tpu.matmul %14, %8, %cst_32 {dimension_numbers = #tpu.dot_dimension_numbers<[1], [0], [0], [1], [0, 0, 1, 1], [], []>} : vector<8x128xf32>, vector<128x8xf32>, vector<8x8xf32> -> vector<8x8xf32>
    %57 = vector.broadcast %55 : vector<8x1xf32> to vector<8x8xf32>
    %58 = vector.broadcast %10 : vector<1x8xf32> to vector<8x8xf32>
    %59 = arith.mulf %57, %58 : vector<8x8xf32>
    %cst_33 = arith.constant 9.99999993E-9 : f32
    %60 = vector.broadcast %cst_33 : f32 to vector<8x8xf32>
    %61 = arith.maximumf %59, %60 : vector<8x8xf32>
    %62 = tpu.reciprocal %61 : vector<8x8xf32> -> vector<8x8xf32>
    %63 = arith.mulf %56, %62 : vector<8x8xf32>
    %cst_34 = arith.constant dense<0xFF800000> : vector<8xf32>
    %64 = vector.multi_reduction <maximumf>, %63, %cst_34 [1] : vector<8x8xf32> to vector<8xf32>
    %cst_35 = arith.constant 0xFF800000 : f32
    %65 = vector.broadcast %cst_35 : f32 to vector<8xf32>
    %66 = arith.maximumf %65, %64 : vector<8xf32>
    %67 = vector.shape_cast %66 : vector<8xf32> to vector<8x1xf32>
    %68 = vector.broadcast %67 : vector<8x1xf32> to vector<8x8xf32>
    %69 = arith.subf %63, %68 : vector<8x8xf32>
    %70 = math.exp %69 : vector<8x8xf32>
    %cst_36 = arith.constant dense<0.000000e+00> : vector<8xf32>
    %71 = vector.multi_reduction <add>, %70, %cst_36 [1] : vector<8x8xf32> to vector<8xf32>
    %72 = vector.shape_cast %71 : vector<8xf32> to vector<8x1xf32>
    %73 = vector.broadcast %72 : vector<8x1xf32> to vector<8x8xf32>
    %74 = arith.divf %70, %73 : vector<8x8xf32>
    %cst_37 = arith.constant dense<0.000000e+00> : vector<8x128xf32>
    %75 = tpu.matmul %74, %9, %cst_37 {dimension_numbers = #tpu.dot_dimension_numbers<[1], [0], [0], [1], [0, 0, 1, 1], [], []>} : vector<8x8xf32>, vector<8x128xf32>, vector<8x128xf32> -> vector<8x128xf32>
    %c0_i32_38 = arith.constant 0 : i32
    %76 = arith.cmpi eq, %c0_i32_19, %c0_i32_38 : i32
    %77 = arith.andi %11, %76 : i1
    %cst_39 = arith.constant 0.000000e+00 : f32
    %cst_40 = arith.constant 1.000000e+00 : f32
    %78 = arith.select %77, %cst_39, %cst_40 : f32
    %79 = vector.broadcast %78 : f32 to vector<8x128xf32>
    %80 = arith.mulf %79, %75 : vector<8x128xf32>
    %81 = arith.addf %47, %80 : vector<8x128xf32>
    %82 = arith.index_cast %c0_i32_19 : i32 to index
    %c0_41 = arith.constant 0 : index
    %c0_42 = arith.constant 0 : index
    %83 = vector.load %arg11[%82, %c0_41, %c0_42] : memref<8x8x128xf32, #tpu.memory_space<vmem>>, vector<1x8x128xf32>
    %84 = vector.shape_cast %83 : vector<1x8x128xf32> to vector<8x128xf32>
    %85 = vector.shape_cast %81 : vector<8x128xf32> to vector<1x8x128xf32>
    tpu.vector_store %arg11[%82, %c0_41, %c0_42], %85 {strides = array<i32>} : memref<8x8x128xf32, #tpu.memory_space<vmem>>, vector<1x8x128xf32>,
    %c1_i32 = arith.constant 1 : i32
    %86 = arith.index_cast %c1_i32 : i32 to index
    %c0_43 = arith.constant 0 : index
    %c0_44 = arith.constant 0 : index
    %87 = vector.load %arg1[%86, %c0_43, %c0_44] : memref<8x8x128xf32, #tpu.memory_space<vmem>>, vector<1x8x128xf32>
    %88 = vector.shape_cast %87 : vector<1x8x128xf32> to vector<8x128xf32>
    %89 = arith.truncf %37 : vector<8x32xf32> to vector<8x32xbf16>
    %cst_45 = arith.constant dense<0.000000e+00> : vector<8x128xf32>
    %90 = tpu.matmul %89, %3, %cst_45 {dimension_numbers = #tpu.dot_dimension_numbers<[1], [0], [0], [1], [0, 0, 1, 1], [], []>} : vector<8x32xbf16>, vector<32x128xbf16>, vector<8x128xf32> -> vector<8x128xf32>
    %91 = arith.addf %88, %90 : vector<8x128xf32>
    %cst_46 = arith.constant 5.000000e-01 : f32
    %92 = vector.broadcast %cst_46 : f32 to vector<8x128xf32>
    %93 = arith.mulf %92, %91 : vector<8x128xf32>
    %94 = math.tanh %93 : vector<8x128xf32>
    %cst_47 = arith.constant 5.000000e-01 : f32
    %95 = vector.broadcast %cst_47 : f32 to vector<8x128xf32>
    %96 = arith.mulf %95, %94 : vector<8x128xf32>
    %cst_48 = arith.constant 5.000000e-01 : f32
    %97 = vector.broadcast %cst_48 : f32 to vector<8x128xf32>
    %98 = arith.addf %96, %97 : vector<8x128xf32>
    %99 = math.tanh %91 : vector<8x128xf32>
    %100 = vector.extract_strided_slice %98 {offsets = [0, 0], sizes = [8, 32], strides = [1, 1]} : vector<8x128xf32> to vector<8x32xf32>
    %101 = vector.extract_strided_slice %98 {offsets = [0, 32], sizes = [8, 32], strides = [1, 1]} : vector<8x128xf32> to vector<8x32xf32>
    %102 = vector.extract_strided_slice %99 {offsets = [0, 64], sizes = [8, 32], strides = [1, 1]} : vector<8x128xf32> to vector<8x32xf32>
    %103 = vector.extract_strided_slice %98 {offsets = [0, 96], sizes = [8, 32], strides = [1, 1]} : vector<8x128xf32> to vector<8x32xf32>
    %104 = arith.mulf %101, %35 : vector<8x32xf32>
    %105 = arith.mulf %100, %102 : vector<8x32xf32>
    %106 = arith.addf %104, %105 : vector<8x32xf32>
    %107 = math.tanh %106 : vector<8x32xf32>
    %108 = arith.mulf %103, %107 : vector<8x32xf32>
    %109 = arith.truncf %108 : vector<8x32xf32> to vector<8x32xbf16>
    %cst_49 = arith.constant dense<0.000000e+00> : vector<8x128xf32>
    %110 = tpu.matmul %109, %4, %cst_49 {dimension_numbers = #tpu.dot_dimension_numbers<[1], [0], [0], [1], [0, 0, 1, 1], [], []>} : vector<8x32xbf16>, vector<32x128xbf16>, vector<8x128xf32> -> vector<8x128xf32>
    %111 = arith.addf %110, %7 : vector<8x128xf32>
    %cst_50 = arith.constant 5.000000e-01 : f32
    %112 = vector.broadcast %cst_50 : f32 to vector<8x128xf32>
    %113 = arith.mulf %112, %111 : vector<8x128xf32>
    %114 = math.tanh %113 : vector<8x128xf32>
    %cst_51 = arith.constant 5.000000e-01 : f32
    %115 = vector.broadcast %cst_51 : f32 to vector<8x128xf32>
    %116 = arith.mulf %115, %114 : vector<8x128xf32>
    %cst_52 = arith.constant 5.000000e-01 : f32
    %117 = vector.broadcast %cst_52 : f32 to vector<8x128xf32>
    %118 = arith.addf %116, %117 : vector<8x128xf32>
    %119 = arith.index_cast %c1_i32 : i32 to index
    %c0_53 = arith.constant 0 : index
    %c0_54 = arith.constant 0 : index
    %120 = vector.load %arg2[%119, %c0_53, %c0_54] : memref<8x8x128xf32, #tpu.memory_space<vmem>>, vector<1x8x128xf32>
    %121 = vector.shape_cast %120 : vector<1x8x128xf32> to vector<8x128xf32>
    %122 = arith.subf %121, %118 : vector<8x128xf32>
    %123 = arith.mulf %51, %51 : vector<8x128xf32>
    %cst_55 = arith.constant dense<0.000000e+00> : vector<8xf32>
    %124 = vector.multi_reduction <add>, %123, %cst_55 [1] : vector<8x128xf32> to vector<8xf32>
    %125 = vector.shape_cast %124 : vector<8xf32> to vector<8x1xf32>
    %126 = math.sqrt %125 : vector<8x1xf32>
    %cst_56 = arith.constant dense<0.000000e+00> : vector<8x8xf32>
    %127 = tpu.matmul %51, %8, %cst_56 {dimension_numbers = #tpu.dot_dimension_numbers<[1], [0], [0], [1], [0, 0, 1, 1], [], []>} : vector<8x128xf32>, vector<128x8xf32>, vector<8x8xf32> -> vector<8x8xf32>
    %128 = vector.broadcast %126 : vector<8x1xf32> to vector<8x8xf32>
    %129 = vector.broadcast %10 : vector<1x8xf32> to vector<8x8xf32>
    %130 = arith.mulf %128, %129 : vector<8x8xf32>
    %cst_57 = arith.constant 9.99999993E-9 : f32
    %131 = vector.broadcast %cst_57 : f32 to vector<8x8xf32>
    %132 = arith.maximumf %130, %131 : vector<8x8xf32>
    %133 = tpu.reciprocal %132 : vector<8x8xf32> -> vector<8x8xf32>
    %134 = arith.mulf %127, %133 : vector<8x8xf32>
    %cst_58 = arith.constant dense<0xFF800000> : vector<8xf32>
    %135 = vector.multi_reduction <maximumf>, %134, %cst_58 [1] : vector<8x8xf32> to vector<8xf32>
    %cst_59 = arith.constant 0xFF800000 : f32
    %136 = vector.broadcast %cst_59 : f32 to vector<8xf32>
    %137 = arith.maximumf %136, %135 : vector<8xf32>
    %138 = vector.shape_cast %137 : vector<8xf32> to vector<8x1xf32>
    %139 = vector.broadcast %138 : vector<8x1xf32> to vector<8x8xf32>
    %140 = arith.subf %134, %139 : vector<8x8xf32>
    %141 = math.exp %140 : vector<8x8xf32>
    %cst_60 = arith.constant dense<0.000000e+00> : vector<8xf32>
    %142 = vector.multi_reduction <add>, %141, %cst_60 [1] : vector<8x8xf32> to vector<8xf32>
    %143 = vector.shape_cast %142 : vector<8xf32> to vector<8x1xf32>
    %144 = vector.broadcast %143 : vector<8x1xf32> to vector<8x8xf32>
    %145 = arith.divf %141, %144 : vector<8x8xf32>
    %cst_61 = arith.constant dense<0.000000e+00> : vector<8x128xf32>
    %146 = tpu.matmul %145, %9, %cst_61 {dimension_numbers = #tpu.dot_dimension_numbers<[1], [0], [0], [1], [0, 0, 1, 1], [], []>} : vector<8x8xf32>, vector<8x128xf32>, vector<8x128xf32> -> vector<8x128xf32>
    %c0_i32_62 = arith.constant 0 : i32
    %147 = arith.cmpi eq, %c1_i32, %c0_i32_62 : i32
    %148 = arith.andi %11, %147 : i1
    %cst_63 = arith.constant 0.000000e+00 : f32
    %cst_64 = arith.constant 1.000000e+00 : f32
    %149 = arith.select %148, %cst_63, %cst_64 : f32
    %150 = vector.broadcast %149 : f32 to vector<8x128xf32>
    %151 = arith.mulf %150, %146 : vector<8x128xf32>
    %152 = arith.addf %118, %151 : vector<8x128xf32>
    %153 = arith.index_cast %c1_i32 : i32 to index
    %c0_65 = arith.constant 0 : index
    %c0_66 = arith.constant 0 : index
    %154 = vector.load %arg11[%153, %c0_65, %c0_66] : memref<8x8x128xf32, #tpu.memory_space<vmem>>, vector<1x8x128xf32>
    %155 = vector.shape_cast %154 : vector<1x8x128xf32> to vector<8x128xf32>
    %156 = vector.shape_cast %152 : vector<8x128xf32> to vector<1x8x128xf32>
    tpu.vector_store %arg11[%153, %c0_65, %c0_66], %156 {strides = array<i32>} : memref<8x8x128xf32, #tpu.memory_space<vmem>>, vector<1x8x128xf32>,
    %c2_i32 = arith.constant 2 : i32
    %157 = arith.index_cast %c2_i32 : i32 to index
    %c0_67 = arith.constant 0 : index
    %c0_68 = arith.constant 0 : index
    %158 = vector.load %arg1[%157, %c0_67, %c0_68] : memref<8x8x128xf32, #tpu.memory_space<vmem>>, vector<1x8x128xf32>
    %159 = vector.shape_cast %158 : vector<1x8x128xf32> to vector<8x128xf32>
    %160 = arith.truncf %108 : vector<8x32xf32> to vector<8x32xbf16>
    %cst_69 = arith.constant dense<0.000000e+00> : vector<8x128xf32>
    %161 = tpu.matmul %160, %3, %cst_69 {dimension_numbers = #tpu.dot_dimension_numbers<[1], [0], [0], [1], [0, 0, 1, 1], [], []>} : vector<8x32xbf16>, vector<32x128xbf16>, vector<8x128xf32> -> vector<8x128xf32>
    %162 = arith.addf %159, %161 : vector<8x128xf32>
    %cst_70 = arith.constant 5.000000e-01 : f32
    %163 = vector.broadcast %cst_70 : f32 to vector<8x128xf32>
    %164 = arith.mulf %163, %162 : vector<8x128xf32>
    %165 = math.tanh %164 : vector<8x128xf32>
    %cst_71 = arith.constant 5.000000e-01 : f32
    %166 = vector.broadcast %cst_71 : f32 to vector<8x128xf32>
    %167 = arith.mulf %166, %165 : vector<8x128xf32>
    %cst_72 = arith.constant 5.000000e-01 : f32
    %168 = vector.broadcast %cst_72 : f32 to vector<8x128xf32>
    %169 = arith.addf %167, %168 : vector<8x128xf32>
    %170 = math.tanh %162 : vector<8x128xf32>
    %171 = vector.extract_strided_slice %169 {offsets = [0, 0], sizes = [8, 32], strides = [1, 1]} : vector<8x128xf32> to vector<8x32xf32>
    %172 = vector.extract_strided_slice %169 {offsets = [0, 32], sizes = [8, 32], strides = [1, 1]} : vector<8x128xf32> to vector<8x32xf32>
    %173 = vector.extract_strided_slice %170 {offsets = [0, 64], sizes = [8, 32], strides = [1, 1]} : vector<8x128xf32> to vector<8x32xf32>
    %174 = vector.extract_strided_slice %169 {offsets = [0, 96], sizes = [8, 32], strides = [1, 1]} : vector<8x128xf32> to vector<8x32xf32>
    %175 = arith.mulf %172, %106 : vector<8x32xf32>
    %176 = arith.mulf %171, %173 : vector<8x32xf32>
    %177 = arith.addf %175, %176 : vector<8x32xf32>
    %178 = math.tanh %177 : vector<8x32xf32>
    %179 = arith.mulf %174, %178 : vector<8x32xf32>
    %180 = arith.truncf %179 : vector<8x32xf32> to vector<8x32xbf16>
    %cst_73 = arith.constant dense<0.000000e+00> : vector<8x128xf32>
    %181 = tpu.matmul %180, %4, %cst_73 {dimension_numbers = #tpu.dot_dimension_numbers<[1], [0], [0], [1], [0, 0, 1, 1], [], []>} : vector<8x32xbf16>, vector<32x128xbf16>, vector<8x128xf32> -> vector<8x128xf32>
    %182 = arith.addf %181, %7 : vector<8x128xf32>
    %cst_74 = arith.constant 5.000000e-01 : f32
    %183 = vector.broadcast %cst_74 : f32 to vector<8x128xf32>
    %184 = arith.mulf %183, %182 : vector<8x128xf32>
    %185 = math.tanh %184 : vector<8x128xf32>
    %cst_75 = arith.constant 5.000000e-01 : f32
    %186 = vector.broadcast %cst_75 : f32 to vector<8x128xf32>
    %187 = arith.mulf %186, %185 : vector<8x128xf32>
    %cst_76 = arith.constant 5.000000e-01 : f32
    %188 = vector.broadcast %cst_76 : f32 to vector<8x128xf32>
    %189 = arith.addf %187, %188 : vector<8x128xf32>
    %190 = arith.index_cast %c2_i32 : i32 to index
    %c0_77 = arith.constant 0 : index
    %c0_78 = arith.constant 0 : index
    %191 = vector.load %arg2[%190, %c0_77, %c0_78] : memref<8x8x128xf32, #tpu.memory_space<vmem>>, vector<1x8x128xf32>
    %192 = vector.shape_cast %191 : vector<1x8x128xf32> to vector<8x128xf32>
    %193 = arith.subf %192, %189 : vector<8x128xf32>
    %194 = arith.mulf %122, %122 : vector<8x128xf32>
    %cst_79 = arith.constant dense<0.000000e+00> : vector<8xf32>
    %195 = vector.multi_reduction <add>, %194, %cst_79 [1] : vector<8x128xf32> to vector<8xf32>
    %196 = vector.shape_cast %195 : vector<8xf32> to vector<8x1xf32>
    %197 = math.sqrt %196 : vector<8x1xf32>
    %cst_80 = arith.constant dense<0.000000e+00> : vector<8x8xf32>
    %198 = tpu.matmul %122, %8, %cst_80 {dimension_numbers = #tpu.dot_dimension_numbers<[1], [0], [0], [1], [0, 0, 1, 1], [], []>} : vector<8x128xf32>, vector<128x8xf32>, vector<8x8xf32> -> vector<8x8xf32>
    %199 = vector.broadcast %197 : vector<8x1xf32> to vector<8x8xf32>
    %200 = vector.broadcast %10 : vector<1x8xf32> to vector<8x8xf32>
    %201 = arith.mulf %199, %200 : vector<8x8xf32>
    %cst_81 = arith.constant 9.99999993E-9 : f32
    %202 = vector.broadcast %cst_81 : f32 to vector<8x8xf32>
    %203 = arith.maximumf %201, %202 : vector<8x8xf32>
    %204 = tpu.reciprocal %203 : vector<8x8xf32> -> vector<8x8xf32>
    %205 = arith.mulf %198, %204 : vector<8x8xf32>
    %cst_82 = arith.constant dense<0xFF800000> : vector<8xf32>
    %206 = vector.multi_reduction <maximumf>, %205, %cst_82 [1] : vector<8x8xf32> to vector<8xf32>
    %cst_83 = arith.constant 0xFF800000 : f32
    %207 = vector.broadcast %cst_83 : f32 to vector<8xf32>
    %208 = arith.maximumf %207, %206 : vector<8xf32>
    %209 = vector.shape_cast %208 : vector<8xf32> to vector<8x1xf32>
    %210 = vector.broadcast %209 : vector<8x1xf32> to vector<8x8xf32>
    %211 = arith.subf %205, %210 : vector<8x8xf32>
    %212 = math.exp %211 : vector<8x8xf32>
    %cst_84 = arith.constant dense<0.000000e+00> : vector<8xf32>
    %213 = vector.multi_reduction <add>, %212, %cst_84 [1] : vector<8x8xf32> to vector<8xf32>
    %214 = vector.shape_cast %213 : vector<8xf32> to vector<8x1xf32>
    %215 = vector.broadcast %214 : vector<8x1xf32> to vector<8x8xf32>
    %216 = arith.divf %212, %215 : vector<8x8xf32>
    %cst_85 = arith.constant dense<0.000000e+00> : vector<8x128xf32>
    %217 = tpu.matmul %216, %9, %cst_85 {dimension_numbers = #tpu.dot_dimension_numbers<[1], [0], [0], [1], [0, 0, 1, 1], [], []>} : vector<8x8xf32>, vector<8x128xf32>, vector<8x128xf32> -> vector<8x128xf32>
    %c0_i32_86 = arith.constant 0 : i32
    %218 = arith.cmpi eq, %c2_i32, %c0_i32_86 : i32
    %219 = arith.andi %11, %218 : i1
    %cst_87 = arith.constant 0.000000e+00 : f32
    %cst_88 = arith.constant 1.000000e+00 : f32
    %220 = arith.select %219, %cst_87, %cst_88 : f32
    %221 = vector.broadcast %220 : f32 to vector<8x128xf32>
    %222 = arith.mulf %221, %217 : vector<8x128xf32>
    %223 = arith.addf %189, %222 : vector<8x128xf32>
    %224 = arith.index_cast %c2_i32 : i32 to index
    %c0_89 = arith.constant 0 : index
    %c0_90 = arith.constant 0 : index
    %225 = vector.load %arg11[%224, %c0_89, %c0_90] : memref<8x8x128xf32, #tpu.memory_space<vmem>>, vector<1x8x128xf32>
    %226 = vector.shape_cast %225 : vector<1x8x128xf32> to vector<8x128xf32>
    %227 = vector.shape_cast %223 : vector<8x128xf32> to vector<1x8x128xf32>
    tpu.vector_store %arg11[%224, %c0_89, %c0_90], %227 {strides = array<i32>} : memref<8x8x128xf32, #tpu.memory_space<vmem>>, vector<1x8x128xf32>,
    %c3_i32 = arith.constant 3 : i32
    %228 = arith.index_cast %c3_i32 : i32 to index
    %c0_91 = arith.constant 0 : index
    %c0_92 = arith.constant 0 : index
    %229 = vector.load %arg1[%228, %c0_91, %c0_92] : memref<8x8x128xf32, #tpu.memory_space<vmem>>, vector<1x8x128xf32>
    %230 = vector.shape_cast %229 : vector<1x8x128xf32> to vector<8x128xf32>
    %231 = arith.truncf %179 : vector<8x32xf32> to vector<8x32xbf16>
    %cst_93 = arith.constant dense<0.000000e+00> : vector<8x128xf32>
    %232 = tpu.matmul %231, %3, %cst_93 {dimension_numbers = #tpu.dot_dimension_numbers<[1], [0], [0], [1], [0, 0, 1, 1], [], []>} : vector<8x32xbf16>, vector<32x128xbf16>, vector<8x128xf32> -> vector<8x128xf32>
    %233 = arith.addf %230, %232 : vector<8x128xf32>
    %cst_94 = arith.constant 5.000000e-01 : f32
    %234 = vector.broadcast %cst_94 : f32 to vector<8x128xf32>
    %235 = arith.mulf %234, %233 : vector<8x128xf32>
    %236 = math.tanh %235 : vector<8x128xf32>
    %cst_95 = arith.constant 5.000000e-01 : f32
    %237 = vector.broadcast %cst_95 : f32 to vector<8x128xf32>
    %238 = arith.mulf %237, %236 : vector<8x128xf32>
    %cst_96 = arith.constant 5.000000e-01 : f32
    %239 = vector.broadcast %cst_96 : f32 to vector<8x128xf32>
    %240 = arith.addf %238, %239 : vector<8x128xf32>
    %241 = math.tanh %233 : vector<8x128xf32>
    %242 = vector.extract_strided_slice %240 {offsets = [0, 0], sizes = [8, 32], strides = [1, 1]} : vector<8x128xf32> to vector<8x32xf32>
    %243 = vector.extract_strided_slice %240 {offsets = [0, 32], sizes = [8, 32], strides = [1, 1]} : vector<8x128xf32> to vector<8x32xf32>
    %244 = vector.extract_strided_slice %241 {offsets = [0, 64], sizes = [8, 32], strides = [1, 1]} : vector<8x128xf32> to vector<8x32xf32>
    %245 = vector.extract_strided_slice %240 {offsets = [0, 96], sizes = [8, 32], strides = [1, 1]} : vector<8x128xf32> to vector<8x32xf32>
    %246 = arith.mulf %243, %177 : vector<8x32xf32>
    %247 = arith.mulf %242, %244 : vector<8x32xf32>
    %248 = arith.addf %246, %247 : vector<8x32xf32>
    %249 = math.tanh %248 : vector<8x32xf32>
    %250 = arith.mulf %245, %249 : vector<8x32xf32>
    %251 = arith.truncf %250 : vector<8x32xf32> to vector<8x32xbf16>
    %cst_97 = arith.constant dense<0.000000e+00> : vector<8x128xf32>
    %252 = tpu.matmul %251, %4, %cst_97 {dimension_numbers = #tpu.dot_dimension_numbers<[1], [0], [0], [1], [0, 0, 1, 1], [], []>} : vector<8x32xbf16>, vector<32x128xbf16>, vector<8x128xf32> -> vector<8x128xf32>
    %253 = arith.addf %252, %7 : vector<8x128xf32>
    %cst_98 = arith.constant 5.000000e-01 : f32
    %254 = vector.broadcast %cst_98 : f32 to vector<8x128xf32>
    %255 = arith.mulf %254, %253 : vector<8x128xf32>
    %256 = math.tanh %255 : vector<8x128xf32>
    %cst_99 = arith.constant 5.000000e-01 : f32
    %257 = vector.broadcast %cst_99 : f32 to vector<8x128xf32>
    %258 = arith.mulf %257, %256 : vector<8x128xf32>
    %cst_100 = arith.constant 5.000000e-01 : f32
    %259 = vector.broadcast %cst_100 : f32 to vector<8x128xf32>
    %260 = arith.addf %258, %259 : vector<8x128xf32>
    %261 = arith.index_cast %c3_i32 : i32 to index
    %c0_101 = arith.constant 0 : index
    %c0_102 = arith.constant 0 : index
    %262 = vector.load %arg2[%261, %c0_101, %c0_102] : memref<8x8x128xf32, #tpu.memory_space<vmem>>, vector<1x8x128xf32>
    %263 = vector.shape_cast %262 : vector<1x8x128xf32> to vector<8x128xf32>
    %264 = arith.subf %263, %260 : vector<8x128xf32>
    %265 = arith.mulf %193, %193 : vector<8x128xf32>
    %cst_103 = arith.constant dense<0.000000e+00> : vector<8xf32>
    %266 = vector.multi_reduction <add>, %265, %cst_103 [1] : vector<8x128xf32> to vector<8xf32>
    %267 = vector.shape_cast %266 : vector<8xf32> to vector<8x1xf32>
    %268 = math.sqrt %267 : vector<8x1xf32>
    %cst_104 = arith.constant dense<0.000000e+00> : vector<8x8xf32>
    %269 = tpu.matmul %193, %8, %cst_104 {dimension_numbers = #tpu.dot_dimension_numbers<[1], [0], [0], [1], [0, 0, 1, 1], [], []>} : vector<8x128xf32>, vector<128x8xf32>, vector<8x8xf32> -> vector<8x8xf32>
    %270 = vector.broadcast %268 : vector<8x1xf32> to vector<8x8xf32>
    %271 = vector.broadcast %10 : vector<1x8xf32> to vector<8x8xf32>
    %272 = arith.mulf %270, %271 : vector<8x8xf32>
    %cst_105 = arith.constant 9.99999993E-9 : f32
    %273 = vector.broadcast %cst_105 : f32 to vector<8x8xf32>
    %274 = arith.maximumf %272, %273 : vector<8x8xf32>
    %275 = tpu.reciprocal %274 : vector<8x8xf32> -> vector<8x8xf32>
    %276 = arith.mulf %269, %275 : vector<8x8xf32>
    %cst_106 = arith.constant dense<0xFF800000> : vector<8xf32>
    %277 = vector.multi_reduction <maximumf>, %276, %cst_106 [1] : vector<8x8xf32> to vector<8xf32>
    %cst_107 = arith.constant 0xFF800000 : f32
    %278 = vector.broadcast %cst_107 : f32 to vector<8xf32>
    %279 = arith.maximumf %278, %277 : vector<8xf32>
    %280 = vector.shape_cast %279 : vector<8xf32> to vector<8x1xf32>
    %281 = vector.broadcast %280 : vector<8x1xf32> to vector<8x8xf32>
    %282 = arith.subf %276, %281 : vector<8x8xf32>
    %283 = math.exp %282 : vector<8x8xf32>
    %cst_108 = arith.constant dense<0.000000e+00> : vector<8xf32>
    %284 = vector.multi_reduction <add>, %283, %cst_108 [1] : vector<8x8xf32> to vector<8xf32>
    %285 = vector.shape_cast %284 : vector<8xf32> to vector<8x1xf32>
    %286 = vector.broadcast %285 : vector<8x1xf32> to vector<8x8xf32>
    %287 = arith.divf %283, %286 : vector<8x8xf32>
    %cst_109 = arith.constant dense<0.000000e+00> : vector<8x128xf32>
    %288 = tpu.matmul %287, %9, %cst_109 {dimension_numbers = #tpu.dot_dimension_numbers<[1], [0], [0], [1], [0, 0, 1, 1], [], []>} : vector<8x8xf32>, vector<8x128xf32>, vector<8x128xf32> -> vector<8x128xf32>
    %c0_i32_110 = arith.constant 0 : i32
    %289 = arith.cmpi eq, %c3_i32, %c0_i32_110 : i32
    %290 = arith.andi %11, %289 : i1
    %cst_111 = arith.constant 0.000000e+00 : f32
    %cst_112 = arith.constant 1.000000e+00 : f32
    %291 = arith.select %290, %cst_111, %cst_112 : f32
    %292 = vector.broadcast %291 : f32 to vector<8x128xf32>
    %293 = arith.mulf %292, %288 : vector<8x128xf32>
    %294 = arith.addf %260, %293 : vector<8x128xf32>
    %295 = arith.index_cast %c3_i32 : i32 to index
    %c0_113 = arith.constant 0 : index
    %c0_114 = arith.constant 0 : index
    %296 = vector.load %arg11[%295, %c0_113, %c0_114] : memref<8x8x128xf32, #tpu.memory_space<vmem>>, vector<1x8x128xf32>
    %297 = vector.shape_cast %296 : vector<1x8x128xf32> to vector<8x128xf32>
    %298 = vector.shape_cast %294 : vector<8x128xf32> to vector<1x8x128xf32>
    tpu.vector_store %arg11[%295, %c0_113, %c0_114], %298 {strides = array<i32>} : memref<8x8x128xf32, #tpu.memory_space<vmem>>, vector<1x8x128xf32>,
    %c4_i32 = arith.constant 4 : i32
    %299 = arith.index_cast %c4_i32 : i32 to index
    %c0_115 = arith.constant 0 : index
    %c0_116 = arith.constant 0 : index
    %300 = vector.load %arg1[%299, %c0_115, %c0_116] : memref<8x8x128xf32, #tpu.memory_space<vmem>>, vector<1x8x128xf32>
    %301 = vector.shape_cast %300 : vector<1x8x128xf32> to vector<8x128xf32>
    %302 = arith.truncf %250 : vector<8x32xf32> to vector<8x32xbf16>
    %cst_117 = arith.constant dense<0.000000e+00> : vector<8x128xf32>
    %303 = tpu.matmul %302, %3, %cst_117 {dimension_numbers = #tpu.dot_dimension_numbers<[1], [0], [0], [1], [0, 0, 1, 1], [], []>} : vector<8x32xbf16>, vector<32x128xbf16>, vector<8x128xf32> -> vector<8x128xf32>
    %304 = arith.addf %301, %303 : vector<8x128xf32>
    %cst_118 = arith.constant 5.000000e-01 : f32
    %305 = vector.broadcast %cst_118 : f32 to vector<8x128xf32>
    %306 = arith.mulf %305, %304 : vector<8x128xf32>
    %307 = math.tanh %306 : vector<8x128xf32>
    %cst_119 = arith.constant 5.000000e-01 : f32
    %308 = vector.broadcast %cst_119 : f32 to vector<8x128xf32>
    %309 = arith.mulf %308, %307 : vector<8x128xf32>
    %cst_120 = arith.constant 5.000000e-01 : f32
    %310 = vector.broadcast %cst_120 : f32 to vector<8x128xf32>
    %311 = arith.addf %309, %310 : vector<8x128xf32>
    %312 = math.tanh %304 : vector<8x128xf32>
    %313 = vector.extract_strided_slice %311 {offsets = [0, 0], sizes = [8, 32], strides = [1, 1]} : vector<8x128xf32> to vector<8x32xf32>
    %314 = vector.extract_strided_slice %311 {offsets = [0, 32], sizes = [8, 32], strides = [1, 1]} : vector<8x128xf32> to vector<8x32xf32>
    %315 = vector.extract_strided_slice %312 {offsets = [0, 64], sizes = [8, 32], strides = [1, 1]} : vector<8x128xf32> to vector<8x32xf32>
    %316 = vector.extract_strided_slice %311 {offsets = [0, 96], sizes = [8, 32], strides = [1, 1]} : vector<8x128xf32> to vector<8x32xf32>
    %317 = arith.mulf %314, %248 : vector<8x32xf32>
    %318 = arith.mulf %313, %315 : vector<8x32xf32>
    %319 = arith.addf %317, %318 : vector<8x32xf32>
    %320 = math.tanh %319 : vector<8x32xf32>
    %321 = arith.mulf %316, %320 : vector<8x32xf32>
    %322 = arith.truncf %321 : vector<8x32xf32> to vector<8x32xbf16>
    %cst_121 = arith.constant dense<0.000000e+00> : vector<8x128xf32>
    %323 = tpu.matmul %322, %4, %cst_121 {dimension_numbers = #tpu.dot_dimension_numbers<[1], [0], [0], [1], [0, 0, 1, 1], [], []>} : vector<8x32xbf16>, vector<32x128xbf16>, vector<8x128xf32> -> vector<8x128xf32>
    %324 = arith.addf %323, %7 : vector<8x128xf32>
    %cst_122 = arith.constant 5.000000e-01 : f32
    %325 = vector.broadcast %cst_122 : f32 to vector<8x128xf32>
    %326 = arith.mulf %325, %324 : vector<8x128xf32>
    %327 = math.tanh %326 : vector<8x128xf32>
    %cst_123 = arith.constant 5.000000e-01 : f32
    %328 = vector.broadcast %cst_123 : f32 to vector<8x128xf32>
    %329 = arith.mulf %328, %327 : vector<8x128xf32>
    %cst_124 = arith.constant 5.000000e-01 : f32
    %330 = vector.broadcast %cst_124 : f32 to vector<8x128xf32>
    %331 = arith.addf %329, %330 : vector<8x128xf32>
    %332 = arith.index_cast %c4_i32 : i32 to index
    %c0_125 = arith.constant 0 : index
    %c0_126 = arith.constant 0 : index
    %333 = vector.load %arg2[%332, %c0_125, %c0_126] : memref<8x8x128xf32, #tpu.memory_space<vmem>>, vector<1x8x128xf32>
    %334 = vector.shape_cast %333 : vector<1x8x128xf32> to vector<8x128xf32>
    %335 = arith.subf %334, %331 : vector<8x128xf32>
    %336 = arith.mulf %264, %264 : vector<8x128xf32>
    %cst_127 = arith.constant dense<0.000000e+00> : vector<8xf32>
    %337 = vector.multi_reduction <add>, %336, %cst_127 [1] : vector<8x128xf32> to vector<8xf32>
    %338 = vector.shape_cast %337 : vector<8xf32> to vector<8x1xf32>
    %339 = math.sqrt %338 : vector<8x1xf32>
    %cst_128 = arith.constant dense<0.000000e+00> : vector<8x8xf32>
    %340 = tpu.matmul %264, %8, %cst_128 {dimension_numbers = #tpu.dot_dimension_numbers<[1], [0], [0], [1], [0, 0, 1, 1], [], []>} : vector<8x128xf32>, vector<128x8xf32>, vector<8x8xf32> -> vector<8x8xf32>
    %341 = vector.broadcast %339 : vector<8x1xf32> to vector<8x8xf32>
    %342 = vector.broadcast %10 : vector<1x8xf32> to vector<8x8xf32>
    %343 = arith.mulf %341, %342 : vector<8x8xf32>
    %cst_129 = arith.constant 9.99999993E-9 : f32
    %344 = vector.broadcast %cst_129 : f32 to vector<8x8xf32>
    %345 = arith.maximumf %343, %344 : vector<8x8xf32>
    %346 = tpu.reciprocal %345 : vector<8x8xf32> -> vector<8x8xf32>
    %347 = arith.mulf %340, %346 : vector<8x8xf32>
    %cst_130 = arith.constant dense<0xFF800000> : vector<8xf32>
    %348 = vector.multi_reduction <maximumf>, %347, %cst_130 [1] : vector<8x8xf32> to vector<8xf32>
    %cst_131 = arith.constant 0xFF800000 : f32
    %349 = vector.broadcast %cst_131 : f32 to vector<8xf32>
    %350 = arith.maximumf %349, %348 : vector<8xf32>
    %351 = vector.shape_cast %350 : vector<8xf32> to vector<8x1xf32>
    %352 = vector.broadcast %351 : vector<8x1xf32> to vector<8x8xf32>
    %353 = arith.subf %347, %352 : vector<8x8xf32>
    %354 = math.exp %353 : vector<8x8xf32>
    %cst_132 = arith.constant dense<0.000000e+00> : vector<8xf32>
    %355 = vector.multi_reduction <add>, %354, %cst_132 [1] : vector<8x8xf32> to vector<8xf32>
    %356 = vector.shape_cast %355 : vector<8xf32> to vector<8x1xf32>
    %357 = vector.broadcast %356 : vector<8x1xf32> to vector<8x8xf32>
    %358 = arith.divf %354, %357 : vector<8x8xf32>
    %cst_133 = arith.constant dense<0.000000e+00> : vector<8x128xf32>
    %359 = tpu.matmul %358, %9, %cst_133 {dimension_numbers = #tpu.dot_dimension_numbers<[1], [0], [0], [1], [0, 0, 1, 1], [], []>} : vector<8x8xf32>, vector<8x128xf32>, vector<8x128xf32> -> vector<8x128xf32>
    %c0_i32_134 = arith.constant 0 : i32
    %360 = arith.cmpi eq, %c4_i32, %c0_i32_134 : i32
    %361 = arith.andi %11, %360 : i1
    %cst_135 = arith.constant 0.000000e+00 : f32
    %cst_136 = arith.constant 1.000000e+00 : f32
    %362 = arith.select %361, %cst_135, %cst_136 : f32
    %363 = vector.broadcast %362 : f32 to vector<8x128xf32>
    %364 = arith.mulf %363, %359 : vector<8x128xf32>
    %365 = arith.addf %331, %364 : vector<8x128xf32>
    %366 = arith.index_cast %c4_i32 : i32 to index
    %c0_137 = arith.constant 0 : index
    %c0_138 = arith.constant 0 : index
    %367 = vector.load %arg11[%366, %c0_137, %c0_138] : memref<8x8x128xf32, #tpu.memory_space<vmem>>, vector<1x8x128xf32>
    %368 = vector.shape_cast %367 : vector<1x8x128xf32> to vector<8x128xf32>
    %369 = vector.shape_cast %365 : vector<8x128xf32> to vector<1x8x128xf32>
    tpu.vector_store %arg11[%366, %c0_137, %c0_138], %369 {strides = array<i32>} : memref<8x8x128xf32, #tpu.memory_space<vmem>>, vector<1x8x128xf32>,
    %c5_i32 = arith.constant 5 : i32
    %370 = arith.index_cast %c5_i32 : i32 to index
    %c0_139 = arith.constant 0 : index
    %c0_140 = arith.constant 0 : index
    %371 = vector.load %arg1[%370, %c0_139, %c0_140] : memref<8x8x128xf32, #tpu.memory_space<vmem>>, vector<1x8x128xf32>
    %372 = vector.shape_cast %371 : vector<1x8x128xf32> to vector<8x128xf32>
    %373 = arith.truncf %321 : vector<8x32xf32> to vector<8x32xbf16>
    %cst_141 = arith.constant dense<0.000000e+00> : vector<8x128xf32>
    %374 = tpu.matmul %373, %3, %cst_141 {dimension_numbers = #tpu.dot_dimension_numbers<[1], [0], [0], [1], [0, 0, 1, 1], [], []>} : vector<8x32xbf16>, vector<32x128xbf16>, vector<8x128xf32> -> vector<8x128xf32>
    %375 = arith.addf %372, %374 : vector<8x128xf32>
    %cst_142 = arith.constant 5.000000e-01 : f32
    %376 = vector.broadcast %cst_142 : f32 to vector<8x128xf32>
    %377 = arith.mulf %376, %375 : vector<8x128xf32>
    %378 = math.tanh %377 : vector<8x128xf32>
    %cst_143 = arith.constant 5.000000e-01 : f32
    %379 = vector.broadcast %cst_143 : f32 to vector<8x128xf32>
    %380 = arith.mulf %379, %378 : vector<8x128xf32>
    %cst_144 = arith.constant 5.000000e-01 : f32
    %381 = vector.broadcast %cst_144 : f32 to vector<8x128xf32>
    %382 = arith.addf %380, %381 : vector<8x128xf32>
    %383 = math.tanh %375 : vector<8x128xf32>
    %384 = vector.extract_strided_slice %382 {offsets = [0, 0], sizes = [8, 32], strides = [1, 1]} : vector<8x128xf32> to vector<8x32xf32>
    %385 = vector.extract_strided_slice %382 {offsets = [0, 32], sizes = [8, 32], strides = [1, 1]} : vector<8x128xf32> to vector<8x32xf32>
    %386 = vector.extract_strided_slice %383 {offsets = [0, 64], sizes = [8, 32], strides = [1, 1]} : vector<8x128xf32> to vector<8x32xf32>
    %387 = vector.extract_strided_slice %382 {offsets = [0, 96], sizes = [8, 32], strides = [1, 1]} : vector<8x128xf32> to vector<8x32xf32>
    %388 = arith.mulf %385, %319 : vector<8x32xf32>
    %389 = arith.mulf %384, %386 : vector<8x32xf32>
    %390 = arith.addf %388, %389 : vector<8x32xf32>
    %391 = math.tanh %390 : vector<8x32xf32>
    %392 = arith.mulf %387, %391 : vector<8x32xf32>
    %393 = arith.truncf %392 : vector<8x32xf32> to vector<8x32xbf16>
    %cst_145 = arith.constant dense<0.000000e+00> : vector<8x128xf32>
    %394 = tpu.matmul %393, %4, %cst_145 {dimension_numbers = #tpu.dot_dimension_numbers<[1], [0], [0], [1], [0, 0, 1, 1], [], []>} : vector<8x32xbf16>, vector<32x128xbf16>, vector<8x128xf32> -> vector<8x128xf32>
    %395 = arith.addf %394, %7 : vector<8x128xf32>
    %cst_146 = arith.constant 5.000000e-01 : f32
    %396 = vector.broadcast %cst_146 : f32 to vector<8x128xf32>
    %397 = arith.mulf %396, %395 : vector<8x128xf32>
    %398 = math.tanh %397 : vector<8x128xf32>
    %cst_147 = arith.constant 5.000000e-01 : f32
    %399 = vector.broadcast %cst_147 : f32 to vector<8x128xf32>
    %400 = arith.mulf %399, %398 : vector<8x128xf32>
    %cst_148 = arith.constant 5.000000e-01 : f32
    %401 = vector.broadcast %cst_148 : f32 to vector<8x128xf32>
    %402 = arith.addf %400, %401 : vector<8x128xf32>
    %403 = arith.index_cast %c5_i32 : i32 to index
    %c0_149 = arith.constant 0 : index
    %c0_150 = arith.constant 0 : index
    %404 = vector.load %arg2[%403, %c0_149, %c0_150] : memref<8x8x128xf32, #tpu.memory_space<vmem>>, vector<1x8x128xf32>
    %405 = vector.shape_cast %404 : vector<1x8x128xf32> to vector<8x128xf32>
    %406 = arith.subf %405, %402 : vector<8x128xf32>
    %407 = arith.mulf %335, %335 : vector<8x128xf32>
    %cst_151 = arith.constant dense<0.000000e+00> : vector<8xf32>
    %408 = vector.multi_reduction <add>, %407, %cst_151 [1] : vector<8x128xf32> to vector<8xf32>
    %409 = vector.shape_cast %408 : vector<8xf32> to vector<8x1xf32>
    %410 = math.sqrt %409 : vector<8x1xf32>
    %cst_152 = arith.constant dense<0.000000e+00> : vector<8x8xf32>
    %411 = tpu.matmul %335, %8, %cst_152 {dimension_numbers = #tpu.dot_dimension_numbers<[1], [0], [0], [1], [0, 0, 1, 1], [], []>} : vector<8x128xf32>, vector<128x8xf32>, vector<8x8xf32> -> vector<8x8xf32>
    %412 = vector.broadcast %410 : vector<8x1xf32> to vector<8x8xf32>
    %413 = vector.broadcast %10 : vector<1x8xf32> to vector<8x8xf32>
    %414 = arith.mulf %412, %413 : vector<8x8xf32>
    %cst_153 = arith.constant 9.99999993E-9 : f32
    %415 = vector.broadcast %cst_153 : f32 to vector<8x8xf32>
    %416 = arith.maximumf %414, %415 : vector<8x8xf32>
    %417 = tpu.reciprocal %416 : vector<8x8xf32> -> vector<8x8xf32>
    %418 = arith.mulf %411, %417 : vector<8x8xf32>
    %cst_154 = arith.constant dense<0xFF800000> : vector<8xf32>
    %419 = vector.multi_reduction <maximumf>, %418, %cst_154 [1] : vector<8x8xf32> to vector<8xf32>
    %cst_155 = arith.constant 0xFF800000 : f32
    %420 = vector.broadcast %cst_155 : f32 to vector<8xf32>
    %421 = arith.maximumf %420, %419 : vector<8xf32>
    %422 = vector.shape_cast %421 : vector<8xf32> to vector<8x1xf32>
    %423 = vector.broadcast %422 : vector<8x1xf32> to vector<8x8xf32>
    %424 = arith.subf %418, %423 : vector<8x8xf32>
    %425 = math.exp %424 : vector<8x8xf32>
    %cst_156 = arith.constant dense<0.000000e+00> : vector<8xf32>
    %426 = vector.multi_reduction <add>, %425, %cst_156 [1] : vector<8x8xf32> to vector<8xf32>
    %427 = vector.shape_cast %426 : vector<8xf32> to vector<8x1xf32>
    %428 = vector.broadcast %427 : vector<8x1xf32> to vector<8x8xf32>
    %429 = arith.divf %425, %428 : vector<8x8xf32>
    %cst_157 = arith.constant dense<0.000000e+00> : vector<8x128xf32>
    %430 = tpu.matmul %429, %9, %cst_157 {dimension_numbers = #tpu.dot_dimension_numbers<[1], [0], [0], [1], [0, 0, 1, 1], [], []>} : vector<8x8xf32>, vector<8x128xf32>, vector<8x128xf32> -> vector<8x128xf32>
    %c0_i32_158 = arith.constant 0 : i32
    %431 = arith.cmpi eq, %c5_i32, %c0_i32_158 : i32
    %432 = arith.andi %11, %431 : i1
    %cst_159 = arith.constant 0.000000e+00 : f32
    %cst_160 = arith.constant 1.000000e+00 : f32
    %433 = arith.select %432, %cst_159, %cst_160 : f32
    %434 = vector.broadcast %433 : f32 to vector<8x128xf32>
    %435 = arith.mulf %434, %430 : vector<8x128xf32>
    %436 = arith.addf %402, %435 : vector<8x128xf32>
    %437 = arith.index_cast %c5_i32 : i32 to index
    %c0_161 = arith.constant 0 : index
    %c0_162 = arith.constant 0 : index
    %438 = vector.load %arg11[%437, %c0_161, %c0_162] : memref<8x8x128xf32, #tpu.memory_space<vmem>>, vector<1x8x128xf32>
    %439 = vector.shape_cast %438 : vector<1x8x128xf32> to vector<8x128xf32>
    %440 = vector.shape_cast %436 : vector<8x128xf32> to vector<1x8x128xf32>
    tpu.vector_store %arg11[%437, %c0_161, %c0_162], %440 {strides = array<i32>} : memref<8x8x128xf32, #tpu.memory_space<vmem>>, vector<1x8x128xf32>,
    %c6_i32 = arith.constant 6 : i32
    %441 = arith.index_cast %c6_i32 : i32 to index
    %c0_163 = arith.constant 0 : index
    %c0_164 = arith.constant 0 : index
    %442 = vector.load %arg1[%441, %c0_163, %c0_164] : memref<8x8x128xf32, #tpu.memory_space<vmem>>, vector<1x8x128xf32>
    %443 = vector.shape_cast %442 : vector<1x8x128xf32> to vector<8x128xf32>
    %444 = arith.truncf %392 : vector<8x32xf32> to vector<8x32xbf16>
    %cst_165 = arith.constant dense<0.000000e+00> : vector<8x128xf32>
    %445 = tpu.matmul %444, %3, %cst_165 {dimension_numbers = #tpu.dot_dimension_numbers<[1], [0], [0], [1], [0, 0, 1, 1], [], []>} : vector<8x32xbf16>, vector<32x128xbf16>, vector<8x128xf32> -> vector<8x128xf32>
    %446 = arith.addf %443, %445 : vector<8x128xf32>
    %cst_166 = arith.constant 5.000000e-01 : f32
    %447 = vector.broadcast %cst_166 : f32 to vector<8x128xf32>
    %448 = arith.mulf %447, %446 : vector<8x128xf32>
    %449 = math.tanh %448 : vector<8x128xf32>
    %cst_167 = arith.constant 5.000000e-01 : f32
    %450 = vector.broadcast %cst_167 : f32 to vector<8x128xf32>
    %451 = arith.mulf %450, %449 : vector<8x128xf32>
    %cst_168 = arith.constant 5.000000e-01 : f32
    %452 = vector.broadcast %cst_168 : f32 to vector<8x128xf32>
    %453 = arith.addf %451, %452 : vector<8x128xf32>
    %454 = math.tanh %446 : vector<8x128xf32>
    %455 = vector.extract_strided_slice %453 {offsets = [0, 0], sizes = [8, 32], strides = [1, 1]} : vector<8x128xf32> to vector<8x32xf32>
    %456 = vector.extract_strided_slice %453 {offsets = [0, 32], sizes = [8, 32], strides = [1, 1]} : vector<8x128xf32> to vector<8x32xf32>
    %457 = vector.extract_strided_slice %454 {offsets = [0, 64], sizes = [8, 32], strides = [1, 1]} : vector<8x128xf32> to vector<8x32xf32>
    %458 = vector.extract_strided_slice %453 {offsets = [0, 96], sizes = [8, 32], strides = [1, 1]} : vector<8x128xf32> to vector<8x32xf32>
    %459 = arith.mulf %456, %390 : vector<8x32xf32>
    %460 = arith.mulf %455, %457 : vector<8x32xf32>
    %461 = arith.addf %459, %460 : vector<8x32xf32>
    %462 = math.tanh %461 : vector<8x32xf32>
    %463 = arith.mulf %458, %462 : vector<8x32xf32>
    %464 = arith.truncf %463 : vector<8x32xf32> to vector<8x32xbf16>
    %cst_169 = arith.constant dense<0.000000e+00> : vector<8x128xf32>
    %465 = tpu.matmul %464, %4, %cst_169 {dimension_numbers = #tpu.dot_dimension_numbers<[1], [0], [0], [1], [0, 0, 1, 1], [], []>} : vector<8x32xbf16>, vector<32x128xbf16>, vector<8x128xf32> -> vector<8x128xf32>
    %466 = arith.addf %465, %7 : vector<8x128xf32>
    %cst_170 = arith.constant 5.000000e-01 : f32
    %467 = vector.broadcast %cst_170 : f32 to vector<8x128xf32>
    %468 = arith.mulf %467, %466 : vector<8x128xf32>
    %469 = math.tanh %468 : vector<8x128xf32>
    %cst_171 = arith.constant 5.000000e-01 : f32
    %470 = vector.broadcast %cst_171 : f32 to vector<8x128xf32>
    %471 = arith.mulf %470, %469 : vector<8x128xf32>
    %cst_172 = arith.constant 5.000000e-01 : f32
    %472 = vector.broadcast %cst_172 : f32 to vector<8x128xf32>
    %473 = arith.addf %471, %472 : vector<8x128xf32>
    %474 = arith.index_cast %c6_i32 : i32 to index
    %c0_173 = arith.constant 0 : index
    %c0_174 = arith.constant 0 : index
    %475 = vector.load %arg2[%474, %c0_173, %c0_174] : memref<8x8x128xf32, #tpu.memory_space<vmem>>, vector<1x8x128xf32>
    %476 = vector.shape_cast %475 : vector<1x8x128xf32> to vector<8x128xf32>
    %477 = arith.subf %476, %473 : vector<8x128xf32>
    %478 = arith.mulf %406, %406 : vector<8x128xf32>
    %cst_175 = arith.constant dense<0.000000e+00> : vector<8xf32>
    %479 = vector.multi_reduction <add>, %478, %cst_175 [1] : vector<8x128xf32> to vector<8xf32>
    %480 = vector.shape_cast %479 : vector<8xf32> to vector<8x1xf32>
    %481 = math.sqrt %480 : vector<8x1xf32>
    %cst_176 = arith.constant dense<0.000000e+00> : vector<8x8xf32>
    %482 = tpu.matmul %406, %8, %cst_176 {dimension_numbers = #tpu.dot_dimension_numbers<[1], [0], [0], [1], [0, 0, 1, 1], [], []>} : vector<8x128xf32>, vector<128x8xf32>, vector<8x8xf32> -> vector<8x8xf32>
    %483 = vector.broadcast %481 : vector<8x1xf32> to vector<8x8xf32>
    %484 = vector.broadcast %10 : vector<1x8xf32> to vector<8x8xf32>
    %485 = arith.mulf %483, %484 : vector<8x8xf32>
    %cst_177 = arith.constant 9.99999993E-9 : f32
    %486 = vector.broadcast %cst_177 : f32 to vector<8x8xf32>
    %487 = arith.maximumf %485, %486 : vector<8x8xf32>
    %488 = tpu.reciprocal %487 : vector<8x8xf32> -> vector<8x8xf32>
    %489 = arith.mulf %482, %488 : vector<8x8xf32>
    %cst_178 = arith.constant dense<0xFF800000> : vector<8xf32>
    %490 = vector.multi_reduction <maximumf>, %489, %cst_178 [1] : vector<8x8xf32> to vector<8xf32>
    %cst_179 = arith.constant 0xFF800000 : f32
    %491 = vector.broadcast %cst_179 : f32 to vector<8xf32>
    %492 = arith.maximumf %491, %490 : vector<8xf32>
    %493 = vector.shape_cast %492 : vector<8xf32> to vector<8x1xf32>
    %494 = vector.broadcast %493 : vector<8x1xf32> to vector<8x8xf32>
    %495 = arith.subf %489, %494 : vector<8x8xf32>
    %496 = math.exp %495 : vector<8x8xf32>
    %cst_180 = arith.constant dense<0.000000e+00> : vector<8xf32>
    %497 = vector.multi_reduction <add>, %496, %cst_180 [1] : vector<8x8xf32> to vector<8xf32>
    %498 = vector.shape_cast %497 : vector<8xf32> to vector<8x1xf32>
    %499 = vector.broadcast %498 : vector<8x1xf32> to vector<8x8xf32>
    %500 = arith.divf %496, %499 : vector<8x8xf32>
    %cst_181 = arith.constant dense<0.000000e+00> : vector<8x128xf32>
    %501 = tpu.matmul %500, %9, %cst_181 {dimension_numbers = #tpu.dot_dimension_numbers<[1], [0], [0], [1], [0, 0, 1, 1], [], []>} : vector<8x8xf32>, vector<8x128xf32>, vector<8x128xf32> -> vector<8x128xf32>
    %c0_i32_182 = arith.constant 0 : i32
    %502 = arith.cmpi eq, %c6_i32, %c0_i32_182 : i32
    %503 = arith.andi %11, %502 : i1
    %cst_183 = arith.constant 0.000000e+00 : f32
    %cst_184 = arith.constant 1.000000e+00 : f32
    %504 = arith.select %503, %cst_183, %cst_184 : f32
    %505 = vector.broadcast %504 : f32 to vector<8x128xf32>
    %506 = arith.mulf %505, %501 : vector<8x128xf32>
    %507 = arith.addf %473, %506 : vector<8x128xf32>
    %508 = arith.index_cast %c6_i32 : i32 to index
    %c0_185 = arith.constant 0 : index
    %c0_186 = arith.constant 0 : index
    %509 = vector.load %arg11[%508, %c0_185, %c0_186] : memref<8x8x128xf32, #tpu.memory_space<vmem>>, vector<1x8x128xf32>
    %510 = vector.shape_cast %509 : vector<1x8x128xf32> to vector<8x128xf32>
    %511 = vector.shape_cast %507 : vector<8x128xf32> to vector<1x8x128xf32>
    tpu.vector_store %arg11[%508, %c0_185, %c0_186], %511 {strides = array<i32>} : memref<8x8x128xf32, #tpu.memory_space<vmem>>, vector<1x8x128xf32>,
    %c7_i32 = arith.constant 7 : i32
    %512 = arith.index_cast %c7_i32 : i32 to index
    %c0_187 = arith.constant 0 : index
    %c0_188 = arith.constant 0 : index
    %513 = vector.load %arg1[%512, %c0_187, %c0_188] : memref<8x8x128xf32, #tpu.memory_space<vmem>>, vector<1x8x128xf32>
    %514 = vector.shape_cast %513 : vector<1x8x128xf32> to vector<8x128xf32>
    %515 = arith.truncf %463 : vector<8x32xf32> to vector<8x32xbf16>
    %cst_189 = arith.constant dense<0.000000e+00> : vector<8x128xf32>
    %516 = tpu.matmul %515, %3, %cst_189 {dimension_numbers = #tpu.dot_dimension_numbers<[1], [0], [0], [1], [0, 0, 1, 1], [], []>} : vector<8x32xbf16>, vector<32x128xbf16>, vector<8x128xf32> -> vector<8x128xf32>
    %517 = arith.addf %514, %516 : vector<8x128xf32>
    %cst_190 = arith.constant 5.000000e-01 : f32
    %518 = vector.broadcast %cst_190 : f32 to vector<8x128xf32>
    %519 = arith.mulf %518, %517 : vector<8x128xf32>
    %520 = math.tanh %519 : vector<8x128xf32>
    %cst_191 = arith.constant 5.000000e-01 : f32
    %521 = vector.broadcast %cst_191 : f32 to vector<8x128xf32>
    %522 = arith.mulf %521, %520 : vector<8x128xf32>
    %cst_192 = arith.constant 5.000000e-01 : f32
    %523 = vector.broadcast %cst_192 : f32 to vector<8x128xf32>
    %524 = arith.addf %522, %523 : vector<8x128xf32>
    %525 = math.tanh %517 : vector<8x128xf32>
    %526 = vector.extract_strided_slice %524 {offsets = [0, 0], sizes = [8, 32], strides = [1, 1]} : vector<8x128xf32> to vector<8x32xf32>
    %527 = vector.extract_strided_slice %524 {offsets = [0, 32], sizes = [8, 32], strides = [1, 1]} : vector<8x128xf32> to vector<8x32xf32>
    %528 = vector.extract_strided_slice %525 {offsets = [0, 64], sizes = [8, 32], strides = [1, 1]} : vector<8x128xf32> to vector<8x32xf32>
    %529 = vector.extract_strided_slice %524 {offsets = [0, 96], sizes = [8, 32], strides = [1, 1]} : vector<8x128xf32> to vector<8x32xf32>
    %530 = arith.mulf %527, %461 : vector<8x32xf32>
    %531 = arith.mulf %526, %528 : vector<8x32xf32>
    %532 = arith.addf %530, %531 : vector<8x32xf32>
    %533 = math.tanh %532 : vector<8x32xf32>
    %534 = arith.mulf %529, %533 : vector<8x32xf32>
    %535 = arith.truncf %534 : vector<8x32xf32> to vector<8x32xbf16>
    %cst_193 = arith.constant dense<0.000000e+00> : vector<8x128xf32>
    %536 = tpu.matmul %535, %4, %cst_193 {dimension_numbers = #tpu.dot_dimension_numbers<[1], [0], [0], [1], [0, 0, 1, 1], [], []>} : vector<8x32xbf16>, vector<32x128xbf16>, vector<8x128xf32> -> vector<8x128xf32>
    %537 = arith.addf %536, %7 : vector<8x128xf32>
    %cst_194 = arith.constant 5.000000e-01 : f32
    %538 = vector.broadcast %cst_194 : f32 to vector<8x128xf32>
    %539 = arith.mulf %538, %537 : vector<8x128xf32>
    %540 = math.tanh %539 : vector<8x128xf32>
    %cst_195 = arith.constant 5.000000e-01 : f32
    %541 = vector.broadcast %cst_195 : f32 to vector<8x128xf32>
    %542 = arith.mulf %541, %540 : vector<8x128xf32>
    %cst_196 = arith.constant 5.000000e-01 : f32
    %543 = vector.broadcast %cst_196 : f32 to vector<8x128xf32>
    %544 = arith.addf %542, %543 : vector<8x128xf32>
    %545 = arith.index_cast %c7_i32 : i32 to index
    %c0_197 = arith.constant 0 : index
    %c0_198 = arith.constant 0 : index
    %546 = vector.load %arg2[%545, %c0_197, %c0_198] : memref<8x8x128xf32, #tpu.memory_space<vmem>>, vector<1x8x128xf32>
    %547 = vector.shape_cast %546 : vector<1x8x128xf32> to vector<8x128xf32>
    %548 = arith.subf %547, %544 : vector<8x128xf32>
    %549 = arith.mulf %477, %477 : vector<8x128xf32>
    %cst_199 = arith.constant dense<0.000000e+00> : vector<8xf32>
    %550 = vector.multi_reduction <add>, %549, %cst_199 [1] : vector<8x128xf32> to vector<8xf32>
    %551 = vector.shape_cast %550 : vector<8xf32> to vector<8x1xf32>
    %552 = math.sqrt %551 : vector<8x1xf32>
    %cst_200 = arith.constant dense<0.000000e+00> : vector<8x8xf32>
    %553 = tpu.matmul %477, %8, %cst_200 {dimension_numbers = #tpu.dot_dimension_numbers<[1], [0], [0], [1], [0, 0, 1, 1], [], []>} : vector<8x128xf32>, vector<128x8xf32>, vector<8x8xf32> -> vector<8x8xf32>
    %554 = vector.broadcast %552 : vector<8x1xf32> to vector<8x8xf32>
    %555 = vector.broadcast %10 : vector<1x8xf32> to vector<8x8xf32>
    %556 = arith.mulf %554, %555 : vector<8x8xf32>
    %cst_201 = arith.constant 9.99999993E-9 : f32
    %557 = vector.broadcast %cst_201 : f32 to vector<8x8xf32>
    %558 = arith.maximumf %556, %557 : vector<8x8xf32>
    %559 = tpu.reciprocal %558 : vector<8x8xf32> -> vector<8x8xf32>
    %560 = arith.mulf %553, %559 : vector<8x8xf32>
    %cst_202 = arith.constant dense<0xFF800000> : vector<8xf32>
    %561 = vector.multi_reduction <maximumf>, %560, %cst_202 [1] : vector<8x8xf32> to vector<8xf32>
    %cst_203 = arith.constant 0xFF800000 : f32
    %562 = vector.broadcast %cst_203 : f32 to vector<8xf32>
    %563 = arith.maximumf %562, %561 : vector<8xf32>
    %564 = vector.shape_cast %563 : vector<8xf32> to vector<8x1xf32>
    %565 = vector.broadcast %564 : vector<8x1xf32> to vector<8x8xf32>
    %566 = arith.subf %560, %565 : vector<8x8xf32>
    %567 = math.exp %566 : vector<8x8xf32>
    %cst_204 = arith.constant dense<0.000000e+00> : vector<8xf32>
    %568 = vector.multi_reduction <add>, %567, %cst_204 [1] : vector<8x8xf32> to vector<8xf32>
    %569 = vector.shape_cast %568 : vector<8xf32> to vector<8x1xf32>
    %570 = vector.broadcast %569 : vector<8x1xf32> to vector<8x8xf32>
    %571 = arith.divf %567, %570 : vector<8x8xf32>
    %cst_205 = arith.constant dense<0.000000e+00> : vector<8x128xf32>
    %572 = tpu.matmul %571, %9, %cst_205 {dimension_numbers = #tpu.dot_dimension_numbers<[1], [0], [0], [1], [0, 0, 1, 1], [], []>} : vector<8x8xf32>, vector<8x128xf32>, vector<8x128xf32> -> vector<8x128xf32>
    %c0_i32_206 = arith.constant 0 : i32
    %573 = arith.cmpi eq, %c7_i32, %c0_i32_206 : i32
    %574 = arith.andi %11, %573 : i1
    %cst_207 = arith.constant 0.000000e+00 : f32
    %cst_208 = arith.constant 1.000000e+00 : f32
    %575 = arith.select %574, %cst_207, %cst_208 : f32
    %576 = vector.broadcast %575 : f32 to vector<8x128xf32>
    %577 = arith.mulf %576, %572 : vector<8x128xf32>
    %578 = arith.addf %544, %577 : vector<8x128xf32>
    %579 = arith.index_cast %c7_i32 : i32 to index
    %c0_209 = arith.constant 0 : index
    %c0_210 = arith.constant 0 : index
    %580 = vector.load %arg11[%579, %c0_209, %c0_210] : memref<8x8x128xf32, #tpu.memory_space<vmem>>, vector<1x8x128xf32>
    %581 = vector.shape_cast %580 : vector<1x8x128xf32> to vector<8x128xf32>
    %582 = vector.shape_cast %578 : vector<8x128xf32> to vector<1x8x128xf32>
    tpu.vector_store %arg11[%579, %c0_209, %c0_210], %582 {strides = array<i32>} : memref<8x8x128xf32, #tpu.memory_space<vmem>>, vector<1x8x128xf32>,
    %c8_i32 = arith.constant 8 : i32
    %c0_211 = arith.constant 0 : index
    %c0_212 = arith.constant 0 : index
    %583 = vector.load %arg12[%c0_211, %c0_212] : memref<8x32xf32, #tpu.memory_space<vmem>>, vector<8x32xf32>
    tpu.vector_store %arg12[%c0_211, %c0_212], %534 {strides = array<i32>} : memref<8x32xf32, #tpu.memory_space<vmem>>, vector<8x32xf32>,
    %c0_213 = arith.constant 0 : index
    %c0_214 = arith.constant 0 : index
    %584 = vector.load %arg13[%c0_213, %c0_214] : memref<8x32xf32, #tpu.memory_space<vmem>>, vector<8x32xf32>
    tpu.vector_store %arg13[%c0_213, %c0_214], %532 {strides = array<i32>} : memref<8x32xf32, #tpu.memory_space<vmem>>, vector<8x32xf32>,
    %c0_215 = arith.constant 0 : index
    %c0_216 = arith.constant 0 : index
    %585 = vector.load %arg14[%c0_215, %c0_216] : memref<8x128xf32, #tpu.memory_space<vmem>>, vector<8x128xf32>
    tpu.vector_store %arg14[%c0_215, %c0_216], %548 {strides = array<i32>} : memref<8x128xf32, #tpu.memory_space<vmem>>, vector<8x128xf32>,
    return
  }
  func.func @transform_0(%arg0: i32) -> (i32, i32, i32) {
    %c0_i32 = arith.constant 0 : i32
    %c0_i32_0 = arith.constant 0 : i32
    %c0_i32_1 = arith.constant 0 : i32
    return %arg0, %c0_i32, %c0_i32_0 : i32, i32, i32
  }
  func.func @transform_1(%arg0: i32) -> (i32, i32, i32) {
    %c0_i32 = arith.constant 0 : i32
    %c0_i32_0 = arith.constant 0 : i32
    %c0_i32_1 = arith.constant 0 : i32
    return %arg0, %c0_i32, %c0_i32_0 : i32, i32, i32
  }
  func.func @transform_2(%arg0: i32) -> (i32, i32) {
    %c0_i32 = arith.constant 0 : i32
    %c0_i32_0 = arith.constant 0 : i32
    %c0_i32_1 = arith.constant 0 : i32
    return %c0_i32, %c0_i32_0 : i32, i32
  }
  func.func @transform_3(%arg0: i32) -> (i32, i32) {
    %c0_i32 = arith.constant 0 : i32
    %c0_i32_0 = arith.constant 0 : i32
    %c0_i32_1 = arith.constant 0 : i32
    return %c0_i32, %c0_i32_0 : i32, i32
  }
  func.func @transform_4(%arg0: i32) -> (i32, i32) {
    %c0_i32 = arith.constant 0 : i32
    %c0_i32_0 = arith.constant 0 : i32
    %c0_i32_1 = arith.constant 0 : i32
    return %c0_i32, %c0_i32_0 : i32, i32
  }
  func.func @transform_5(%arg0: i32) -> (i32, i32) {
    %c0_i32 = arith.constant 0 : i32
    %c0_i32_0 = arith.constant 0 : i32
    %c0_i32_1 = arith.constant 0 : i32
    return %c0_i32, %c0_i32_0 : i32, i32
  }
  func.func @transform_6(%arg0: i32) -> (i32, i32) {
    %c0_i32 = arith.constant 0 : i32
    %c0_i32_0 = arith.constant 0 : i32
    %c0_i32_1 = arith.constant 0 : i32
    return %c0_i32, %c0_i32_0 : i32, i32
  }
  func.func @transform_7(%arg0: i32) -> (i32, i32) {
    %c0_i32 = arith.constant 0 : i32
    %c0_i32_0 = arith.constant 0 : i32
    %c0_i32_1 = arith.constant 0 : i32
    return %c0_i32, %c0_i32_0 : i32, i32
  }
  func.func @transform_8(%arg0: i32) -> (i32, i32) {
    %c0_i32 = arith.constant 0 : i32
    %c0_i32_0 = arith.constant 0 : i32
    %c0_i32_1 = arith.constant 0 : i32
    return %c0_i32, %c0_i32_0 : i32, i32
  }
  func.func @transform_9(%arg0: i32) -> (i32, i32) {
    %c0_i32 = arith.constant 0 : i32
    %c0_i32_0 = arith.constant 0 : i32
    %c0_i32_1 = arith.constant 0 : i32
    return %c0_i32, %c0_i32_0 : i32, i32
  }
  func.func @transform_10(%arg0: i32) -> (i32, i32, i32) {
    %c0_i32 = arith.constant 0 : i32
    %c0_i32_0 = arith.constant 0 : i32
    %c0_i32_1 = arith.constant 0 : i32
    return %arg0, %c0_i32, %c0_i32_0 : i32, i32, i32
  }
}

</mosaic_0001>

<llo_original>
// kernel: tpu_custom_call.1
$region0: #{tpu_custom_call.1}
  #allocation0 [shape = 'u32[]', space=smem, size = 0x4, offset = 0x4, fixed_abs, tag = 'smem constant byte address 0x4 - core index']
  #allocation1 [shape = 'u32[144,128]{1,0:T(1,128)}', space=vmem, size = 0x12000, scoped, tag = 'internal scratch']
  #allocation2 [shape = 'f32[8,32]{1,0:T(8,128)}', space=vmem, size = 0x1000, scoped, tag = 'scratch operand']
  #allocation3 [shape = 'f32[8,32]{1,0:T(8,128)}', space=vmem, size = 0x1000, scoped, tag = 'scratch operand']
  #allocation4 [shape = 'f32[8,128]{1,0:T(8,128)}', space=vmem, size = 0x1000, scoped, tag = 'scratch operand']
  %s0 = inlined_call_operand.vmem [shape: f32[8,8,128], index: 0, kind: input, shape index: {}]
  %s1 = inlined_call_operand.vmem [shape: f32[8,8,128], index: 1, kind: input, shape index: {}]
  %s2 = inlined_call_operand.hbm [shape: bf16[32,128], index: 2, kind: input, shape index: {}]
  %s3 = inlined_call_operand.hbm [shape: bf16[32,128], index: 3, kind: input, shape index: {}]
  %s4 = inlined_call_operand.hbm [shape: f32[1,128], index: 4, kind: input, shape index: {}]
  %s5 = inlined_call_operand.vmem [shape: f32[128,8], index: 5, kind: input, shape index: {}]
  %s6 = inlined_call_operand.vmem [shape: f32[8,128], index: 6, kind: input, shape index: {}]
  %s7 = inlined_call_operand.hbm [shape: f32[1,8], index: 7, kind: input, shape index: {}]
  %s8 = inlined_call_operand.hbm [shape: f32[8,32], index: 8, kind: input, shape index: {}]
  %s9 = inlined_call_operand.vmem [shape: f32[8,32], index: 9, kind: input, shape index: {}]
  %s10 = inlined_call_operand.hbm [shape: f32[8,8,128], index: 10, kind: output, shape index: {}]
  %s11 = sld [smem:[#allocation0]]
  $region74: #{tpu_custom_call.1} parent=0
    _
  %s13 = ssub.s32 1, %s11
  %s14 = scalar_select 0, %s13, %s11
  $region1: #{tpu_custom_call.1} parent=0
    #allocation5 [shape = 'u8[8192]{0}', space=vmem, size = 0x2000, scoped, tag = 'input window, operand 2, single buffered']
    #allocation6 [shape = 's32[1]{0}', space=sflag, size = 0x4, scoped, tag = 'scoped memory for tpu_custom_call.1']
    #allocation7 [shape = 's32[1]{0}', space=sflag, size = 0x4, scoped, tag = 'scoped memory for tpu_custom_call.1']
    #allocation8 [shape = 'u8[8192]{0}', space=vmem, size = 0x2000, scoped, tag = 'input window, operand 3, single buffered']
    #allocation9 [shape = 's32[1]{0}', space=sflag, size = 0x4, scoped, tag = 'scoped memory for tpu_custom_call.1']
    #allocation10 [shape = 'u8[512]{0}', space=vmem, size = 0x400, scoped, tag = 'input window, operand 4, single buffered']
    #allocation11 [shape = 'u8[512]{0}', space=vmem, size = 0x400, scoped, tag = 'input window, operand 7, single buffered']
    #allocation12 [shape = 's32[1]{0}', space=sflag, size = 0x4, scoped, tag = 'scoped memory for tpu_custom_call.1']
    #allocation13 [shape = 'u8[4096]{0}', space=vmem, size = 0x1000, scoped, tag = 'input window, operand 8, single buffered']
    #allocation14 [shape = 'u8[32768]{0}', space=vmem, size = 0x8000, scoped, tag = 'output window, operand 0, single buffered']
    %15 = vsyncpa [#allocation6], 0
    %16 = vsyncpa [#allocation9], 0
    %17 = vsyncpa [#allocation12], 0
    %18 = vsyncpa [#allocation7], 0
    // Predicated region
    $region2: #{tpu_custom_call.1} parent=1 // pred_check
      _
    $region3: #{tpu_custom_call.1} parent=1 // pred_check_branch
      %20 = sbr.rel (0) target = $region5
    $region4: #{tpu_custom_call.1} parent=1 // pred_region
      _
    $region5: #{tpu_custom_call.1} parent=1 // pred_fallthru
      _
    // Predicated region
    $region6: #{tpu_custom_call.1} parent=1 // pred_check
      _
    $region7: #{tpu_custom_call.1} parent=1 // pred_check_branch
      %22 = sbr.rel (0) target = $region9
    $region8: #{tpu_custom_call.1} parent=1 // pred_region
      _
    $region9: #{tpu_custom_call.1} parent=1 // pred_fallthru
      _
    // Predicated region
    $region10: #{tpu_custom_call.1} parent=1 // pred_check
      _
    $region11: #{tpu_custom_call.1} parent=1 // pred_check_branch
      %24 = sbr.rel (0) target = $region13
    $region12: #{tpu_custom_call.1} parent=1 // pred_region
      %s26 = ssub.s32 256, 256
      %27 = vsyncadd [#allocation6], %s26
      %s28 = sshll.u32 [#allocation5], 4
      %s29 = int_to_ptr.vmem [resolvable:$true] %s28
      %34 = dma.hbm_to_vmem [thread:$0]  %s2, 256, %s29, [#allocation6], 64, 64, 4
    $region13: #{tpu_custom_call.1} parent=1 // pred_fallthru
      _
    // Predicated region
    $region14: #{tpu_custom_call.1} parent=1 // pred_check
      _
    $region15: #{tpu_custom_call.1} parent=1 // pred_check_branch
      %36 = sbr.rel (0) target = $region17
    $region16: #{tpu_custom_call.1} parent=1 // pred_region
      %s38 = ssub.s32 256, 256
      %39 = vsyncadd [#allocation9], %s38
      %s40 = sshll.u32 [#allocation8], 4
      %s41 = int_to_ptr.vmem [resolvable:$true] %s40
      %46 = dma.hbm_to_vmem [thread:$0]  %s3, 256, %s41, [#allocation9], 64, 64, 4
    $region17: #{tpu_custom_call.1} parent=1 // pred_fallthru
      _
    // Predicated region
    $region18: #{tpu_custom_call.1} parent=1 // pred_check
      _
    $region19: #{tpu_custom_call.1} parent=1 // pred_check_branch
      %48 = sbr.rel (0) target = $region21
    $region20: #{tpu_custom_call.1} parent=1 // pred_region
      %s50 = ssub.s32 16, 16
      %51 = vsyncadd [#allocation9], %s50
      %s53 = sshll.u32 [#allocation10], 4
      %s54 = int_to_ptr.vmem [resolvable:$true] %s53
      %56 = dma.hbm_to_vmem [thread:$0]  %s4, 16, %s54, [#allocation9]
    $region21: #{tpu_custom_call.1} parent=1 // pred_fallthru
      _
    // Predicated region
    $region22: #{tpu_custom_call.1} parent=1 // pred_check
      _
    $region23: #{tpu_custom_call.1} parent=1 // pred_check_branch
      %58 = sbr.rel (0) target = $region25
    $region24: #{tpu_custom_call.1} parent=1 // pred_region
      _
    $region25: #{tpu_custom_call.1} parent=1 // pred_fallthru
      _
    // Predicated region
    $region26: #{tpu_custom_call.1} parent=1 // pred_check
      _
    $region27: #{tpu_custom_call.1} parent=1 // pred_check_branch
      %60 = sbr.rel (0) target = $region29
    $region28: #{tpu_custom_call.1} parent=1 // pred_region
      _
    $region29: #{tpu_custom_call.1} parent=1 // pred_fallthru
      _
    // Predicated region
    $region30: #{tpu_custom_call.1} parent=1 // pred_check
      _
    $region31: #{tpu_custom_call.1} parent=1 // pred_check_branch
      %62 = sbr.rel (0) target = $region33
    $region32: #{tpu_custom_call.1} parent=1 // pred_region
      %s64 = ssub.s32 16, 16
      %65 = vsyncadd [#allocation12], %s64
      %s67 = sshll.u32 [#allocation11], 4
      %s68 = int_to_ptr.vmem [resolvable:$true] %s67
      %70 = dma.hbm_to_vmem [thread:$0]  %s7, 16, %s68, [#allocation12]
    $region33: #{tpu_custom_call.1} parent=1 // pred_fallthru
      _
    // Predicated region
    $region34: #{tpu_custom_call.1} parent=1 // pred_check
      _
    $region35: #{tpu_custom_call.1} parent=1 // pred_check_branch
      %72 = sbr.rel (0) target = $region37
    $region36: #{tpu_custom_call.1} parent=1 // pred_region
      %s74 = ssub.s32 128, 128
      %75 = vsyncadd [#allocation12], %s74
      %s77 = sshll.u32 [#allocation13], 4
      %s78 = int_to_ptr.vmem [resolvable:$true] %s77
      %80 = dma.hbm_to_vmem [thread:$0]  %s8, 128, %s78, [#allocation12]
    $region37: #{tpu_custom_call.1} parent=1 // pred_fallthru
      _
    // Predicated region
    $region38: #{tpu_custom_call.1} parent=1 // pred_check
      _
    $region39: #{tpu_custom_call.1} parent=1 // pred_check_branch
      %82 = sbr.rel (0) target = $region41
    $region40: #{tpu_custom_call.1} parent=1 // pred_region
      _
    $region41: #{tpu_custom_call.1} parent=1 // pred_fallthru
      _
    // Predicated region
    $region42: #{tpu_custom_call.1} parent=1 // pred_check
      _
    $region43: #{tpu_custom_call.1} parent=1 // pred_check_branch
      %84 = sbr.rel (0) target = $region45
    $region44: #{tpu_custom_call.1} parent=1 // pred_region
      %85 = dma.done [#allocation6], 256
    $region45: #{tpu_custom_call.1} parent=1 // pred_fallthru
      _
    // Predicated region
    $region46: #{tpu_custom_call.1} parent=1 // pred_check
      _
    $region47: #{tpu_custom_call.1} parent=1 // pred_check_branch
      %87 = sbr.rel (0) target = $region49
    $region48: #{tpu_custom_call.1} parent=1 // pred_region
      %88 = dma.done [#allocation9], 256
    $region49: #{tpu_custom_call.1} parent=1 // pred_fallthru
      _
    // Predicated region
    $region50: #{tpu_custom_call.1} parent=1 // pred_check
      _
    $region51: #{tpu_custom_call.1} parent=1 // pred_check_branch
      %90 = sbr.rel (0) target = $region53
    $region52: #{tpu_custom_call.1} parent=1 // pred_region
      %91 = dma.done [#allocation9], 16
    $region53: #{tpu_custom_call.1} parent=1 // pred_fallthru
      _
    // Predicated region
    $region54: #{tpu_custom_call.1} parent=1 // pred_check
      _
    $region55: #{tpu_custom_call.1} parent=1 // pred_check_branch
      %93 = sbr.rel (0) target = $region57
    $region56: #{tpu_custom_call.1} parent=1 // pred_region
      %94 = dma.done [#allocation12], 16
    $region57: #{tpu_custom_call.1} parent=1 // pred_fallthru
      _
    // Predicated region
    $region58: #{tpu_custom_call.1} parent=1 // pred_check
      _
    $region59: #{tpu_custom_call.1} parent=1 // pred_check_branch
      %96 = sbr.rel (0) target = $region61
    $region60: #{tpu_custom_call.1} parent=1 // pred_region
      %97 = dma.done [#allocation12], 128
    $region61: #{tpu_custom_call.1} parent=1 // pred_fallthru
      _
    %p99 = scmp.eq.s32.totalorder 0, 0
    // Predicated region
    $region62: #{tpu_custom_call.1} parent=1 // pred_check
      %p100 = pneg %p99
    $region63: #{tpu_custom_call.1} parent=1 // pred_check_branch
      %102 = sbr.rel (%p100) target = $region65
    $region64: #{tpu_custom_call.1} parent=1 // pred_region
      %v103 = vld [vmem:[#allocation13] sm:$0xff]
      %vm104 = vcmask 261120
      %105 = vst.msk [vmem:[#allocation2] sm:$0xff] %vm104, %v103
      %v106 = vld [vmem:[%s9] sm:$0xff]
      %107 = vst.msk [vmem:[#allocation3] sm:$0xff] %vm104, %v106
      %108 = vst [vmem:[#allocation4] sm:$0xff] 0.0
    $region65: #{tpu_custom_call.1} parent=1 // pred_fallthru
      _
    %v109 = vld [vmem:[#allocation5] sm:$0xf]
    %v110 = vld [vmem:[#allocation5 + $0x4] sm:$0xf]
    %v111 = vld [vmem:[#allocation5 + $0x8] sm:$0xf]
    %v112 = vld [vmem:[#allocation5 + $0xc] sm:$0xf]
    %v113 = vld [vmem:[#allocation8] sm:$0xf]
    %v114 = vld [vmem:[#allocation8 + $0x4] sm:$0xf]
    %v115 = vld [vmem:[#allocation8 + $0x8] sm:$0xf]
    %v116 = vld [vmem:[#allocation8 + $0xc] sm:$0xf]
    %v117 = vld [vmem:[#allocation10] sm:$0x1]
    %v119 = vlaneseq
    %v120 = vshrl.u32 %v119, 7
    %v121 = vsub.s32 0, %v120
    %v122 = vrot.slane %v117, %v121
    %v124 = vld [vmem:[%s5] sm:$0xff]
    %v125 = vld [vmem:[%s5 + $0x8] sm:$0xff]
    %v126 = vld [vmem:[%s5 + $0x10] sm:$0xff]
    %v127 = vld [vmem:[%s5 + $0x18] sm:$0xff]
    %v128 = vld [vmem:[%s5 + $0x20] sm:$0xff]
    %v129 = vld [vmem:[%s5 + $0x28] sm:$0xff]
    %v130 = vld [vmem:[%s5 + $0x30] sm:$0xff]
    %v131 = vld [vmem:[%s5 + $0x38] sm:$0xff]
    %v132 = vld [vmem:[%s5 + $0x40] sm:$0xff]
    %v133 = vld [vmem:[%s5 + $0x48] sm:$0xff]
    %v134 = vld [vmem:[%s5 + $0x50] sm:$0xff]
    %v135 = vld [vmem:[%s5 + $0x58] sm:$0xff]
    %v136 = vld [vmem:[%s5 + $0x60] sm:$0xff]
    %v137 = vld [vmem:[%s5 + $0x68] sm:$0xff]
    %v138 = vld [vmem:[%s5 + $0x70] sm:$0xff]
    %v139 = vld [vmem:[%s5 + $0x78] sm:$0xff]
    %v140 = vld [vmem:[%s6] sm:$0xff]
    %v141 = vld [vmem:[#allocation11] sm:$0x1]
    %v142 = vld [vmem:[#allocation2] sm:$0xff]
    %v143 = vld [vmem:[#allocation3] sm:$0xff]
    %v144 = vld [vmem:[#allocation4] sm:$0xff]
    %v145 = vld [vmem:[%s0] sm:$0xff]
    %v146 = vpack.c.bf16 %v142, %v142
    %v151 = vunpack.c.l.b16 %v109
    %v152 = vunpack.c.l.b16 %v110
    %v153 = vunpack.c.l.b16 %v111
    %v154 = vunpack.c.l.b16 %v112
    %v155 = vpack.c.b16 %v152, %v151
    %v156 = vpack.c.b16 %v154, %v153
    %vm159 = vcmask 261120
    %v161 = vsel %vm159, %v146, 0
    %163 = vmatprep.subr.bf16.mxu0 0
    %164 = vmatpush1.bf16.msra.mxu0 0
    %165 = vmatprep.subr.bf16.mxu0 0
    %166 = vmatpush1.bf16.msra.mxu0 0
    %167 = vmatprep.subr.bf16.mxu0 0
    %168 = vmatpush1.bf16.msra.mxu0 0
    %169 = vmatprep.subr.bf16.mxu0 0
    %170 = vmatpush1.bf16.msra.mxu0 0
    %171 = vmatprep.subr.bf16.mxu0 0
    %172 = vmatpush1.bf16.msra.mxu0 0
    %173 = vmatprep.subr.bf16.mxu0 0
    %174 = vmatpush1.bf16.msra.mxu0 0
    %175 = vmatprep.subr.bf16.mxu0 0
    %176 = vmatpush1.bf16.msra.mxu0 %v156
    %177 = vmatprep.subr.bf16.mxu0 0
    %178 = vmatpush1.bf16.msra.mxu0 %v155
    %179 = vmatprep.subr.bf16.mxu0 0
    %180 = vmatpush2.bf16.msra.mxu0 0
    %181 = vmatprep.subr.bf16.mxu0 0
    %182 = vmatpush2.bf16.msra.mxu0 0
    %183 = vmatprep.subr.bf16.mxu0 0
    %184 = vmatpush2.bf16.msra.mxu0 0
    %185 = vmatprep.subr.bf16.mxu0 0
    %186 = vmatpush2.bf16.msra.mxu0 0
    %187 = vmatprep.subr.bf16.mxu0 0
    %188 = vmatpush2.bf16.msra.mxu0 0
    %189 = vmatprep.subr.bf16.mxu0 0
    %190 = vmatpush2.bf16.msra.mxu0 0
    %191 = vmatprep.subr.bf16.mxu0 0
    %192 = vmatpush2.bf16.msra.mxu0 0
    %193 = vmatprep.subr.bf16.mxu0 0
    %194 = vmatpush2.bf16.msra.mxu0 0
    %195 = vmatprep.mubr.bf16.mxu0 0
    %196 = vmatmul.mubr.bf16.gmra.mxu0 %v161
    %v197 = vpop.f32.mrf.mxu0
    %v198 = vadd.f32 0.0, %v197
    %v199 = vpop.f32.mrf.mxu0
    %v200 = vpop.f32.mrf.mxu0
    %v201 = vpop.f32.mrf.mxu0
    %202 = vdwg.mxu0
    %v203 = vadd.f32 %v145, %v198
    %v204 = vmul.f32 %v203, 0.5
    %v205 = vtanh.pop %v204
    %v206 = vmul.f32 %v205, 0.5
    %v207 = vadd.f32 %v206, 0.5
    %v208 = vtanh.pop %v203
    %210 = vrot.lane.b32.xlu0 %v143, 32
    %v211 = vpop.permute.xlu0 %210
    %v213 = vmul.f32 %v207, %v211
    %215 = vrot.lane.b32.xlu0 %v208, 64
    %v216 = vpop.permute.xlu0 %215
    %v218 = vmul.f32 %v207, %v216
    %220 = vrot.lane.b32.xlu0 %v218, 32
    %v221 = vpop.permute.xlu0 %220
    %v223 = vadd.f32 %v213, %v221
    %v224 = vtanh.pop %v223
    %226 = vrot.lane.b32.xlu0 %v224, 64
    %v227 = vpop.permute.xlu0 %226
    %v229 = vmul.f32 %v207, %v227
    %v230 = vpack.c.bf16 %v229, %v229
    %232 = vrot.lane.b32.xlu0 %v230, 32
    %v233 = vpop.permute.xlu0 %232
    %v238 = vunpack.c.l.b16 %v113
    %v239 = vunpack.c.l.b16 %v114
    %v240 = vunpack.c.l.b16 %v115
    %v241 = vunpack.c.l.b16 %v116
    %v242 = vpack.c.b16 %v239, %v238
    %v243 = vpack.c.b16 %v241, %v240
    %v247 = vsel %vm159, %v233, 0
    %249 = vmatprep.subr.bf16.mxu0 0
    %250 = vmatpush1.bf16.msra.mxu0 0
    %251 = vmatprep.subr.bf16.mxu0 0
    %252 = vmatpush1.bf16.msra.mxu0 0
    %253 = vmatprep.subr.bf16.mxu0 0
    %254 = vmatpush1.bf16.msra.mxu0 0
    %255 = vmatprep.subr.bf16.mxu0 0
    %256 = vmatpush1.bf16.msra.mxu0 0
    %257 = vmatprep.subr.bf16.mxu0 0
    %258 = vmatpush1.bf16.msra.mxu0 0
    %259 = vmatprep.subr.bf16.mxu0 0
    %260 = vmatpush1.bf16.msra.mxu0 0
    %261 = vmatprep.subr.bf16.mxu0 0
    %262 = vmatpush1.bf16.msra.mxu0 %v243
    %263 = vmatprep.subr.bf16.mxu0 0
    %264 = vmatpush1.bf16.msra.mxu0 %v242
    %265 = vmatprep.subr.bf16.mxu0 0
    %266 = vmatpush2.bf16.msra.mxu0 0
    %267 = vmatprep.subr.bf16.mxu0 0
    %268 = vmatpush2.bf16.msra.mxu0 0
    %269 = vmatprep.subr.bf16.mxu0 0
    %270 = vmatpush2.bf16.msra.mxu0 0
    %271 = vmatprep.subr.bf16.mxu0 0
    %272 = vmatpush2.bf16.msra.mxu0 0
    %273 = vmatprep.subr.bf16.mxu0 0
    %274 = vmatpush2.bf16.msra.mxu0 0
    %275 = vmatprep.subr.bf16.mxu0 0
    %276 = vmatpush2.bf16.msra.mxu0 0
    %277 = vmatprep.subr.bf16.mxu0 0
    %278 = vmatpush2.bf16.msra.mxu0 0
    %279 = vmatprep.subr.bf16.mxu0 0
    %280 = vmatpush2.bf16.msra.mxu0 0
    %281 = vmatprep.mubr.bf16.mxu0 0
    %282 = vmatmul.mubr.bf16.gmra.mxu0 %v247
    %v283 = vpop.f32.mrf.mxu0
    %v284 = vadd.f32 %v122, %v283
    %v285 = vpop.f32.mrf.mxu0
    %v286 = vpop.f32.mrf.mxu0
    %v287 = vpop.f32.mrf.mxu0
    %288 = vdwg.mxu0
    %v289 = vmul.f32 %v284, 0.5
    %v290 = vtanh.pop %v289
    %v291 = vmul.f32 %v290, 0.5
    %v292 = vadd.f32 %v291, 0.5
    %v293 = vld [vmem:[%s1] sm:$0xff]
    %v294 = vsub.f32 %v293, %v292
    %v295 = vmul.f32 %v144, %v144
    %296 = vadd.xlane.f32.xlu0 %v295
    %v297 = vpop.xlane.xlu0 %296
    %v298 = vrsqrt.pop %v297
    %v299 = vmul.f32 %v297, %v298
    %vm300 = vcmp.eq.f32.partialorder %v297, inf
    %v301 = vsel %vm300, %v297, %v299
    %vm302 = vcmp.eq.f32.partialorder %v297, 0.0
    %v303 = vand.u32 %v297, 2147483648
    %v304 = vsel %vm302, %v303, %v301
    %305 = vmatprep.subr.mxu0 0.0
    %306 = vmatpush1.msra.mxu0 %v139
    %307 = vmatprep.subr.mxu0 0.0
    %308 = vmatpush1.msra.mxu0 %v138
    %309 = vmatprep.subr.mxu0 0.0
    %310 = vmatpush1.msra.mxu0 %v137
    %311 = vmatprep.subr.mxu0 0.0
    %312 = vmatpush1.msra.mxu0 %v136
    %313 = vmatprep.subr.mxu0 0.0
    %314 = vmatpush1.msra.mxu0 %v135
    %315 = vmatprep.subr.mxu0 0.0
    %316 = vmatpush1.msra.mxu0 %v134
    %317 = vmatprep.subr.mxu0 0.0
    %318 = vmatpush1.msra.mxu0 %v133
    %319 = vmatprep.subr.mxu0 0.0
    %320 = vmatpush1.msra.mxu0 %v132
    %321 = vmatprep.subr.mxu0 0.0
    %322 = vmatpush1.msra.mxu0 %v131
    %323 = vmatprep.subr.mxu0 0.0
    %324 = vmatpush1.msra.mxu0 %v130
    %325 = vmatprep.subr.mxu0 0.0
    %326 = vmatpush1.msra.mxu0 %v129
    %327 = vmatprep.subr.mxu0 0.0
    %328 = vmatpush1.msra.mxu0 %v128
    %329 = vmatprep.subr.mxu0 0.0
    %330 = vmatpush1.msra.mxu0 %v127
    %331 = vmatprep.subr.mxu0 0.0
    %332 = vmatpush1.msra.mxu0 %v126
    %333 = vmatprep.subr.mxu0 0.0
    %334 = vmatpush1.msra.mxu0 %v125
    %335 = vmatprep.subr.mxu0 0.0
    %336 = vmatpush1.msra.mxu0 %v124
    %337 = vmatprep.subr.mxu0 0.0
    %338 = vmatpush2.msra.mxu0 0.0
    %339 = vmatprep.subr.mxu0 0.0
    %340 = vmatpush2.msra.mxu0 0.0
    %341 = vmatprep.subr.mxu0 0.0
    %342 = vmatpush2.msra.mxu0 0.0
    %343 = vmatprep.subr.mxu0 0.0
    %344 = vmatpush2.msra.mxu0 0.0
    %345 = vmatprep.subr.mxu0 0.0
    %346 = vmatpush2.msra.mxu0 0.0
    %347 = vmatprep.subr.mxu0 0.0
    %348 = vmatpush2.msra.mxu0 0.0
    %349 = vmatprep.subr.mxu0 0.0
    %350 = vmatpush2.msra.mxu0 0.0
    %351 = vmatprep.subr.mxu0 0.0
    %352 = vmatpush2.msra.mxu0 0.0
    %353 = vmatprep.subr.mxu0 0.0
    %354 = vmatpush2.msra.mxu0 0.0
    %355 = vmatprep.subr.mxu0 0.0
    %356 = vmatpush2.msra.mxu0 0.0
    %357 = vmatprep.subr.mxu0 0.0
    %358 = vmatpush2.msra.mxu0 0.0
    %359 = vmatprep.subr.mxu0 0.0
    %360 = vmatpush2.msra.mxu0 0.0
    %361 = vmatprep.subr.mxu0 0.0
    %362 = vmatpush2.msra.mxu0 0.0
    %363 = vmatprep.subr.mxu0 0.0
    %364 = vmatpush2.msra.mxu0 0.0
    %365 = vmatprep.subr.mxu0 0.0
    %366 = vmatpush2.msra.mxu0 0.0
    %367 = vmatprep.subr.mxu0 0.0
    %368 = vmatpush2.msra.mxu0 0.0
    %369 = vmatprep.mubr.f32.mxu0 0.0
    %370 = vmatmul.mubr.f32.gmra.mxu0 %v144
    %v371 = vpop.f32.mrf.mxu0
    %v372 = vadd.f32 0.0, %v371
    %v373 = vpop.f32.mrf.mxu0
    %374 = vdwg.mxu0
    %v376 = vlaneseq
    %v377 = vshrl.u32 %v376, 7
    %v378 = vsub.s32 0, %v377
    %v379 = vrot.slane %v141, %v378
    %v381 = vmul.f32 %v304, %v379
    %v382 = vmax.f32 %v381, 1e-08
    %v383 = vrcp.pop %v382
    %v384 = vmul.f32 %v372, %v383
    %vm385 = vcmask 64512
    %v386 = vsel %vm385, %v384, -inf
    %387 = vmax.xlane.f32.xlu0 %v386
    %v388 = vpop.xlane.xlu0 %387
    %v389 = vsub.f32 %v384, %v388
    %v390 = vmul.f32 %v389, 1.442695
    %v391 = vpow.pop %v390
    %v392 = vsel %vm385, %v391, 0.0
    %393 = vadd.xlane.f32.xlu0 %v392
    %v394 = vpop.xlane.xlu0 %393
    %v395 = vrcp.pop %v394
    %v396 = vmul.f32 %v391, %v395
    %v398 = vsel %vm385, %v396, 0
    %400 = vmatprep.subr.mxu0 0.0
    %401 = vmatpush1.msra.mxu0 0.0
    %402 = vmatprep.subr.mxu0 0.0
    %403 = vmatpush1.msra.mxu0 0.0
    %404 = vmatprep.subr.mxu0 0.0
    %405 = vmatpush1.msra.mxu0 0.0
    %406 = vmatprep.subr.mxu0 0.0
    %407 = vmatpush1.msra.mxu0 0.0
    %408 = vmatprep.subr.mxu0 0.0
    %409 = vmatpush1.msra.mxu0 0.0
    %410 = vmatprep.subr.mxu0 0.0
    %411 = vmatpush1.msra.mxu0 0.0
    %412 = vmatprep.subr.mxu0 0.0
    %413 = vmatpush1.msra.mxu0 0.0
    %414 = vmatprep.subr.mxu0 0.0
    %415 = vmatpush1.msra.mxu0 0.0
    %416 = vmatprep.subr.mxu0 0.0
    %417 = vmatpush1.msra.mxu0 0.0
    %418 = vmatprep.subr.mxu0 0.0
    %419 = vmatpush1.msra.mxu0 0.0
    %420 = vmatprep.subr.mxu0 0.0
    %421 = vmatpush1.msra.mxu0 0.0
    %422 = vmatprep.subr.mxu0 0.0
    %423 = vmatpush1.msra.mxu0 0.0
    %424 = vmatprep.subr.mxu0 0.0
    %425 = vmatpush1.msra.mxu0 0.0
    %426 = vmatprep.subr.mxu0 0.0
    %427 = vmatpush1.msra.mxu0 0.0
    %428 = vmatprep.subr.mxu0 0.0
    %429 = vmatpush1.msra.mxu0 0.0
    %430 = vmatprep.subr.mxu0 0.0
    %431 = vmatpush1.msra.mxu0 %v140
    %432 = vmatprep.subr.mxu0 0.0
    %433 = vmatpush2.msra.mxu0 0.0
    %434 = vmatprep.subr.mxu0 0.0
    %435 = vmatpush2.msra.mxu0 0.0
    %436 = vmatprep.subr.mxu0 0.0
    %437 = vmatpush2.msra.mxu0 0.0
    %438 = vmatprep.subr.mxu0 0.0
    %439 = vmatpush2.msra.mxu0 0.0
    %440 = vmatprep.subr.mxu0 0.0
    %441 = vmatpush2.msra.mxu0 0.0
    %442 = vmatprep.subr.mxu0 0.0
    %443 = vmatpush2.msra.mxu0 0.0
    %444 = vmatprep.subr.mxu0 0.0
    %445 = vmatpush2.msra.mxu0 0.0
    %446 = vmatprep.subr.mxu0 0.0
    %447 = vmatpush2.msra.mxu0 0.0
    %448 = vmatprep.subr.mxu0 0.0
    %449 = vmatpush2.msra.mxu0 0.0
    %450 = vmatprep.subr.mxu0 0.0
    %451 = vmatpush2.msra.mxu0 0.0
    %452 = vmatprep.subr.mxu0 0.0
    %453 = vmatpush2.msra.mxu0 0.0
    %454 = vmatprep.subr.mxu0 0.0
    %455 = vmatpush2.msra.mxu0 0.0
    %456 = vmatprep.subr.mxu0 0.0
    %457 = vmatpush2.msra.mxu0 0.0
    %458 = vmatprep.subr.mxu0 0.0
    %459 = vmatpush2.msra.mxu0 0.0
    %460 = vmatprep.subr.mxu0 0.0
    %461 = vmatpush2.msra.mxu0 0.0
    %462 = vmatprep.subr.mxu0 0.0
    %463 = vmatpush2.msra.mxu0 0.0
    %464 = vmatprep.mubr.f32.mxu0 0.0
    %465 = vmatmul.mubr.f32.gmra.mxu0 %v398
    %v466 = vpop.f32.mrf.mxu0
    %v467 = vadd.f32 0.0, %v466
    %v468 = vpop.f32.mrf.mxu0
    %469 = vdwg.mxu0
    %s470 = scalar_select %p99, 0.0, 1.0
    %v471 = vstv %s470
    %v472 = vmul.f32 %v471, %v467
    %v473 = vadd.f32 %v292, %v472
    %474 = vst [vmem:[#allocation14] sm:$0xff] %v473
    %s475 = scalar_lea.vmem %s0, 8
    %v476 = vld [vmem:[%s475] sm:$0xff]
    %477 = vmatprep.subr.bf16.mxu0 0
    %478 = vmatpush1.bf16.msra.mxu0 0
    %479 = vmatprep.subr.bf16.mxu0 0
    %480 = vmatpush1.bf16.msra.mxu0 0
    %481 = vmatprep.subr.bf16.mxu0 0
    %482 = vmatpush1.bf16.msra.mxu0 0
    %483 = vmatprep.subr.bf16.mxu0 0
    %484 = vmatpush1.bf16.msra.mxu0 0
    %485 = vmatprep.subr.bf16.mxu0 0
    %486 = vmatpush1.bf16.msra.mxu0 0
    %487 = vmatprep.subr.bf16.mxu0 0
    %488 = vmatpush1.bf16.msra.mxu0 0
    %489 = vmatprep.subr.bf16.mxu0 0
    %490 = vmatpush1.bf16.msra.mxu0 %v156
    %491 = vmatprep.subr.bf16.mxu0 0
    %492 = vmatpush1.bf16.msra.mxu0 %v155
    %493 = vmatprep.subr.bf16.mxu0 0
    %494 = vmatpush2.bf16.msra.mxu0 0
    %495 = vmatprep.subr.bf16.mxu0 0
    %496 = vmatpush2.bf16.msra.mxu0 0
    %497 = vmatprep.subr.bf16.mxu0 0
    %498 = vmatpush2.bf16.msra.mxu0 0
    %499 = vmatprep.subr.bf16.mxu0 0
    %500 = vmatpush2.bf16.msra.mxu0 0
    %501 = vmatprep.subr.bf16.mxu0 0
    %502 = vmatpush2.bf16.msra.mxu0 0
    %503 = vmatprep.subr.bf16.mxu0 0
    %504 = vmatpush2.bf16.msra.mxu0 0
    %505 = vmatprep.subr.bf16.mxu0 0
    %506 = vmatpush2.bf16.msra.mxu0 0
    %507 = vmatprep.subr.bf16.mxu0 0
    %508 = vmatpush2.bf16.msra.mxu0 0
    %509 = vmatprep.mubr.bf16.mxu0 0
    %510 = vmatmul.mubr.bf16.gmra.mxu0 %v247
    %v511 = vpop.f32.mrf.mxu0
    %v512 = vadd.f32 0.0, %v511
    %v513 = vpop.f32.mrf.mxu0
    %v514 = vpop.f32.mrf.mxu0
    %v515 = vpop.f32.mrf.mxu0
    %516 = vdwg.mxu0
    %v517 = vadd.f32 %v476, %v512
    %v518 = vmul.f32 %v517, 0.5
    %v519 = vtanh.pop %v518
    %v520 = vmul.f32 %v519, 0.5
    %v521 = vadd.f32 %v520, 0.5
    %v522 = vtanh.pop %v517
    %v523 = vmul.f32 %v521, %v223
    %525 = vrot.lane.b32.xlu0 %v522, 64
    %v526 = vpop.permute.xlu0 %525
    %v528 = vmul.f32 %v521, %v526
    %530 = vrot.lane.b32.xlu0 %v528, 32
    %v531 = vpop.permute.xlu0 %530
    %v533 = vadd.f32 %v523, %v531
    %v534 = vtanh.pop %v533
    %536 = vrot.lane.b32.xlu0 %v534, 64
    %v537 = vpop.permute.xlu0 %536
    %v539 = vmul.f32 %v521, %v537
    %v540 = vpack.c.bf16 %v539, %v539
    %542 = vrot.lane.b32.xlu0 %v540, 32
    %v543 = vpop.permute.xlu0 %542
    %v545 = vsel %vm159, %v543, 0
    %547 = vmatprep.subr.bf16.mxu0 0
    %548 = vmatpush1.bf16.msra.mxu0 0
    %549 = vmatprep.subr.bf16.mxu0 0
    %550 = vmatpush1.bf16.msra.mxu0 0
    %551 = vmatprep.subr.bf16.mxu0 0
    %552 = vmatpush1.bf16.msra.mxu0 0
    %553 = vmatprep.subr.bf16.mxu0 0
    %554 = vmatpush1.bf16.msra.mxu0 0
    %555 = vmatprep.subr.bf16.mxu0 0
    %556 = vmatpush1.bf16.msra.mxu0 0
    %557 = vmatprep.subr.bf16.mxu0 0
    %558 = vmatpush1.bf16.msra.mxu0 0
    %559 = vmatprep.subr.bf16.mxu0 0
    %560 = vmatpush1.bf16.msra.mxu0 %v243
    %561 = vmatprep.subr.bf16.mxu0 0
    %562 = vmatpush1.bf16.msra.mxu0 %v242
    %563 = vmatprep.subr.bf16.mxu0 0
    %564 = vmatpush2.bf16.msra.mxu0 0
    %565 = vmatprep.subr.bf16.mxu0 0
    %566 = vmatpush2.bf16.msra.mxu0 0
    %567 = vmatprep.subr.bf16.mxu0 0
    %568 = vmatpush2.bf16.msra.mxu0 0
    %569 = vmatprep.subr.bf16.mxu0 0
    %570 = vmatpush2.bf16.msra.mxu0 0
    %571 = vmatprep.subr.bf16.mxu0 0
    %572 = vmatpush2.bf16.msra.mxu0 0
    %573 = vmatprep.subr.bf16.mxu0 0
    %574 = vmatpush2.bf16.msra.mxu0 0
    %575 = vmatprep.subr.bf16.mxu0 0
    %576 = vmatpush2.bf16.msra.mxu0 0
    %577 = vmatprep.subr.bf16.mxu0 0
    %578 = vmatpush2.bf16.msra.mxu0 0
    %579 = vmatprep.mubr.bf16.mxu0 0
    %580 = vmatmul.mubr.bf16.gmra.mxu0 %v545
    %v581 = vpop.f32.mrf.mxu0
    %v582 = vadd.f32 %v122, %v581
    %v583 = vpop.f32.mrf.mxu0
    %v584 = vpop.f32.mrf.mxu0
    %v585 = vpop.f32.mrf.mxu0
    %586 = vdwg.mxu0
    %v587 = vmul.f32 %v582, 0.5
    %v588 = vtanh.pop %v587
    %v589 = vmul.f32 %v588, 0.5
    %v590 = vadd.f32 %v589, 0.5
    %s591 = scalar_lea.vmem %s1, 8
    %v592 = vld [vmem:[%s591] sm:$0xff]
    %v593 = vsub.f32 %v592, %v590
    %v594 = vmul.f32 %v294, %v294
    %595 = vadd.xlane.f32.xlu0 %v594
    %v596 = vpop.xlane.xlu0 %595
    %v597 = vrsqrt.pop %v596
    %v598 = vmul.f32 %v596, %v597
    %vm599 = vcmp.eq.f32.partialorder %v596, inf
    %v600 = vsel %vm599, %v596, %v598
    %vm601 = vcmp.eq.f32.partialorder %v596, 0.0
    %v602 = vand.u32 %v596, 2147483648
    %v603 = vsel %vm601, %v602, %v600
    %604 = vmatprep.subr.mxu0 0.0
    %605 = vmatpush1.msra.mxu0 %v139
    %606 = vmatprep.subr.mxu0 0.0
    %607 = vmatpush1.msra.mxu0 %v138
    %608 = vmatprep.subr.mxu0 0.0
    %609 = vmatpush1.msra.mxu0 %v137
    %610 = vmatprep.subr.mxu0 0.0
    %611 = vmatpush1.msra.mxu0 %v136
    %612 = vmatprep.subr.mxu0 0.0
    %613 = vmatpush1.msra.mxu0 %v135
    %614 = vmatprep.subr.mxu0 0.0
    %615 = vmatpush1.msra.mxu0 %v134
    %616 = vmatprep.subr.mxu0 0.0
    %617 = vmatpush1.msra.mxu0 %v133
    %618 = vmatprep.subr.mxu0 0.0
    %619 = vmatpush1.msra.mxu0 %v132
    %620 = vmatprep.subr.mxu0 0.0
    %621 = vmatpush1.msra.mxu0 %v131
    %622 = vmatprep.subr.mxu0 0.0
    %623 = vmatpush1.msra.mxu0 %v130
    %624 = vmatprep.subr.mxu0 0.0
    %625 = vmatpush1.msra.mxu0 %v129
    %626 = vmatprep.subr.mxu0 0.0
    %627 = vmatpush1.msra.mxu0 %v128
    %628 = vmatprep.subr.mxu0 0.0
    %629 = vmatpush1.msra.mxu0 %v127
    %630 = vmatprep.subr.mxu0 0.0
    %631 = vmatpush1.msra.mxu0 %v126
    %632 = vmatprep.subr.mxu0 0.0
    %633 = vmatpush1.msra.mxu0 %v125
    %634 = vmatprep.subr.mxu0 0.0
    %635 = vmatpush1.msra.mxu0 %v124
    %636 = vmatprep.subr.mxu0 0.0
    %637 = vmatpush2.msra.mxu0 0.0
    %638 = vmatprep.subr.mxu0 0.0
    %639 = vmatpush2.msra.mxu0 0.0
    %640 = vmatprep.subr.mxu0 0.0
    %641 = vmatpush2.msra.mxu0 0.0
    %642 = vmatprep.subr.mxu0 0.0
    %643 = vmatpush2.msra.mxu0 0.0
    %644 = vmatprep.subr.mxu0 0.0
    %645 = vmatpush2.msra.mxu0 0.0
    %646 = vmatprep.subr.mxu0 0.0
    %647 = vmatpush2.msra.mxu0 0.0
    %648 = vmatprep.subr.mxu0 0.0
    %649 = vmatpush2.msra.mxu0 0.0
    %650 = vmatprep.subr.mxu0 0.0
    %651 = vmatpush2.msra.mxu0 0.0
    %652 = vmatprep.subr.mxu0 0.0
    %653 = vmatpush2.msra.mxu0 0.0
    %654 = vmatprep.subr.mxu0 0.0
    %655 = vmatpush2.msra.mxu0 0.0
    %656 = vmatprep.subr.mxu0 0.0
    %657 = vmatpush2.msra.mxu0 0.0
    %658 = vmatprep.subr.mxu0 0.0
    %659 = vmatpush2.msra.mxu0 0.0
    %660 = vmatprep.subr.mxu0 0.0
    %661 = vmatpush2.msra.mxu0 0.0
    %662 = vmatprep.subr.mxu0 0.0
    %663 = vmatpush2.msra.mxu0 0.0
    %664 = vmatprep.subr.mxu0 0.0
    %665 = vmatpush2.msra.mxu0 0.0
    %666 = vmatprep.subr.mxu0 0.0
    %667 = vmatpush2.msra.mxu0 0.0
    %668 = vmatprep.mubr.f32.mxu0 0.0
    %669 = vmatmul.mubr.f32.gmra.mxu0 %v294
    %v670 = vpop.f32.mrf.mxu0
    %v671 = vadd.f32 0.0, %v670
    %v672 = vpop.f32.mrf.mxu0
    %673 = vdwg.mxu0
    %v674 = vmul.f32 %v603, %v379
    %v675 = vmax.f32 %v674, 1e-08
    %v676 = vrcp.pop %v675
    %v677 = vmul.f32 %v671, %v676
    %v678 = vsel %vm385, %v677, -inf
    %679 = vmax.xlane.f32.xlu0 %v678
    %v680 = vpop.xlane.xlu0 %679
    %v681 = vsub.f32 %v677, %v680
    %v682 = vmul.f32 %v681, 1.442695
    %v683 = vpow.pop %v682
    %v684 = vsel %vm385, %v683, 0.0
    %685 = vadd.xlane.f32.xlu0 %v684
    %v686 = vpop.xlane.xlu0 %685
    %v687 = vrcp.pop %v686
    %v688 = vmul.f32 %v683, %v687
    %v690 = vsel %vm385, %v688, 0
    %692 = vmatprep.subr.mxu0 0.0
    %693 = vmatpush1.msra.mxu0 0.0
    %694 = vmatprep.subr.mxu0 0.0
    %695 = vmatpush1.msra.mxu0 0.0
    %696 = vmatprep.subr.mxu0 0.0
    %697 = vmatpush1.msra.mxu0 0.0
    %698 = vmatprep.subr.mxu0 0.0
    %699 = vmatpush1.msra.mxu0 0.0
    %700 = vmatprep.subr.mxu0 0.0
    %701 = vmatpush1.msra.mxu0 0.0
    %702 = vmatprep.subr.mxu0 0.0
    %703 = vmatpush1.msra.mxu0 0.0
    %704 = vmatprep.subr.mxu0 0.0
    %705 = vmatpush1.msra.mxu0 0.0
    %706 = vmatprep.subr.mxu0 0.0
    %707 = vmatpush1.msra.mxu0 0.0
    %708 = vmatprep.subr.mxu0 0.0
    %709 = vmatpush1.msra.mxu0 0.0
    %710 = vmatprep.subr.mxu0 0.0
    %711 = vmatpush1.msra.mxu0 0.0
    %712 = vmatprep.subr.mxu0 0.0
    %713 = vmatpush1.msra.mxu0 0.0
    %714 = vmatprep.subr.mxu0 0.0
    %715 = vmatpush1.msra.mxu0 0.0
    %716 = vmatprep.subr.mxu0 0.0
    %717 = vmatpush1.msra.mxu0 0.0
    %718 = vmatprep.subr.mxu0 0.0
    %719 = vmatpush1.msra.mxu0 0.0
    %720 = vmatprep.subr.mxu0 0.0
    %721 = vmatpush1.msra.mxu0 0.0
    %722 = vmatprep.subr.mxu0 0.0
    %723 = vmatpush1.msra.mxu0 %v140
    %724 = vmatprep.subr.mxu0 0.0
    %725 = vmatpush2.msra.mxu0 0.0
    %726 = vmatprep.subr.mxu0 0.0
    %727 = vmatpush2.msra.mxu0 0.0
    %728 = vmatprep.subr.mxu0 0.0
    %729 = vmatpush2.msra.mxu0 0.0
    %730 = vmatprep.subr.mxu0 0.0
    %731 = vmatpush2.msra.mxu0 0.0
    %732 = vmatprep.subr.mxu0 0.0
    %733 = vmatpush2.msra.mxu0 0.0
    %734 = vmatprep.subr.mxu0 0.0
    %735 = vmatpush2.msra.mxu0 0.0
    %736 = vmatprep.subr.mxu0 0.0
    %737 = vmatpush2.msra.mxu0 0.0
    %738 = vmatprep.subr.mxu0 0.0
    %739 = vmatpush2.msra.mxu0 0.0
    %740 = vmatprep.subr.mxu0 0.0
    %741 = vmatpush2.msra.mxu0 0.0
    %742 = vmatprep.subr.mxu0 0.0
    %743 = vmatpush2.msra.mxu0 0.0
    %744 = vmatprep.subr.mxu0 0.0
    %745 = vmatpush2.msra.mxu0 0.0
    %746 = vmatprep.subr.mxu0 0.0
    %747 = vmatpush2.msra.mxu0 0.0
    %748 = vmatprep.subr.mxu0 0.0
    %749 = vmatpush2.msra.mxu0 0.0
    %750 = vmatprep.subr.mxu0 0.0
    %751 = vmatpush2.msra.mxu0 0.0
    %752 = vmatprep.subr.mxu0 0.0
    %753 = vmatpush2.msra.mxu0 0.0
    %754 = vmatprep.subr.mxu0 0.0
    %755 = vmatpush2.msra.mxu0 0.0
    %756 = vmatprep.mubr.f32.mxu0 0.0
    %757 = vmatmul.mubr.f32.gmra.mxu0 %v690
    %v758 = vpop.f32.mrf.mxu0
    %v759 = vadd.f32 0.0, %v758
    %v760 = vpop.f32.mrf.mxu0
    %761 = vdwg.mxu0
    %v762 = vadd.f32 %v590, %v759
    %s763 = scalar_lea.vmem [#allocation14], 8
    %764 = vst [vmem:[%s763] sm:$0xff] %v762
    %s765 = scalar_lea.vmem %s0, 16
    %v766 = vld [vmem:[%s765] sm:$0xff]
    %767 = vmatprep.subr.bf16.mxu0 0
    %768 = vmatpush1.bf16.msra.mxu0 0
    %769 = vmatprep.subr.bf16.mxu0 0
    %770 = vmatpush1.bf16.msra.mxu0 0
    %771 = vmatprep.subr.bf16.mxu0 0
    %772 = vmatpush1.bf16.msra.mxu0 0
    %773 = vmatprep.subr.bf16.mxu0 0
    %774 = vmatpush1.bf16.msra.mxu0 0
    %775 = vmatprep.subr.bf16.mxu0 0
    %776 = vmatpush1.bf16.msra.mxu0 0
    %777 = vmatprep.subr.bf16.mxu0 0
    %778 = vmatpush1.bf16.msra.mxu0 0
    %779 = vmatprep.subr.bf16.mxu0 0
    %780 = vmatpush1.bf16.msra.mxu0 %v156
    %781 = vmatprep.subr.bf16.mxu0 0
    %782 = vmatpush1.bf16.msra.mxu0 %v155
    %783 = vmatprep.subr.bf16.mxu0 0
    %784 = vmatpush2.bf16.msra.mxu0 0
    %785 = vmatprep.subr.bf16.mxu0 0
    %786 = vmatpush2.bf16.msra.mxu0 0
    %787 = vmatprep.subr.bf16.mxu0 0
    %788 = vmatpush2.bf16.msra.mxu0 0
    %789 = vmatprep.subr.bf16.mxu0 0
    %790 = vmatpush2.bf16.msra.mxu0 0
    %791 = vmatprep.subr.bf16.mxu0 0
    %792 = vmatpush2.bf16.msra.mxu0 0
    %793 = vmatprep.subr.bf16.mxu0 0
    %794 = vmatpush2.bf16.msra.mxu0 0
    %795 = vmatprep.subr.bf16.mxu0 0
    %796 = vmatpush2.bf16.msra.mxu0 0
    %797 = vmatprep.subr.bf16.mxu0 0
    %798 = vmatpush2.bf16.msra.mxu0 0
    %799 = vmatprep.mubr.bf16.mxu0 0
    %800 = vmatmul.mubr.bf16.gmra.mxu0 %v545
    %v801 = vpop.f32.mrf.mxu0
    %v802 = vadd.f32 0.0, %v801
    %v803 = vpop.f32.mrf.mxu0
    %v804 = vpop.f32.mrf.mxu0
    %v805 = vpop.f32.mrf.mxu0
    %806 = vdwg.mxu0
    %v807 = vadd.f32 %v766, %v802
    %v808 = vmul.f32 %v807, 0.5
    %v809 = vtanh.pop %v808
    %v810 = vmul.f32 %v809, 0.5
    %v811 = vadd.f32 %v810, 0.5
    %v812 = vtanh.pop %v807
    %v813 = vmul.f32 %v811, %v533
    %815 = vrot.lane.b32.xlu0 %v812, 64
    %v816 = vpop.permute.xlu0 %815
    %v818 = vmul.f32 %v811, %v816
    %820 = vrot.lane.b32.xlu0 %v818, 32
    %v821 = vpop.permute.xlu0 %820
    %v823 = vadd.f32 %v813, %v821
    %v824 = vtanh.pop %v823
    %826 = vrot.lane.b32.xlu0 %v824, 64
    %v827 = vpop.permute.xlu0 %826
    %v829 = vmul.f32 %v811, %v827
    %v830 = vpack.c.bf16 %v829, %v829
    %832 = vrot.lane.b32.xlu0 %v830, 32
    %v833 = vpop.permute.xlu0 %832
    %v835 = vsel %vm159, %v833, 0
    %837 = vmatprep.subr.bf16.mxu0 0
    %838 = vmatpush1.bf16.msra.mxu0 0
    %839 = vmatprep.subr.bf16.mxu0 0
    %840 = vmatpush1.bf16.msra.mxu0 0
    %841 = vmatprep.subr.bf16.mxu0 0
    %842 = vmatpush1.bf16.msra.mxu0 0
    %843 = vmatprep.subr.bf16.mxu0 0
    %844 = vmatpush1.bf16.msra.mxu0 0
    %845 = vmatprep.subr.bf16.mxu0 0
    %846 = vmatpush1.bf16.msra.mxu0 0
    %847 = vmatprep.subr.bf16.mxu0 0
    %848 = vmatpush1.bf16.msra.mxu0 0
    %849 = vmatprep.subr.bf16.mxu0 0
    %850 = vmatpush1.bf16.msra.mxu0 %v243
    %851 = vmatprep.subr.bf16.mxu0 0
    %852 = vmatpush1.bf16.msra.mxu0 %v242
    %853 = vmatprep.subr.bf16.mxu0 0
    %854 = vmatpush2.bf16.msra.mxu0 0
    %855 = vmatprep.subr.bf16.mxu0 0
    %856 = vmatpush2.bf16.msra.mxu0 0
    %857 = vmatprep.subr.bf16.mxu0 0
    %858 = vmatpush2.bf16.msra.mxu0 0
    %859 = vmatprep.subr.bf16.mxu0 0
    %860 = vmatpush2.bf16.msra.mxu0 0
    %861 = vmatprep.subr.bf16.mxu0 0
    %862 = vmatpush2.bf16.msra.mxu0 0
    %863 = vmatprep.subr.bf16.mxu0 0
    %864 = vmatpush2.bf16.msra.mxu0 0
    %865 = vmatprep.subr.bf16.mxu0 0
    %866 = vmatpush2.bf16.msra.mxu0 0
    %867 = vmatprep.subr.bf16.mxu0 0
    %868 = vmatpush2.bf16.msra.mxu0 0
    %869 = vmatprep.mubr.bf16.mxu0 0
    %870 = vmatmul.mubr.bf16.gmra.mxu0 %v835
    %v871 = vpop.f32.mrf.mxu0
    %v872 = vadd.f32 %v122, %v871
    %v873 = vpop.f32.mrf.mxu0
    %v874 = vpop.f32.mrf.mxu0
    %v875 = vpop.f32.mrf.mxu0
    %876 = vdwg.mxu0
    %v877 = vmul.f32 %v872, 0.5
    %v878 = vtanh.pop %v877
    %v879 = vmul.f32 %v878, 0.5
    %v880 = vadd.f32 %v879, 0.5
    %s881 = scalar_lea.vmem %s1, 16
    %v882 = vld [vmem:[%s881] sm:$0xff]
    %v883 = vsub.f32 %v882, %v880
    %v884 = vmul.f32 %v593, %v593
    %885 = vadd.xlane.f32.xlu0 %v884
    %v886 = vpop.xlane.xlu0 %885
    %v887 = vrsqrt.pop %v886
    %v888 = vmul.f32 %v886, %v887
    %vm889 = vcmp.eq.f32.partialorder %v886, inf
    %v890 = vsel %vm889, %v886, %v888
    %vm891 = vcmp.eq.f32.partialorder %v886, 0.0
    %v892 = vand.u32 %v886, 2147483648
    %v893 = vsel %vm891, %v892, %v890
    %894 = vmatprep.subr.mxu0 0.0
    %895 = vmatpush1.msra.mxu0 %v139
    %896 = vmatprep.subr.mxu0 0.0
    %897 = vmatpush1.msra.mxu0 %v138
    %898 = vmatprep.subr.mxu0 0.0
    %899 = vmatpush1.msra.mxu0 %v137
    %900 = vmatprep.subr.mxu0 0.0
    %901 = vmatpush1.msra.mxu0 %v136
    %902 = vmatprep.subr.mxu0 0.0
    %903 = vmatpush1.msra.mxu0 %v135
    %904 = vmatprep.subr.mxu0 0.0
    %905 = vmatpush1.msra.mxu0 %v134
    %906 = vmatprep.subr.mxu0 0.0
    %907 = vmatpush1.msra.mxu0 %v133
    %908 = vmatprep.subr.mxu0 0.0
    %909 = vmatpush1.msra.mxu0 %v132
    %910 = vmatprep.subr.mxu0 0.0
    %911 = vmatpush1.msra.mxu0 %v131
    %912 = vmatprep.subr.mxu0 0.0
    %913 = vmatpush1.msra.mxu0 %v130
    %914 = vmatprep.subr.mxu0 0.0
    %915 = vmatpush1.msra.mxu0 %v129
    %916 = vmatprep.subr.mxu0 0.0
    %917 = vmatpush1.msra.mxu0 %v128
    %918 = vmatprep.subr.mxu0 0.0
    %919 = vmatpush1.msra.mxu0 %v127
    %920 = vmatprep.subr.mxu0 0.0
    %921 = vmatpush1.msra.mxu0 %v126
    %922 = vmatprep.subr.mxu0 0.0
    %923 = vmatpush1.msra.mxu0 %v125
    %924 = vmatprep.subr.mxu0 0.0
    %925 = vmatpush1.msra.mxu0 %v124
    %926 = vmatprep.subr.mxu0 0.0
    %927 = vmatpush2.msra.mxu0 0.0
    %928 = vmatprep.subr.mxu0 0.0
    %929 = vmatpush2.msra.mxu0 0.0
    %930 = vmatprep.subr.mxu0 0.0
    %931 = vmatpush2.msra.mxu0 0.0
    %932 = vmatprep.subr.mxu0 0.0
    %933 = vmatpush2.msra.mxu0 0.0
    %934 = vmatprep.subr.mxu0 0.0
    %935 = vmatpush2.msra.mxu0 0.0
    %936 = vmatprep.subr.mxu0 0.0
    %937 = vmatpush2.msra.mxu0 0.0
    %938 = vmatprep.subr.mxu0 0.0
    %939 = vmatpush2.msra.mxu0 0.0
    %940 = vmatprep.subr.mxu0 0.0
    %941 = vmatpush2.msra.mxu0 0.0
    %942 = vmatprep.subr.mxu0 0.0
    %943 = vmatpush2.msra.mxu0 0.0
    %944 = vmatprep.subr.mxu0 0.0
    %945 = vmatpush2.msra.mxu0 0.0
    %946 = vmatprep.subr.mxu0 0.0
    %947 = vmatpush2.msra.mxu0 0.0
    %948 = vmatprep.subr.mxu0 0.0
    %949 = vmatpush2.msra.mxu0 0.0
    %950 = vmatprep.subr.mxu0 0.0
    %951 = vmatpush2.msra.mxu0 0.0
    %952 = vmatprep.subr.mxu0 0.0
    %953 = vmatpush2.msra.mxu0 0.0
    %954 = vmatprep.subr.mxu0 0.0
    %955 = vmatpush2.msra.mxu0 0.0
    %956 = vmatprep.subr.mxu0 0.0
    %957 = vmatpush2.msra.mxu0 0.0
    %958 = vmatprep.mubr.f32.mxu0 0.0
    %959 = vmatmul.mubr.f32.gmra.mxu0 %v593
    %v960 = vpop.f32.mrf.mxu0
    %v961 = vadd.f32 0.0, %v960
    %v962 = vpop.f32.mrf.mxu0
    %963 = vdwg.mxu0
    %v964 = vmul.f32 %v893, %v379
    %v965 = vmax.f32 %v964, 1e-08
    %v966 = vrcp.pop %v965
    %v967 = vmul.f32 %v961, %v966
    %v968 = vsel %vm385, %v967, -inf
    %969 = vmax.xlane.f32.xlu0 %v968
    %v970 = vpop.xlane.xlu0 %969
    %v971 = vsub.f32 %v967, %v970
    %v972 = vmul.f32 %v971, 1.442695
    %v973 = vpow.pop %v972
    %v974 = vsel %vm385, %v973, 0.0
    %975 = vadd.xlane.f32.xlu0 %v974
    %v976 = vpop.xlane.xlu0 %975
    %v977 = vrcp.pop %v976
    %v978 = vmul.f32 %v973, %v977
    %v980 = vsel %vm385, %v978, 0
    %982 = vmatprep.subr.mxu0 0.0
    %983 = vmatpush1.msra.mxu0 0.0
    %984 = vmatprep.subr.mxu0 0.0
    %985 = vmatpush1.msra.mxu0 0.0
    %986 = vmatprep.subr.mxu0 0.0
    %987 = vmatpush1.msra.mxu0 0.0
    %988 = vmatprep.subr.mxu0 0.0
    %989 = vmatpush1.msra.mxu0 0.0
    %990 = vmatprep.subr.mxu0 0.0
    %991 = vmatpush1.msra.mxu0 0.0
    %992 = vmatprep.subr.mxu0 0.0
    %993 = vmatpush1.msra.mxu0 0.0
    %994 = vmatprep.subr.mxu0 0.0
    %995 = vmatpush1.msra.mxu0 0.0
    %996 = vmatprep.subr.mxu0 0.0
    %997 = vmatpush1.msra.mxu0 0.0
    %998 = vmatprep.subr.mxu0 0.0
    %999 = vmatpush1.msra.mxu0 0.0
    %1000 = vmatprep.subr.mxu0 0.0
    %1001 = vmatpush1.msra.mxu0 0.0
    %1002 = vmatprep.subr.mxu0 0.0
    %1003 = vmatpush1.msra.mxu0 0.0
    %1004 = vmatprep.subr.mxu0 0.0
    %1005 = vmatpush1.msra.mxu0 0.0
    %1006 = vmatprep.subr.mxu0 0.0
    %1007 = vmatpush1.msra.mxu0 0.0
    %1008 = vmatprep.subr.mxu0 0.0
    %1009 = vmatpush1.msra.mxu0 0.0
    %1010 = vmatprep.subr.mxu0 0.0
    %1011 = vmatpush1.msra.mxu0 0.0
    %1012 = vmatprep.subr.mxu0 0.0
    %1013 = vmatpush1.msra.mxu0 %v140
    %1014 = vmatprep.subr.mxu0 0.0
    %1015 = vmatpush2.msra.mxu0 0.0
    %1016 = vmatprep.subr.mxu0 0.0
    %1017 = vmatpush2.msra.mxu0 0.0
    %1018 = vmatprep.subr.mxu0 0.0
    %1019 = vmatpush2.msra.mxu0 0.0
    %1020 = vmatprep.subr.mxu0 0.0
    %1021 = vmatpush2.msra.mxu0 0.0
    %1022 = vmatprep.subr.mxu0 0.0
    %1023 = vmatpush2.msra.mxu0 0.0
    %1024 = vmatprep.subr.mxu0 0.0
    %1025 = vmatpush2.msra.mxu0 0.0
    %1026 = vmatprep.subr.mxu0 0.0
    %1027 = vmatpush2.msra.mxu0 0.0
    %1028 = vmatprep.subr.mxu0 0.0
    %1029 = vmatpush2.msra.mxu0 0.0
    %1030 = vmatprep.subr.mxu0 0.0
    %1031 = vmatpush2.msra.mxu0 0.0
    %1032 = vmatprep.subr.mxu0 0.0
    %1033 = vmatpush2.msra.mxu0 0.0
    %1034 = vmatprep.subr.mxu0 0.0
    %1035 = vmatpush2.msra.mxu0 0.0
    %1036 = vmatprep.subr.mxu0 0.0
    %1037 = vmatpush2.msra.mxu0 0.0
    %1038 = vmatprep.subr.mxu0 0.0
    %1039 = vmatpush2.msra.mxu0 0.0
    %1040 = vmatprep.subr.mxu0 0.0
    %1041 = vmatpush2.msra.mxu0 0.0
    %1042 = vmatprep.subr.mxu0 0.0
    %1043 = vmatpush2.msra.mxu0 0.0
    %1044 = vmatprep.subr.mxu0 0.0
    %1045 = vmatpush2.msra.mxu0 0.0
    %1046 = vmatprep.mubr.f32.mxu0 0.0
    %1047 = vmatmul.mubr.f32.gmra.mxu0 %v980
    %v1048 = vpop.f32.mrf.mxu0
    %v1049 = vadd.f32 0.0, %v1048
    %v1050 = vpop.f32.mrf.mxu0
    %1051 = vdwg.mxu0
    %v1052 = vadd.f32 %v880, %v1049
    %s1053 = scalar_lea.vmem [#allocation14], 16
    %1054 = vst [vmem:[%s1053] sm:$0xff] %v1052
    %s1055 = scalar_lea.vmem %s0, 24
    %v1056 = vld [vmem:[%s1055] sm:$0xff]
    %1057 = vmatprep.subr.bf16.mxu0 0
    %1058 = vmatpush1.bf16.msra.mxu0 0
    %1059 = vmatprep.subr.bf16.mxu0 0
    %1060 = vmatpush1.bf16.msra.mxu0 0
    %1061 = vmatprep.subr.bf16.mxu0 0
    %1062 = vmatpush1.bf16.msra.mxu0 0
    %1063 = vmatprep.subr.bf16.mxu0 0
    %1064 = vmatpush1.bf16.msra.mxu0 0
    %1065 = vmatprep.subr.bf16.mxu0 0
    %1066 = vmatpush1.bf16.msra.mxu0 0
    %1067 = vmatprep.subr.bf16.mxu0 0
    %1068 = vmatpush1.bf16.msra.mxu0 0
    %1069 = vmatprep.subr.bf16.mxu0 0
    %1070 = vmatpush1.bf16.msra.mxu0 %v156
    %1071 = vmatprep.subr.bf16.mxu0 0
    %1072 = vmatpush1.bf16.msra.mxu0 %v155
    %1073 = vmatprep.subr.bf16.mxu0 0
    %1074 = vmatpush2.bf16.msra.mxu0 0
    %1075 = vmatprep.subr.bf16.mxu0 0
    %1076 = vmatpush2.bf16.msra.mxu0 0
    %1077 = vmatprep.subr.bf16.mxu0 0
    %1078 = vmatpush2.bf16.msra.mxu0 0
    %1079 = vmatprep.subr.bf16.mxu0 0
    %1080 = vmatpush2.bf16.msra.mxu0 0
    %1081 = vmatprep.subr.bf16.mxu0 0
    %1082 = vmatpush2.bf16.msra.mxu0 0
    %1083 = vmatprep.subr.bf16.mxu0 0
    %1084 = vmatpush2.bf16.msra.mxu0 0
    %1085 = vmatprep.subr.bf16.mxu0 0
    %1086 = vmatpush2.bf16.msra.mxu0 0
    %1087 = vmatprep.subr.bf16.mxu0 0
    %1088 = vmatpush2.bf16.msra.mxu0 0
    %1089 = vmatprep.mubr.bf16.mxu0 0
    %1090 = vmatmul.mubr.bf16.gmra.mxu0 %v835
    %v1091 = vpop.f32.mrf.mxu0
    %v1092 = vadd.f32 0.0, %v1091
    %v1093 = vpop.f32.mrf.mxu0
    %v1094 = vpop.f32.mrf.mxu0
    %v1095 = vpop.f32.mrf.mxu0
    %1096 = vdwg.mxu0
    %v1097 = vadd.f32 %v1056, %v1092
    %v1098 = vmul.f32 %v1097, 0.5
    %v1099 = vtanh.pop %v1098
    %v1100 = vmul.f32 %v1099, 0.5
    %v1101 = vadd.f32 %v1100, 0.5
    %v1102 = vtanh.pop %v1097
    %v1103 = vmul.f32 %v1101, %v823
    %1105 = vrot.lane.b32.xlu0 %v1102, 64
    %v1106 = vpop.permute.xlu0 %1105
    %v1108 = vmul.f32 %v1101, %v1106
    %1110 = vrot.lane.b32.xlu0 %v1108, 32
    %v1111 = vpop.permute.xlu0 %1110
    %v1113 = vadd.f32 %v1103, %v1111
    %v1114 = vtanh.pop %v1113
    %1116 = vrot.lane.b32.xlu0 %v1114, 64
    %v1117 = vpop.permute.xlu0 %1116
    %v1119 = vmul.f32 %v1101, %v1117
    %v1120 = vpack.c.bf16 %v1119, %v1119
    %1122 = vrot.lane.b32.xlu0 %v1120, 32
    %v1123 = vpop.permute.xlu0 %1122
    %v1125 = vsel %vm159, %v1123, 0
    %1127 = vmatprep.subr.bf16.mxu0 0
    %1128 = vmatpush1.bf16.msra.mxu0 0
    %1129 = vmatprep.subr.bf16.mxu0 0
    %1130 = vmatpush1.bf16.msra.mxu0 0
    %1131 = vmatprep.subr.bf16.mxu0 0
    %1132 = vmatpush1.bf16.msra.mxu0 0
    %1133 = vmatprep.subr.bf16.mxu0 0
    %1134 = vmatpush1.bf16.msra.mxu0 0
    %1135 = vmatprep.subr.bf16.mxu0 0
    %1136 = vmatpush1.bf16.msra.mxu0 0
    %1137 = vmatprep.subr.bf16.mxu0 0
    %1138 = vmatpush1.bf16.msra.mxu0 0
    %1139 = vmatprep.subr.bf16.mxu0 0
    %1140 = vmatpush1.bf16.msra.mxu0 %v243
    %1141 = vmatprep.subr.bf16.mxu0 0
    %1142 = vmatpush1.bf16.msra.mxu0 %v242
    %1143 = vmatprep.subr.bf16.mxu0 0
    %1144 = vmatpush2.bf16.msra.mxu0 0
    %1145 = vmatprep.subr.bf16.mxu0 0
    %1146 = vmatpush2.bf16.msra.mxu0 0
    %1147 = vmatprep.subr.bf16.mxu0 0
    %1148 = vmatpush2.bf16.msra.mxu0 0
    %1149 = vmatprep.subr.bf16.mxu0 0
    %1150 = vmatpush2.bf16.msra.mxu0 0
    %1151 = vmatprep.subr.bf16.mxu0 0
    %1152 = vmatpush2.bf16.msra.mxu0 0
    %1153 = vmatprep.subr.bf16.mxu0 0
    %1154 = vmatpush2.bf16.msra.mxu0 0
    %1155 = vmatprep.subr.bf16.mxu0 0
    %1156 = vmatpush2.bf16.msra.mxu0 0
    %1157 = vmatprep.subr.bf16.mxu0 0
    %1158 = vmatpush2.bf16.msra.mxu0 0
    %1159 = vmatprep.mubr.bf16.mxu0 0
    %1160 = vmatmul.mubr.bf16.gmra.mxu0 %v1125
    %v1161 = vpop.f32.mrf.mxu0
    %v1162 = vadd.f32 %v122, %v1161
    %v1163 = vpop.f32.mrf.mxu0
    %v1164 = vpop.f32.mrf.mxu0
    %v1165 = vpop.f32.mrf.mxu0
    %1166 = vdwg.mxu0
    %v1167 = vmul.f32 %v1162, 0.5
    %v1168 = vtanh.pop %v1167
    %v1169 = vmul.f32 %v1168, 0.5
    %v1170 = vadd.f32 %v1169, 0.5
    %s1171 = scalar_lea.vmem %s1, 24
    %v1172 = vld [vmem:[%s1171] sm:$0xff]
    %v1173 = vsub.f32 %v1172, %v1170
    %v1174 = vmul.f32 %v883, %v883
    %1175 = vadd.xlane.f32.xlu0 %v1174
    %v1176 = vpop.xlane.xlu0 %1175
    %v1177 = vrsqrt.pop %v1176
    %v1178 = vmul.f32 %v1176, %v1177
    %vm1179 = vcmp.eq.f32.partialorder %v1176, inf
    %v1180 = vsel %vm1179, %v1176, %v1178
    %vm1181 = vcmp.eq.f32.partialorder %v1176, 0.0
    %v1182 = vand.u32 %v1176, 2147483648
    %v1183 = vsel %vm1181, %v1182, %v1180
    %1184 = vmatprep.subr.mxu0 0.0
    %1185 = vmatpush1.msra.mxu0 %v139
    %1186 = vmatprep.subr.mxu0 0.0
    %1187 = vmatpush1.msra.mxu0 %v138
    %1188 = vmatprep.subr.mxu0 0.0
    %1189 = vmatpush1.msra.mxu0 %v137
    %1190 = vmatprep.subr.mxu0 0.0
    %1191 = vmatpush1.msra.mxu0 %v136
    %1192 = vmatprep.subr.mxu0 0.0
    %1193 = vmatpush1.msra.mxu0 %v135
    %1194 = vmatprep.subr.mxu0 0.0
    %1195 = vmatpush1.msra.mxu0 %v134
    %1196 = vmatprep.subr.mxu0 0.0
    %1197 = vmatpush1.msra.mxu0 %v133
    %1198 = vmatprep.subr.mxu0 0.0
    %1199 = vmatpush1.msra.mxu0 %v132
    %1200 = vmatprep.subr.mxu0 0.0
    %1201 = vmatpush1.msra.mxu0 %v131
    %1202 = vmatprep.subr.mxu0 0.0
    %1203 = vmatpush1.msra.mxu0 %v130
    %1204 = vmatprep.subr.mxu0 0.0
    %1205 = vmatpush1.msra.mxu0 %v129
    %1206 = vmatprep.subr.mxu0 0.0
    %1207 = vmatpush1.msra.mxu0 %v128
    %1208 = vmatprep.subr.mxu0 0.0
    %1209 = vmatpush1.msra.mxu0 %v127
    %1210 = vmatprep.subr.mxu0 0.0
    %1211 = vmatpush1.msra.mxu0 %v126
    %1212 = vmatprep.subr.mxu0 0.0
    %1213 = vmatpush1.msra.mxu0 %v125
    %1214 = vmatprep.subr.mxu0 0.0
    %1215 = vmatpush1.msra.mxu0 %v124
    %1216 = vmatprep.subr.mxu0 0.0
    %1217 = vmatpush2.msra.mxu0 0.0
    %1218 = vmatprep.subr.mxu0 0.0
    %1219 = vmatpush2.msra.mxu0 0.0
    %1220 = vmatprep.subr.mxu0 0.0
    %1221 = vmatpush2.msra.mxu0 0.0
    %1222 = vmatprep.subr.mxu0 0.0
    %1223 = vmatpush2.msra.mxu0 0.0
    %1224 = vmatprep.subr.mxu0 0.0
    %1225 = vmatpush2.msra.mxu0 0.0
    %1226 = vmatprep.subr.mxu0 0.0
    %1227 = vmatpush2.msra.mxu0 0.0
    %1228 = vmatprep.subr.mxu0 0.0
    %1229 = vmatpush2.msra.mxu0 0.0
    %1230 = vmatprep.subr.mxu0 0.0
    %1231 = vmatpush2.msra.mxu0 0.0
    %1232 = vmatprep.subr.mxu0 0.0
    %1233 = vmatpush2.msra.mxu0 0.0
    %1234 = vmatprep.subr.mxu0 0.0
    %1235 = vmatpush2.msra.mxu0 0.0
    %1236 = vmatprep.subr.mxu0 0.0
    %1237 = vmatpush2.msra.mxu0 0.0
    %1238 = vmatprep.subr.mxu0 0.0
    %1239 = vmatpush2.msra.mxu0 0.0
    %1240 = vmatprep.subr.mxu0 0.0
    %1241 = vmatpush2.msra.mxu0 0.0
    %1242 = vmatprep.subr.mxu0 0.0
    %1243 = vmatpush2.msra.mxu0 0.0
    %1244 = vmatprep.subr.mxu0 0.0
    %1245 = vmatpush2.msra.mxu0 0.0
    %1246 = vmatprep.subr.mxu0 0.0
    %1247 = vmatpush2.msra.mxu0 0.0
    %1248 = vmatprep.mubr.f32.mxu0 0.0
    %1249 = vmatmul.mubr.f32.gmra.mxu0 %v883
    %v1250 = vpop.f32.mrf.mxu0
    %v1251 = vadd.f32 0.0, %v1250
    %v1252 = vpop.f32.mrf.mxu0
    %1253 = vdwg.mxu0
    %v1254 = vmul.f32 %v1183, %v379
    %v1255 = vmax.f32 %v1254, 1e-08
    %v1256 = vrcp.pop %v1255
    %v1257 = vmul.f32 %v1251, %v1256
    %v1258 = vsel %vm385, %v1257, -inf
    %1259 = vmax.xlane.f32.xlu0 %v1258
    %v1260 = vpop.xlane.xlu0 %1259
    %v1261 = vsub.f32 %v1257, %v1260
    %v1262 = vmul.f32 %v1261, 1.442695
    %v1263 = vpow.pop %v1262
    %v1264 = vsel %vm385, %v1263, 0.0
    %1265 = vadd.xlane.f32.xlu0 %v1264
    %v1266 = vpop.xlane.xlu0 %1265
    %v1267 = vrcp.pop %v1266
    %v1268 = vmul.f32 %v1263, %v1267
    %v1270 = vsel %vm385, %v1268, 0
    %1272 = vmatprep.subr.mxu0 0.0
    %1273 = vmatpush1.msra.mxu0 0.0
    %1274 = vmatprep.subr.mxu0 0.0
    %1275 = vmatpush1.msra.mxu0 0.0
    %1276 = vmatprep.subr.mxu0 0.0
    %1277 = vmatpush1.msra.mxu0 0.0
    %1278 = vmatprep.subr.mxu0 0.0
    %1279 = vmatpush1.msra.mxu0 0.0
    %1280 = vmatprep.subr.mxu0 0.0
    %1281 = vmatpush1.msra.mxu0 0.0
    %1282 = vmatprep.subr.mxu0 0.0
    %1283 = vmatpush1.msra.mxu0 0.0
    %1284 = vmatprep.subr.mxu0 0.0
    %1285 = vmatpush1.msra.mxu0 0.0
    %1286 = vmatprep.subr.mxu0 0.0
    %1287 = vmatpush1.msra.mxu0 0.0
    %1288 = vmatprep.subr.mxu0 0.0
    %1289 = vmatpush1.msra.mxu0 0.0
    %1290 = vmatprep.subr.mxu0 0.0
    %1291 = vmatpush1.msra.mxu0 0.0
    %1292 = vmatprep.subr.mxu0 0.0
    %1293 = vmatpush1.msra.mxu0 0.0
    %1294 = vmatprep.subr.mxu0 0.0
    %1295 = vmatpush1.msra.mxu0 0.0
    %1296 = vmatprep.subr.mxu0 0.0
    %1297 = vmatpush1.msra.mxu0 0.0
    %1298 = vmatprep.subr.mxu0 0.0
    %1299 = vmatpush1.msra.mxu0 0.0
    %1300 = vmatprep.subr.mxu0 0.0
    %1301 = vmatpush1.msra.mxu0 0.0
    %1302 = vmatprep.subr.mxu0 0.0
    %1303 = vmatpush1.msra.mxu0 %v140
    %1304 = vmatprep.subr.mxu0 0.0
    %1305 = vmatpush2.msra.mxu0 0.0
    %1306 = vmatprep.subr.mxu0 0.0
    %1307 = vmatpush2.msra.mxu0 0.0
    %1308 = vmatprep.subr.mxu0 0.0
    %1309 = vmatpush2.msra.mxu0 0.0
    %1310 = vmatprep.subr.mxu0 0.0
    %1311 = vmatpush2.msra.mxu0 0.0
    %1312 = vmatprep.subr.mxu0 0.0
    %1313 = vmatpush2.msra.mxu0 0.0
    %1314 = vmatprep.subr.mxu0 0.0
    %1315 = vmatpush2.msra.mxu0 0.0
    %1316 = vmatprep.subr.mxu0 0.0
    %1317 = vmatpush2.msra.mxu0 0.0
    %1318 = vmatprep.subr.mxu0 0.0
    %1319 = vmatpush2.msra.mxu0 0.0
    %1320 = vmatprep.subr.mxu0 0.0
    %1321 = vmatpush2.msra.mxu0 0.0
    %1322 = vmatprep.subr.mxu0 0.0
    %1323 = vmatpush2.msra.mxu0 0.0
    %1324 = vmatprep.subr.mxu0 0.0
    %1325 = vmatpush2.msra.mxu0 0.0
    %1326 = vmatprep.subr.mxu0 0.0
    %1327 = vmatpush2.msra.mxu0 0.0
    %1328 = vmatprep.subr.mxu0 0.0
    %1329 = vmatpush2.msra.mxu0 0.0
    %1330 = vmatprep.subr.mxu0 0.0
    %1331 = vmatpush2.msra.mxu0 0.0
    %1332 = vmatprep.subr.mxu0 0.0
    %1333 = vmatpush2.msra.mxu0 0.0
    %1334 = vmatprep.subr.mxu0 0.0
    %1335 = vmatpush2.msra.mxu0 0.0
    %1336 = vmatprep.mubr.f32.mxu0 0.0
    %1337 = vmatmul.mubr.f32.gmra.mxu0 %v1270
    %v1338 = vpop.f32.mrf.mxu0
    %v1339 = vadd.f32 0.0, %v1338
    %v1340 = vpop.f32.mrf.mxu0
    %1341 = vdwg.mxu0
    %v1342 = vadd.f32 %v1170, %v1339
    %s1343 = scalar_lea.vmem [#allocation14], 24
    %1344 = vst [vmem:[%s1343] sm:$0xff] %v1342
    %s1345 = scalar_lea.vmem %s0, 32
    %v1346 = vld [vmem:[%s1345] sm:$0xff]
    %1347 = vmatprep.subr.bf16.mxu0 0
    %1348 = vmatpush1.bf16.msra.mxu0 0
    %1349 = vmatprep.subr.bf16.mxu0 0
    %1350 = vmatpush1.bf16.msra.mxu0 0
    %1351 = vmatprep.subr.bf16.mxu0 0
    %1352 = vmatpush1.bf16.msra.mxu0 0
    %1353 = vmatprep.subr.bf16.mxu0 0
    %1354 = vmatpush1.bf16.msra.mxu0 0
    %1355 = vmatprep.subr.bf16.mxu0 0
    %1356 = vmatpush1.bf16.msra.mxu0 0
    %1357 = vmatprep.subr.bf16.mxu0 0
    %1358 = vmatpush1.bf16.msra.mxu0 0
    %1359 = vmatprep.subr.bf16.mxu0 0
    %1360 = vmatpush1.bf16.msra.mxu0 %v156
    %1361 = vmatprep.subr.bf16.mxu0 0
    %1362 = vmatpush1.bf16.msra.mxu0 %v155
    %1363 = vmatprep.subr.bf16.mxu0 0
    %1364 = vmatpush2.bf16.msra.mxu0 0
    %1365 = vmatprep.subr.bf16.mxu0 0
    %1366 = vmatpush2.bf16.msra.mxu0 0
    %1367 = vmatprep.subr.bf16.mxu0 0
    %1368 = vmatpush2.bf16.msra.mxu0 0
    %1369 = vmatprep.subr.bf16.mxu0 0
    %1370 = vmatpush2.bf16.msra.mxu0 0
    %1371 = vmatprep.subr.bf16.mxu0 0
    %1372 = vmatpush2.bf16.msra.mxu0 0
    %1373 = vmatprep.subr.bf16.mxu0 0
    %1374 = vmatpush2.bf16.msra.mxu0 0
    %1375 = vmatprep.subr.bf16.mxu0 0
    %1376 = vmatpush2.bf16.msra.mxu0 0
    %1377 = vmatprep.subr.bf16.mxu0 0
    %1378 = vmatpush2.bf16.msra.mxu0 0
    %1379 = vmatprep.mubr.bf16.mxu0 0
    %1380 = vmatmul.mubr.bf16.gmra.mxu0 %v1125
    %v1381 = vpop.f32.mrf.mxu0
    %v1382 = vadd.f32 0.0, %v1381
    %v1383 = vpop.f32.mrf.mxu0
    %v1384 = vpop.f32.mrf.mxu0
    %v1385 = vpop.f32.mrf.mxu0
    %1386 = vdwg.mxu0
    %v1387 = vadd.f32 %v1346, %v1382
    %v1388 = vmul.f32 %v1387, 0.5
    %v1389 = vtanh.pop %v1388
    %v1390 = vmul.f32 %v1389, 0.5
    %v1391 = vadd.f32 %v1390, 0.5
    %v1392 = vtanh.pop %v1387
    %v1393 = vmul.f32 %v1391, %v1113
    %1395 = vrot.lane.b32.xlu0 %v1392, 64
    %v1396 = vpop.permute.xlu0 %1395
    %v1398 = vmul.f32 %v1391, %v1396
    %1400 = vrot.lane.b32.xlu0 %v1398, 32
    %v1401 = vpop.permute.xlu0 %1400
    %v1403 = vadd.f32 %v1393, %v1401
    %v1404 = vtanh.pop %v1403
    %1406 = vrot.lane.b32.xlu0 %v1404, 64
    %v1407 = vpop.permute.xlu0 %1406
    %v1409 = vmul.f32 %v1391, %v1407
    %v1410 = vpack.c.bf16 %v1409, %v1409
    %1412 = vrot.lane.b32.xlu0 %v1410, 32
    %v1413 = vpop.permute.xlu0 %1412
    %v1415 = vsel %vm159, %v1413, 0
    %1417 = vmatprep.subr.bf16.mxu0 0
    %1418 = vmatpush1.bf16.msra.mxu0 0
    %1419 = vmatprep.subr.bf16.mxu0 0
    %1420 = vmatpush1.bf16.msra.mxu0 0
    %1421 = vmatprep.subr.bf16.mxu0 0
    %1422 = vmatpush1.bf16.msra.mxu0 0
    %1423 = vmatprep.subr.bf16.mxu0 0
    %1424 = vmatpush1.bf16.msra.mxu0 0
    %1425 = vmatprep.subr.bf16.mxu0 0
    %1426 = vmatpush1.bf16.msra.mxu0 0
    %1427 = vmatprep.subr.bf16.mxu0 0
    %1428 = vmatpush1.bf16.msra.mxu0 0
    %1429 = vmatprep.subr.bf16.mxu0 0
    %1430 = vmatpush1.bf16.msra.mxu0 %v243
    %1431 = vmatprep.subr.bf16.mxu0 0
    %1432 = vmatpush1.bf16.msra.mxu0 %v242
    %1433 = vmatprep.subr.bf16.mxu0 0
    %1434 = vmatpush2.bf16.msra.mxu0 0
    %1435 = vmatprep.subr.bf16.mxu0 0
    %1436 = vmatpush2.bf16.msra.mxu0 0
    %1437 = vmatprep.subr.bf16.mxu0 0
    %1438 = vmatpush2.bf16.msra.mxu0 0
    %1439 = vmatprep.subr.bf16.mxu0 0
    %1440 = vmatpush2.bf16.msra.mxu0 0
    %1441 = vmatprep.subr.bf16.mxu0 0
    %1442 = vmatpush2.bf16.msra.mxu0 0
    %1443 = vmatprep.subr.bf16.mxu0 0
    %1444 = vmatpush2.bf16.msra.mxu0 0
    %1445 = vmatprep.subr.bf16.mxu0 0
    %1446 = vmatpush2.bf16.msra.mxu0 0
    %1447 = vmatprep.subr.bf16.mxu0 0
    %1448 = vmatpush2.bf16.msra.mxu0 0
    %1449 = vmatprep.mubr.bf16.mxu0 0
    %1450 = vmatmul.mubr.bf16.gmra.mxu0 %v1415
    %v1451 = vpop.f32.mrf.mxu0
    %v1452 = vadd.f32 %v122, %v1451
    %v1453 = vpop.f32.mrf.mxu0
    %v1454 = vpop.f32.mrf.mxu0
    %v1455 = vpop.f32.mrf.mxu0
    %1456 = vdwg.mxu0
    %v1457 = vmul.f32 %v1452, 0.5
    %v1458 = vtanh.pop %v1457
    %v1459 = vmul.f32 %v1458, 0.5
    %v1460 = vadd.f32 %v1459, 0.5
    %s1461 = scalar_lea.vmem %s1, 32
    %v1462 = vld [vmem:[%s1461] sm:$0xff]
    %v1463 = vsub.f32 %v1462, %v1460
    %v1464 = vmul.f32 %v1173, %v1173
    %1465 = vadd.xlane.f32.xlu0 %v1464
    %v1466 = vpop.xlane.xlu0 %1465
    %v1467 = vrsqrt.pop %v1466
    %v1468 = vmul.f32 %v1466, %v1467
    %vm1469 = vcmp.eq.f32.partialorder %v1466, inf
    %v1470 = vsel %vm1469, %v1466, %v1468
    %vm1471 = vcmp.eq.f32.partialorder %v1466, 0.0
    %v1472 = vand.u32 %v1466, 2147483648
    %v1473 = vsel %vm1471, %v1472, %v1470
    %1474 = vmatprep.subr.mxu0 0.0
    %1475 = vmatpush1.msra.mxu0 %v139
    %1476 = vmatprep.subr.mxu0 0.0
    %1477 = vmatpush1.msra.mxu0 %v138
    %1478 = vmatprep.subr.mxu0 0.0
    %1479 = vmatpush1.msra.mxu0 %v137
    %1480 = vmatprep.subr.mxu0 0.0
    %1481 = vmatpush1.msra.mxu0 %v136
    %1482 = vmatprep.subr.mxu0 0.0
    %1483 = vmatpush1.msra.mxu0 %v135
    %1484 = vmatprep.subr.mxu0 0.0
    %1485 = vmatpush1.msra.mxu0 %v134
    %1486 = vmatprep.subr.mxu0 0.0
    %1487 = vmatpush1.msra.mxu0 %v133
    %1488 = vmatprep.subr.mxu0 0.0
    %1489 = vmatpush1.msra.mxu0 %v132
    %1490 = vmatprep.subr.mxu0 0.0
    %1491 = vmatpush1.msra.mxu0 %v131
    %1492 = vmatprep.subr.mxu0 0.0
    %1493 = vmatpush1.msra.mxu0 %v130
    %1494 = vmatprep.subr.mxu0 0.0
    %1495 = vmatpush1.msra.mxu0 %v129
    %1496 = vmatprep.subr.mxu0 0.0
    %1497 = vmatpush1.msra.mxu0 %v128
    %1498 = vmatprep.subr.mxu0 0.0
    %1499 = vmatpush1.msra.mxu0 %v127
    %1500 = vmatprep.subr.mxu0 0.0
    %1501 = vmatpush1.msra.mxu0 %v126
    %1502 = vmatprep.subr.mxu0 0.0
    %1503 = vmatpush1.msra.mxu0 %v125
    %1504 = vmatprep.subr.mxu0 0.0
    %1505 = vmatpush1.msra.mxu0 %v124
    %1506 = vmatprep.subr.mxu0 0.0
    %1507 = vmatpush2.msra.mxu0 0.0
    %1508 = vmatprep.subr.mxu0 0.0
    %1509 = vmatpush2.msra.mxu0 0.0
    %1510 = vmatprep.subr.mxu0 0.0
    %1511 = vmatpush2.msra.mxu0 0.0
    %1512 = vmatprep.subr.mxu0 0.0
    %1513 = vmatpush2.msra.mxu0 0.0
    %1514 = vmatprep.subr.mxu0 0.0
    %1515 = vmatpush2.msra.mxu0 0.0
    %1516 = vmatprep.subr.mxu0 0.0
    %1517 = vmatpush2.msra.mxu0 0.0
    %1518 = vmatprep.subr.mxu0 0.0
    %1519 = vmatpush2.msra.mxu0 0.0
    %1520 = vmatprep.subr.mxu0 0.0
    %1521 = vmatpush2.msra.mxu0 0.0
    %1522 = vmatprep.subr.mxu0 0.0
    %1523 = vmatpush2.msra.mxu0 0.0
    %1524 = vmatprep.subr.mxu0 0.0
    %1525 = vmatpush2.msra.mxu0 0.0
    %1526 = vmatprep.subr.mxu0 0.0
    %1527 = vmatpush2.msra.mxu0 0.0
    %1528 = vmatprep.subr.mxu0 0.0
    %1529 = vmatpush2.msra.mxu0 0.0
    %1530 = vmatprep.subr.mxu0 0.0
    %1531 = vmatpush2.msra.mxu0 0.0
    %1532 = vmatprep.subr.mxu0 0.0
    %1533 = vmatpush2.msra.mxu0 0.0
    %1534 = vmatprep.subr.mxu0 0.0
    %1535 = vmatpush2.msra.mxu0 0.0
    %1536 = vmatprep.subr.mxu0 0.0
    %1537 = vmatpush2.msra.mxu0 0.0
    %1538 = vmatprep.mubr.f32.mxu0 0.0
    %1539 = vmatmul.mubr.f32.gmra.mxu0 %v1173
    %v1540 = vpop.f32.mrf.mxu0
    %v1541 = vadd.f32 0.0, %v1540
    %v1542 = vpop.f32.mrf.mxu0
    %1543 = vdwg.mxu0
    %v1544 = vmul.f32 %v1473, %v379
    %v1545 = vmax.f32 %v1544, 1e-08
    %v1546 = vrcp.pop %v1545
    %v1547 = vmul.f32 %v1541, %v1546
    %v1548 = vsel %vm385, %v1547, -inf
    %1549 = vmax.xlane.f32.xlu0 %v1548
    %v1550 = vpop.xlane.xlu0 %1549
    %v1551 = vsub.f32 %v1547, %v1550
    %v1552 = vmul.f32 %v1551, 1.442695
    %v1553 = vpow.pop %v1552
    %v1554 = vsel %vm385, %v1553, 0.0
    %1555 = vadd.xlane.f32.xlu0 %v1554
    %v1556 = vpop.xlane.xlu0 %1555
    %v1557 = vrcp.pop %v1556
    %v1558 = vmul.f32 %v1553, %v1557
    %v1560 = vsel %vm385, %v1558, 0
    %1562 = vmatprep.subr.mxu0 0.0
    %1563 = vmatpush1.msra.mxu0 0.0
    %1564 = vmatprep.subr.mxu0 0.0
    %1565 = vmatpush1.msra.mxu0 0.0
    %1566 = vmatprep.subr.mxu0 0.0
    %1567 = vmatpush1.msra.mxu0 0.0
    %1568 = vmatprep.subr.mxu0 0.0
    %1569 = vmatpush1.msra.mxu0 0.0
    %1570 = vmatprep.subr.mxu0 0.0
    %1571 = vmatpush1.msra.mxu0 0.0
    %1572 = vmatprep.subr.mxu0 0.0
    %1573 = vmatpush1.msra.mxu0 0.0
    %1574 = vmatprep.subr.mxu0 0.0
    %1575 = vmatpush1.msra.mxu0 0.0
    %1576 = vmatprep.subr.mxu0 0.0
    %1577 = vmatpush1.msra.mxu0 0.0
    %1578 = vmatprep.subr.mxu0 0.0
    %1579 = vmatpush1.msra.mxu0 0.0
    %1580 = vmatprep.subr.mxu0 0.0
    %1581 = vmatpush1.msra.mxu0 0.0
    %1582 = vmatprep.subr.mxu0 0.0
    %1583 = vmatpush1.msra.mxu0 0.0
    %1584 = vmatprep.subr.mxu0 0.0
    %1585 = vmatpush1.msra.mxu0 0.0
    %1586 = vmatprep.subr.mxu0 0.0
    %1587 = vmatpush1.msra.mxu0 0.0
    %1588 = vmatprep.subr.mxu0 0.0
    %1589 = vmatpush1.msra.mxu0 0.0
    %1590 = vmatprep.subr.mxu0 0.0
    %1591 = vmatpush1.msra.mxu0 0.0
    %1592 = vmatprep.subr.mxu0 0.0
    %1593 = vmatpush1.msra.mxu0 %v140
    %1594 = vmatprep.subr.mxu0 0.0
    %1595 = vmatpush2.msra.mxu0 0.0
    %1596 = vmatprep.subr.mxu0 0.0
    %1597 = vmatpush2.msra.mxu0 0.0
    %1598 = vmatprep.subr.mxu0 0.0
    %1599 = vmatpush2.msra.mxu0 0.0
    %1600 = vmatprep.subr.mxu0 0.0
    %1601 = vmatpush2.msra.mxu0 0.0
    %1602 = vmatprep.subr.mxu0 0.0
    %1603 = vmatpush2.msra.mxu0 0.0
    %1604 = vmatprep.subr.mxu0 0.0
    %1605 = vmatpush2.msra.mxu0 0.0
    %1606 = vmatprep.subr.mxu0 0.0
    %1607 = vmatpush2.msra.mxu0 0.0
    %1608 = vmatprep.subr.mxu0 0.0
    %1609 = vmatpush2.msra.mxu0 0.0
    %1610 = vmatprep.subr.mxu0 0.0
    %1611 = vmatpush2.msra.mxu0 0.0
    %1612 = vmatprep.subr.mxu0 0.0
    %1613 = vmatpush2.msra.mxu0 0.0
    %1614 = vmatprep.subr.mxu0 0.0
    %1615 = vmatpush2.msra.mxu0 0.0
    %1616 = vmatprep.subr.mxu0 0.0
    %1617 = vmatpush2.msra.mxu0 0.0
    %1618 = vmatprep.subr.mxu0 0.0
    %1619 = vmatpush2.msra.mxu0 0.0
    %1620 = vmatprep.subr.mxu0 0.0
    %1621 = vmatpush2.msra.mxu0 0.0
    %1622 = vmatprep.subr.mxu0 0.0
    %1623 = vmatpush2.msra.mxu0 0.0
    %1624 = vmatprep.subr.mxu0 0.0
    %1625 = vmatpush2.msra.mxu0 0.0
    %1626 = vmatprep.mubr.f32.mxu0 0.0
    %1627 = vmatmul.mubr.f32.gmra.mxu0 %v1560
    %v1628 = vpop.f32.mrf.mxu0
    %v1629 = vadd.f32 0.0, %v1628
    %v1630 = vpop.f32.mrf.mxu0
    %1631 = vdwg.mxu0
    %v1632 = vadd.f32 %v1460, %v1629
    %s1633 = scalar_lea.vmem [#allocation14], 32
    %1634 = vst [vmem:[%s1633] sm:$0xff] %v1632
    %s1635 = scalar_lea.vmem %s0, 40
    %v1636 = vld [vmem:[%s1635] sm:$0xff]
    %1637 = vmatprep.subr.bf16.mxu0 0
    %1638 = vmatpush1.bf16.msra.mxu0 0
    %1639 = vmatprep.subr.bf16.mxu0 0
    %1640 = vmatpush1.bf16.msra.mxu0 0
    %1641 = vmatprep.subr.bf16.mxu0 0
    %1642 = vmatpush1.bf16.msra.mxu0 0
    %1643 = vmatprep.subr.bf16.mxu0 0
    %1644 = vmatpush1.bf16.msra.mxu0 0
    %1645 = vmatprep.subr.bf16.mxu0 0
    %1646 = vmatpush1.bf16.msra.mxu0 0
    %1647 = vmatprep.subr.bf16.mxu0 0
    %1648 = vmatpush1.bf16.msra.mxu0 0
    %1649 = vmatprep.subr.bf16.mxu0 0
    %1650 = vmatpush1.bf16.msra.mxu0 %v156
    %1651 = vmatprep.subr.bf16.mxu0 0
    %1652 = vmatpush1.bf16.msra.mxu0 %v155
    %1653 = vmatprep.subr.bf16.mxu0 0
    %1654 = vmatpush2.bf16.msra.mxu0 0
    %1655 = vmatprep.subr.bf16.mxu0 0
    %1656 = vmatpush2.bf16.msra.mxu0 0
    %1657 = vmatprep.subr.bf16.mxu0 0
    %1658 = vmatpush2.bf16.msra.mxu0 0
    %1659 = vmatprep.subr.bf16.mxu0 0
    %1660 = vmatpush2.bf16.msra.mxu0 0
    %1661 = vmatprep.subr.bf16.mxu0 0
    %1662 = vmatpush2.bf16.msra.mxu0 0
    %1663 = vmatprep.subr.bf16.mxu0 0
    %1664 = vmatpush2.bf16.msra.mxu0 0
    %1665 = vmatprep.subr.bf16.mxu0 0
    %1666 = vmatpush2.bf16.msra.mxu0 0
    %1667 = vmatprep.subr.bf16.mxu0 0
    %1668 = vmatpush2.bf16.msra.mxu0 0
    %1669 = vmatprep.mubr.bf16.mxu0 0
    %1670 = vmatmul.mubr.bf16.gmra.mxu0 %v1415
    %v1671 = vpop.f32.mrf.mxu0
    %v1672 = vadd.f32 0.0, %v1671
    %v1673 = vpop.f32.mrf.mxu0
    %v1674 = vpop.f32.mrf.mxu0
    %v1675 = vpop.f32.mrf.mxu0
    %1676 = vdwg.mxu0
    %v1677 = vadd.f32 %v1636, %v1672
    %v1678 = vmul.f32 %v1677, 0.5
    %v1679 = vtanh.pop %v1678
    %v1680 = vmul.f32 %v1679, 0.5
    %v1681 = vadd.f32 %v1680, 0.5
    %v1682 = vtanh.pop %v1677
    %v1683 = vmul.f32 %v1681, %v1403
    %1685 = vrot.lane.b32.xlu0 %v1682, 64
    %v1686 = vpop.permute.xlu0 %1685
    %v1688 = vmul.f32 %v1681, %v1686
    %1690 = vrot.lane.b32.xlu0 %v1688, 32
    %v1691 = vpop.permute.xlu0 %1690
    %v1693 = vadd.f32 %v1683, %v1691
    %v1694 = vtanh.pop %v1693
    %1696 = vrot.lane.b32.xlu0 %v1694, 64
    %v1697 = vpop.permute.xlu0 %1696
    %v1699 = vmul.f32 %v1681, %v1697
    %v1700 = vpack.c.bf16 %v1699, %v1699
    %1702 = vrot.lane.b32.xlu0 %v1700, 32
    %v1703 = vpop.permute.xlu0 %1702
    %v1705 = vsel %vm159, %v1703, 0
    %1707 = vmatprep.subr.bf16.mxu0 0
    %1708 = vmatpush1.bf16.msra.mxu0 0
    %1709 = vmatprep.subr.bf16.mxu0 0
    %1710 = vmatpush1.bf16.msra.mxu0 0
    %1711 = vmatprep.subr.bf16.mxu0 0
    %1712 = vmatpush1.bf16.msra.mxu0 0
    %1713 = vmatprep.subr.bf16.mxu0 0
    %1714 = vmatpush1.bf16.msra.mxu0 0
    %1715 = vmatprep.subr.bf16.mxu0 0
    %1716 = vmatpush1.bf16.msra.mxu0 0
    %1717 = vmatprep.subr.bf16.mxu0 0
    %1718 = vmatpush1.bf16.msra.mxu0 0
    %1719 = vmatprep.subr.bf16.mxu0 0
    %1720 = vmatpush1.bf16.msra.mxu0 %v243
    %1721 = vmatprep.subr.bf16.mxu0 0
    %1722 = vmatpush1.bf16.msra.mxu0 %v242
    %1723 = vmatprep.subr.bf16.mxu0 0
    %1724 = vmatpush2.bf16.msra.mxu0 0
    %1725 = vmatprep.subr.bf16.mxu0 0
    %1726 = vmatpush2.bf16.msra.mxu0 0
    %1727 = vmatprep.subr.bf16.mxu0 0
    %1728 = vmatpush2.bf16.msra.mxu0 0
    %1729 = vmatprep.subr.bf16.mxu0 0
    %1730 = vmatpush2.bf16.msra.mxu0 0
    %1731 = vmatprep.subr.bf16.mxu0 0
    %1732 = vmatpush2.bf16.msra.mxu0 0
    %1733 = vmatprep.subr.bf16.mxu0 0
    %1734 = vmatpush2.bf16.msra.mxu0 0
    %1735 = vmatprep.subr.bf16.mxu0 0
    %1736 = vmatpush2.bf16.msra.mxu0 0
    %1737 = vmatprep.subr.bf16.mxu0 0
    %1738 = vmatpush2.bf16.msra.mxu0 0
    %1739 = vmatprep.mubr.bf16.mxu0 0
    %1740 = vmatmul.mubr.bf16.gmra.mxu0 %v1705
    %v1741 = vpop.f32.mrf.mxu0
    %v1742 = vadd.f32 %v122, %v1741
    %v1743 = vpop.f32.mrf.mxu0
    %v1744 = vpop.f32.mrf.mxu0
    %v1745 = vpop.f32.mrf.mxu0
    %1746 = vdwg.mxu0
    %v1747 = vmul.f32 %v1742, 0.5
    %v1748 = vtanh.pop %v1747
    %v1749 = vmul.f32 %v1748, 0.5
    %v1750 = vadd.f32 %v1749, 0.5
    %s1751 = scalar_lea.vmem %s1, 40
    %v1752 = vld [vmem:[%s1751] sm:$0xff]
    %v1753 = vsub.f32 %v1752, %v1750
    %v1754 = vmul.f32 %v1463, %v1463
    %1755 = vadd.xlane.f32.xlu0 %v1754
    %v1756 = vpop.xlane.xlu0 %1755
    %v1757 = vrsqrt.pop %v1756
    %v1758 = vmul.f32 %v1756, %v1757
    %vm1759 = vcmp.eq.f32.partialorder %v1756, inf
    %v1760 = vsel %vm1759, %v1756, %v1758
    %vm1761 = vcmp.eq.f32.partialorder %v1756, 0.0
    %v1762 = vand.u32 %v1756, 2147483648
    %v1763 = vsel %vm1761, %v1762, %v1760
    %1764 = vmatprep.subr.mxu0 0.0
    %1765 = vmatpush1.msra.mxu0 %v139
    %1766 = vmatprep.subr.mxu0 0.0
    %1767 = vmatpush1.msra.mxu0 %v138
    %1768 = vmatprep.subr.mxu0 0.0
    %1769 = vmatpush1.msra.mxu0 %v137
    %1770 = vmatprep.subr.mxu0 0.0
    %1771 = vmatpush1.msra.mxu0 %v136
    %1772 = vmatprep.subr.mxu0 0.0
    %1773 = vmatpush1.msra.mxu0 %v135
    %1774 = vmatprep.subr.mxu0 0.0
    %1775 = vmatpush1.msra.mxu0 %v134
    %1776 = vmatprep.subr.mxu0 0.0
    %1777 = vmatpush1.msra.mxu0 %v133
    %1778 = vmatprep.subr.mxu0 0.0
    %1779 = vmatpush1.msra.mxu0 %v132
    %1780 = vmatprep.subr.mxu0 0.0
    %1781 = vmatpush1.msra.mxu0 %v131
    %1782 = vmatprep.subr.mxu0 0.0
    %1783 = vmatpush1.msra.mxu0 %v130
    %1784 = vmatprep.subr.mxu0 0.0
    %1785 = vmatpush1.msra.mxu0 %v129
    %1786 = vmatprep.subr.mxu0 0.0
    %1787 = vmatpush1.msra.mxu0 %v128
    %1788 = vmatprep.subr.mxu0 0.0
    %1789 = vmatpush1.msra.mxu0 %v127
    %1790 = vmatprep.subr.mxu0 0.0
    %1791 = vmatpush1.msra.mxu0 %v126
    %1792 = vmatprep.subr.mxu0 0.0
    %1793 = vmatpush1.msra.mxu0 %v125
    %1794 = vmatprep.subr.mxu0 0.0
    %1795 = vmatpush1.msra.mxu0 %v124
    %1796 = vmatprep.subr.mxu0 0.0
    %1797 = vmatpush2.msra.mxu0 0.0
    %1798 = vmatprep.subr.mxu0 0.0
    %1799 = vmatpush2.msra.mxu0 0.0
    %1800 = vmatprep.subr.mxu0 0.0
    %1801 = vmatpush2.msra.mxu0 0.0
    %1802 = vmatprep.subr.mxu0 0.0
    %1803 = vmatpush2.msra.mxu0 0.0
    %1804 = vmatprep.subr.mxu0 0.0
    %1805 = vmatpush2.msra.mxu0 0.0
    %1806 = vmatprep.subr.mxu0 0.0
    %1807 = vmatpush2.msra.mxu0 0.0
    %1808 = vmatprep.subr.mxu0 0.0
    %1809 = vmatpush2.msra.mxu0 0.0
    %1810 = vmatprep.subr.mxu0 0.0
    %1811 = vmatpush2.msra.mxu0 0.0
    %1812 = vmatprep.subr.mxu0 0.0
    %1813 = vmatpush2.msra.mxu0 0.0
    %1814 = vmatprep.subr.mxu0 0.0
    %1815 = vmatpush2.msra.mxu0 0.0
    %1816 = vmatprep.subr.mxu0 0.0
    %1817 = vmatpush2.msra.mxu0 0.0
    %1818 = vmatprep.subr.mxu0 0.0
    %1819 = vmatpush2.msra.mxu0 0.0
    %1820 = vmatprep.subr.mxu0 0.0
    %1821 = vmatpush2.msra.mxu0 0.0
    %1822 = vmatprep.subr.mxu0 0.0
    %1823 = vmatpush2.msra.mxu0 0.0
    %1824 = vmatprep.subr.mxu0 0.0
    %1825 = vmatpush2.msra.mxu0 0.0
    %1826 = vmatprep.subr.mxu0 0.0
    %1827 = vmatpush2.msra.mxu0 0.0
    %1828 = vmatprep.mubr.f32.mxu0 0.0
    %1829 = vmatmul.mubr.f32.gmra.mxu0 %v1463
    %v1830 = vpop.f32.mrf.mxu0
    %v1831 = vadd.f32 0.0, %v1830
    %v1832 = vpop.f32.mrf.mxu0
    %1833 = vdwg.mxu0
    %v1834 = vmul.f32 %v1763, %v379
    %v1835 = vmax.f32 %v1834, 1e-08
    %v1836 = vrcp.pop %v1835
    %v1837 = vmul.f32 %v1831, %v1836
    %v1838 = vsel %vm385, %v1837, -inf
    %1839 = vmax.xlane.f32.xlu0 %v1838
    %v1840 = vpop.xlane.xlu0 %1839
    %v1841 = vsub.f32 %v1837, %v1840
    %v1842 = vmul.f32 %v1841, 1.442695
    %v1843 = vpow.pop %v1842
    %v1844 = vsel %vm385, %v1843, 0.0
    %1845 = vadd.xlane.f32.xlu0 %v1844
    %v1846 = vpop.xlane.xlu0 %1845
    %v1847 = vrcp.pop %v1846
    %v1848 = vmul.f32 %v1843, %v1847
    %v1850 = vsel %vm385, %v1848, 0
    %1852 = vmatprep.subr.mxu0 0.0
    %1853 = vmatpush1.msra.mxu0 0.0
    %1854 = vmatprep.subr.mxu0 0.0
    %1855 = vmatpush1.msra.mxu0 0.0
    %1856 = vmatprep.subr.mxu0 0.0
    %1857 = vmatpush1.msra.mxu0 0.0
    %1858 = vmatprep.subr.mxu0 0.0
    %1859 = vmatpush1.msra.mxu0 0.0
    %1860 = vmatprep.subr.mxu0 0.0
    %1861 = vmatpush1.msra.mxu0 0.0
    %1862 = vmatprep.subr.mxu0 0.0
    %1863 = vmatpush1.msra.mxu0 0.0
    %1864 = vmatprep.subr.mxu0 0.0
    %1865 = vmatpush1.msra.mxu0 0.0
    %1866 = vmatprep.subr.mxu0 0.0
    %1867 = vmatpush1.msra.mxu0 0.0
    %1868 = vmatprep.subr.mxu0 0.0
    %1869 = vmatpush1.msra.mxu0 0.0
    %1870 = vmatprep.subr.mxu0 0.0
    %1871 = vmatpush1.msra.mxu0 0.0
    %1872 = vmatprep.subr.mxu0 0.0
    %1873 = vmatpush1.msra.mxu0 0.0
    %1874 = vmatprep.subr.mxu0 0.0
    %1875 = vmatpush1.msra.mxu0 0.0
    %1876 = vmatprep.subr.mxu0 0.0
    %1877 = vmatpush1.msra.mxu0 0.0
    %1878 = vmatprep.subr.mxu0 0.0
    %1879 = vmatpush1.msra.mxu0 0.0
    %1880 = vmatprep.subr.mxu0 0.0
    %1881 = vmatpush1.msra.mxu0 0.0
    %1882 = vmatprep.subr.mxu0 0.0
    %1883 = vmatpush1.msra.mxu0 %v140
    %1884 = vmatprep.subr.mxu0 0.0
    %1885 = vmatpush2.msra.mxu0 0.0
    %1886 = vmatprep.subr.mxu0 0.0
    %1887 = vmatpush2.msra.mxu0 0.0
    %1888 = vmatprep.subr.mxu0 0.0
    %1889 = vmatpush2.msra.mxu0 0.0
    %1890 = vmatprep.subr.mxu0 0.0
    %1891 = vmatpush2.msra.mxu0 0.0
    %1892 = vmatprep.subr.mxu0 0.0
    %1893 = vmatpush2.msra.mxu0 0.0
    %1894 = vmatprep.subr.mxu0 0.0
    %1895 = vmatpush2.msra.mxu0 0.0
    %1896 = vmatprep.subr.mxu0 0.0
    %1897 = vmatpush2.msra.mxu0 0.0
    %1898 = vmatprep.subr.mxu0 0.0
    %1899 = vmatpush2.msra.mxu0 0.0
    %1900 = vmatprep.subr.mxu0 0.0
    %1901 = vmatpush2.msra.mxu0 0.0
    %1902 = vmatprep.subr.mxu0 0.0
    %1903 = vmatpush2.msra.mxu0 0.0
    %1904 = vmatprep.subr.mxu0 0.0
    %1905 = vmatpush2.msra.mxu0 0.0
    %1906 = vmatprep.subr.mxu0 0.0
    %1907 = vmatpush2.msra.mxu0 0.0
    %1908 = vmatprep.subr.mxu0 0.0
    %1909 = vmatpush2.msra.mxu0 0.0
    %1910 = vmatprep.subr.mxu0 0.0
    %1911 = vmatpush2.msra.mxu0 0.0
    %1912 = vmatprep.subr.mxu0 0.0
    %1913 = vmatpush2.msra.mxu0 0.0
    %1914 = vmatprep.subr.mxu0 0.0
    %1915 = vmatpush2.msra.mxu0 0.0
    %1916 = vmatprep.mubr.f32.mxu0 0.0
    %1917 = vmatmul.mubr.f32.gmra.mxu0 %v1850
    %v1918 = vpop.f32.mrf.mxu0
    %v1919 = vadd.f32 0.0, %v1918
    %v1920 = vpop.f32.mrf.mxu0
    %1921 = vdwg.mxu0
    %v1922 = vadd.f32 %v1750, %v1919
    %s1923 = scalar_lea.vmem [#allocation14], 40
    %1924 = vst [vmem:[%s1923] sm:$0xff] %v1922
    %s1925 = scalar_lea.vmem %s0, 48
    %v1926 = vld [vmem:[%s1925] sm:$0xff]
    %1927 = vmatprep.subr.bf16.mxu0 0
    %1928 = vmatpush1.bf16.msra.mxu0 0
    %1929 = vmatprep.subr.bf16.mxu0 0
    %1930 = vmatpush1.bf16.msra.mxu0 0
    %1931 = vmatprep.subr.bf16.mxu0 0
    %1932 = vmatpush1.bf16.msra.mxu0 0
    %1933 = vmatprep.subr.bf16.mxu0 0
    %1934 = vmatpush1.bf16.msra.mxu0 0
    %1935 = vmatprep.subr.bf16.mxu0 0
    %1936 = vmatpush1.bf16.msra.mxu0 0
    %1937 = vmatprep.subr.bf16.mxu0 0
    %1938 = vmatpush1.bf16.msra.mxu0 0
    %1939 = vmatprep.subr.bf16.mxu0 0
    %1940 = vmatpush1.bf16.msra.mxu0 %v156
    %1941 = vmatprep.subr.bf16.mxu0 0
    %1942 = vmatpush1.bf16.msra.mxu0 %v155
    %1943 = vmatprep.subr.bf16.mxu0 0
    %1944 = vmatpush2.bf16.msra.mxu0 0
    %1945 = vmatprep.subr.bf16.mxu0 0
    %1946 = vmatpush2.bf16.msra.mxu0 0
    %1947 = vmatprep.subr.bf16.mxu0 0
    %1948 = vmatpush2.bf16.msra.mxu0 0
    %1949 = vmatprep.subr.bf16.mxu0 0
    %1950 = vmatpush2.bf16.msra.mxu0 0
    %1951 = vmatprep.subr.bf16.mxu0 0
    %1952 = vmatpush2.bf16.msra.mxu0 0
    %1953 = vmatprep.subr.bf16.mxu0 0
    %1954 = vmatpush2.bf16.msra.mxu0 0
    %1955 = vmatprep.subr.bf16.mxu0 0
    %1956 = vmatpush2.bf16.msra.mxu0 0
    %1957 = vmatprep.subr.bf16.mxu0 0
    %1958 = vmatpush2.bf16.msra.mxu0 0
    %1959 = vmatprep.mubr.bf16.mxu0 0
    %1960 = vmatmul.mubr.bf16.gmra.mxu0 %v1705
    %v1961 = vpop.f32.mrf.mxu0
    %v1962 = vadd.f32 0.0, %v1961
    %v1963 = vpop.f32.mrf.mxu0
    %v1964 = vpop.f32.mrf.mxu0
    %v1965 = vpop.f32.mrf.mxu0
    %1966 = vdwg.mxu0
    %v1967 = vadd.f32 %v1926, %v1962
    %v1968 = vmul.f32 %v1967, 0.5
    %v1969 = vtanh.pop %v1968
    %v1970 = vmul.f32 %v1969, 0.5
    %v1971 = vadd.f32 %v1970, 0.5
    %v1972 = vtanh.pop %v1967
    %v1973 = vmul.f32 %v1971, %v1693
    %1975 = vrot.lane.b32.xlu0 %v1972, 64
    %v1976 = vpop.permute.xlu0 %1975
    %v1978 = vmul.f32 %v1971, %v1976
    %1980 = vrot.lane.b32.xlu0 %v1978, 32
    %v1981 = vpop.permute.xlu0 %1980
    %v1983 = vadd.f32 %v1973, %v1981
    %v1984 = vtanh.pop %v1983
    %1986 = vrot.lane.b32.xlu0 %v1984, 64
    %v1987 = vpop.permute.xlu0 %1986
    %v1989 = vmul.f32 %v1971, %v1987
    %v1990 = vpack.c.bf16 %v1989, %v1989
    %1992 = vrot.lane.b32.xlu0 %v1990, 32
    %v1993 = vpop.permute.xlu0 %1992
    %v1995 = vsel %vm159, %v1993, 0
    %1997 = vmatprep.subr.bf16.mxu0 0
    %1998 = vmatpush1.bf16.msra.mxu0 0
    %1999 = vmatprep.subr.bf16.mxu0 0
    %2000 = vmatpush1.bf16.msra.mxu0 0
    %2001 = vmatprep.subr.bf16.mxu0 0
    %2002 = vmatpush1.bf16.msra.mxu0 0
    %2003 = vmatprep.subr.bf16.mxu0 0
    %2004 = vmatpush1.bf16.msra.mxu0 0
    %2005 = vmatprep.subr.bf16.mxu0 0
    %2006 = vmatpush1.bf16.msra.mxu0 0
    %2007 = vmatprep.subr.bf16.mxu0 0
    %2008 = vmatpush1.bf16.msra.mxu0 0
    %2009 = vmatprep.subr.bf16.mxu0 0
    %2010 = vmatpush1.bf16.msra.mxu0 %v243
    %2011 = vmatprep.subr.bf16.mxu0 0
    %2012 = vmatpush1.bf16.msra.mxu0 %v242
    %2013 = vmatprep.subr.bf16.mxu0 0
    %2014 = vmatpush2.bf16.msra.mxu0 0
    %2015 = vmatprep.subr.bf16.mxu0 0
    %2016 = vmatpush2.bf16.msra.mxu0 0
    %2017 = vmatprep.subr.bf16.mxu0 0
    %2018 = vmatpush2.bf16.msra.mxu0 0
    %2019 = vmatprep.subr.bf16.mxu0 0
    %2020 = vmatpush2.bf16.msra.mxu0 0
    %2021 = vmatprep.subr.bf16.mxu0 0
    %2022 = vmatpush2.bf16.msra.mxu0 0
    %2023 = vmatprep.subr.bf16.mxu0 0
    %2024 = vmatpush2.bf16.msra.mxu0 0
    %2025 = vmatprep.subr.bf16.mxu0 0
    %2026 = vmatpush2.bf16.msra.mxu0 0
    %2027 = vmatprep.subr.bf16.mxu0 0
    %2028 = vmatpush2.bf16.msra.mxu0 0
    %2029 = vmatprep.mubr.bf16.mxu0 0
    %2030 = vmatmul.mubr.bf16.gmra.mxu0 %v1995
    %v2031 = vpop.f32.mrf.mxu0
    %v2032 = vadd.f32 %v122, %v2031
    %v2033 = vpop.f32.mrf.mxu0
    %v2034 = vpop.f32.mrf.mxu0
    %v2035 = vpop.f32.mrf.mxu0
    %2036 = vdwg.mxu0
    %v2037 = vmul.f32 %v2032, 0.5
    %v2038 = vtanh.pop %v2037
    %v2039 = vmul.f32 %v2038, 0.5
    %v2040 = vadd.f32 %v2039, 0.5
    %s2041 = scalar_lea.vmem %s1, 48
    %v2042 = vld [vmem:[%s2041] sm:$0xff]
    %v2043 = vsub.f32 %v2042, %v2040
    %v2044 = vmul.f32 %v1753, %v1753
    %2045 = vadd.xlane.f32.xlu0 %v2044
    %v2046 = vpop.xlane.xlu0 %2045
    %v2047 = vrsqrt.pop %v2046
    %v2048 = vmul.f32 %v2046, %v2047
    %vm2049 = vcmp.eq.f32.partialorder %v2046, inf
    %v2050 = vsel %vm2049, %v2046, %v2048
    %vm2051 = vcmp.eq.f32.partialorder %v2046, 0.0
    %v2052 = vand.u32 %v2046, 2147483648
    %v2053 = vsel %vm2051, %v2052, %v2050
    %2054 = vmatprep.subr.mxu0 0.0
    %2055 = vmatpush1.msra.mxu0 %v139
    %2056 = vmatprep.subr.mxu0 0.0
    %2057 = vmatpush1.msra.mxu0 %v138
    %2058 = vmatprep.subr.mxu0 0.0
    %2059 = vmatpush1.msra.mxu0 %v137
    %2060 = vmatprep.subr.mxu0 0.0
    %2061 = vmatpush1.msra.mxu0 %v136
    %2062 = vmatprep.subr.mxu0 0.0
    %2063 = vmatpush1.msra.mxu0 %v135
    %2064 = vmatprep.subr.mxu0 0.0
    %2065 = vmatpush1.msra.mxu0 %v134
    %2066 = vmatprep.subr.mxu0 0.0
    %2067 = vmatpush1.msra.mxu0 %v133
    %2068 = vmatprep.subr.mxu0 0.0
    %2069 = vmatpush1.msra.mxu0 %v132
    %2070 = vmatprep.subr.mxu0 0.0
    %2071 = vmatpush1.msra.mxu0 %v131
    %2072 = vmatprep.subr.mxu0 0.0
    %2073 = vmatpush1.msra.mxu0 %v130
    %2074 = vmatprep.subr.mxu0 0.0
    %2075 = vmatpush1.msra.mxu0 %v129
    %2076 = vmatprep.subr.mxu0 0.0
    %2077 = vmatpush1.msra.mxu0 %v128
    %2078 = vmatprep.subr.mxu0 0.0
    %2079 = vmatpush1.msra.mxu0 %v127
    %2080 = vmatprep.subr.mxu0 0.0
    %2081 = vmatpush1.msra.mxu0 %v126
    %2082 = vmatprep.subr.mxu0 0.0
    %2083 = vmatpush1.msra.mxu0 %v125
    %2084 = vmatprep.subr.mxu0 0.0
    %2085 = vmatpush1.msra.mxu0 %v124
    %2086 = vmatprep.subr.mxu0 0.0
    %2087 = vmatpush2.msra.mxu0 0.0
    %2088 = vmatprep.subr.mxu0 0.0
    %2089 = vmatpush2.msra.mxu0 0.0
    %2090 = vmatprep.subr.mxu0 0.0
    %2091 = vmatpush2.msra.mxu0 0.0
    %2092 = vmatprep.subr.mxu0 0.0
    %2093 = vmatpush2.msra.mxu0 0.0
    %2094 = vmatprep.subr.mxu0 0.0
    %2095 = vmatpush2.msra.mxu0 0.0
    %2096 = vmatprep.subr.mxu0 0.0
    %2097 = vmatpush2.msra.mxu0 0.0
    %2098 = vmatprep.subr.mxu0 0.0
    %2099 = vmatpush2.msra.mxu0 0.0
    %2100 = vmatprep.subr.mxu0 0.0
    %2101 = vmatpush2.msra.mxu0 0.0
    %2102 = vmatprep.subr.mxu0 0.0
    %2103 = vmatpush2.msra.mxu0 0.0
    %2104 = vmatprep.subr.mxu0 0.0
    %2105 = vmatpush2.msra.mxu0 0.0
    %2106 = vmatprep.subr.mxu0 0.0
    %2107 = vmatpush2.msra.mxu0 0.0
    %2108 = vmatprep.subr.mxu0 0.0
    %2109 = vmatpush2.msra.mxu0 0.0
    %2110 = vmatprep.subr.mxu0 0.0
    %2111 = vmatpush2.msra.mxu0 0.0
    %2112 = vmatprep.subr.mxu0 0.0
    %2113 = vmatpush2.msra.mxu0 0.0
    %2114 = vmatprep.subr.mxu0 0.0
    %2115 = vmatpush2.msra.mxu0 0.0
    %2116 = vmatprep.subr.mxu0 0.0
    %2117 = vmatpush2.msra.mxu0 0.0
    %2118 = vmatprep.mubr.f32.mxu0 0.0
    %2119 = vmatmul.mubr.f32.gmra.mxu0 %v1753
    %v2120 = vpop.f32.mrf.mxu0
    %v2121 = vadd.f32 0.0, %v2120
    %v2122 = vpop.f32.mrf.mxu0
    %2123 = vdwg.mxu0
    %v2124 = vmul.f32 %v2053, %v379
    %v2125 = vmax.f32 %v2124, 1e-08
    %v2126 = vrcp.pop %v2125
    %v2127 = vmul.f32 %v2121, %v2126
    %v2128 = vsel %vm385, %v2127, -inf
    %2129 = vmax.xlane.f32.xlu0 %v2128
    %v2130 = vpop.xlane.xlu0 %2129
    %v2131 = vsub.f32 %v2127, %v2130
    %v2132 = vmul.f32 %v2131, 1.442695
    %v2133 = vpow.pop %v2132
    %v2134 = vsel %vm385, %v2133, 0.0
    %2135 = vadd.xlane.f32.xlu0 %v2134
    %v2136 = vpop.xlane.xlu0 %2135
    %v2137 = vrcp.pop %v2136
    %v2138 = vmul.f32 %v2133, %v2137
    %v2140 = vsel %vm385, %v2138, 0
    %2142 = vmatprep.subr.mxu0 0.0
    %2143 = vmatpush1.msra.mxu0 0.0
    %2144 = vmatprep.subr.mxu0 0.0
    %2145 = vmatpush1.msra.mxu0 0.0
    %2146 = vmatprep.subr.mxu0 0.0
    %2147 = vmatpush1.msra.mxu0 0.0
    %2148 = vmatprep.subr.mxu0 0.0
    %2149 = vmatpush1.msra.mxu0 0.0
    %2150 = vmatprep.subr.mxu0 0.0
    %2151 = vmatpush1.msra.mxu0 0.0
    %2152 = vmatprep.subr.mxu0 0.0
    %2153 = vmatpush1.msra.mxu0 0.0
    %2154 = vmatprep.subr.mxu0 0.0
    %2155 = vmatpush1.msra.mxu0 0.0
    %2156 = vmatprep.subr.mxu0 0.0
    %2157 = vmatpush1.msra.mxu0 0.0
    %2158 = vmatprep.subr.mxu0 0.0
    %2159 = vmatpush1.msra.mxu0 0.0
    %2160 = vmatprep.subr.mxu0 0.0
    %2161 = vmatpush1.msra.mxu0 0.0
    %2162 = vmatprep.subr.mxu0 0.0
    %2163 = vmatpush1.msra.mxu0 0.0
    %2164 = vmatprep.subr.mxu0 0.0
    %2165 = vmatpush1.msra.mxu0 0.0
    %2166 = vmatprep.subr.mxu0 0.0
    %2167 = vmatpush1.msra.mxu0 0.0
    %2168 = vmatprep.subr.mxu0 0.0
    %2169 = vmatpush1.msra.mxu0 0.0
    %2170 = vmatprep.subr.mxu0 0.0
    %2171 = vmatpush1.msra.mxu0 0.0
    %2172 = vmatprep.subr.mxu0 0.0
    %2173 = vmatpush1.msra.mxu0 %v140
    %2174 = vmatprep.subr.mxu0 0.0
    %2175 = vmatpush2.msra.mxu0 0.0
    %2176 = vmatprep.subr.mxu0 0.0
    %2177 = vmatpush2.msra.mxu0 0.0
    %2178 = vmatprep.subr.mxu0 0.0
    %2179 = vmatpush2.msra.mxu0 0.0
    %2180 = vmatprep.subr.mxu0 0.0
    %2181 = vmatpush2.msra.mxu0 0.0
    %2182 = vmatprep.subr.mxu0 0.0
    %2183 = vmatpush2.msra.mxu0 0.0
    %2184 = vmatprep.subr.mxu0 0.0
    %2185 = vmatpush2.msra.mxu0 0.0
    %2186 = vmatprep.subr.mxu0 0.0
    %2187 = vmatpush2.msra.mxu0 0.0
    %2188 = vmatprep.subr.mxu0 0.0
    %2189 = vmatpush2.msra.mxu0 0.0
    %2190 = vmatprep.subr.mxu0 0.0
    %2191 = vmatpush2.msra.mxu0 0.0
    %2192 = vmatprep.subr.mxu0 0.0
    %2193 = vmatpush2.msra.mxu0 0.0
    %2194 = vmatprep.subr.mxu0 0.0
    %2195 = vmatpush2.msra.mxu0 0.0
    %2196 = vmatprep.subr.mxu0 0.0
    %2197 = vmatpush2.msra.mxu0 0.0
    %2198 = vmatprep.subr.mxu0 0.0
    %2199 = vmatpush2.msra.mxu0 0.0
    %2200 = vmatprep.subr.mxu0 0.0
    %2201 = vmatpush2.msra.mxu0 0.0
    %2202 = vmatprep.subr.mxu0 0.0
    %2203 = vmatpush2.msra.mxu0 0.0
    %2204 = vmatprep.subr.mxu0 0.0
    %2205 = vmatpush2.msra.mxu0 0.0
    %2206 = vmatprep.mubr.f32.mxu0 0.0
    %2207 = vmatmul.mubr.f32.gmra.mxu0 %v2140
    %v2208 = vpop.f32.mrf.mxu0
    %v2209 = vadd.f32 0.0, %v2208
    %v2210 = vpop.f32.mrf.mxu0
    %2211 = vdwg.mxu0
    %v2212 = vadd.f32 %v2040, %v2209
    %s2213 = scalar_lea.vmem [#allocation14], 48
    %2214 = vst [vmem:[%s2213] sm:$0xff] %v2212
    %s2215 = scalar_lea.vmem %s0, 56
    %v2216 = vld [vmem:[%s2215] sm:$0xff]
    %2217 = vmatprep.subr.bf16.mxu0 0
    %2218 = vmatpush1.bf16.msra.mxu0 0
    %2219 = vmatprep.subr.bf16.mxu0 0
    %2220 = vmatpush1.bf16.msra.mxu0 0
    %2221 = vmatprep.subr.bf16.mxu0 0
    %2222 = vmatpush1.bf16.msra.mxu0 0
    %2223 = vmatprep.subr.bf16.mxu0 0
    %2224 = vmatpush1.bf16.msra.mxu0 0
    %2225 = vmatprep.subr.bf16.mxu0 0
    %2226 = vmatpush1.bf16.msra.mxu0 0
    %2227 = vmatprep.subr.bf16.mxu0 0
    %2228 = vmatpush1.bf16.msra.mxu0 0
    %2229 = vmatprep.subr.bf16.mxu0 0
    %2230 = vmatpush1.bf16.msra.mxu0 %v156
    %2231 = vmatprep.subr.bf16.mxu0 0
    %2232 = vmatpush1.bf16.msra.mxu0 %v155
    %2233 = vmatprep.subr.bf16.mxu0 0
    %2234 = vmatpush2.bf16.msra.mxu0 0
    %2235 = vmatprep.subr.bf16.mxu0 0
    %2236 = vmatpush2.bf16.msra.mxu0 0
    %2237 = vmatprep.subr.bf16.mxu0 0
    %2238 = vmatpush2.bf16.msra.mxu0 0
    %2239 = vmatprep.subr.bf16.mxu0 0
    %2240 = vmatpush2.bf16.msra.mxu0 0
    %2241 = vmatprep.subr.bf16.mxu0 0
    %2242 = vmatpush2.bf16.msra.mxu0 0
    %2243 = vmatprep.subr.bf16.mxu0 0
    %2244 = vmatpush2.bf16.msra.mxu0 0
    %2245 = vmatprep.subr.bf16.mxu0 0
    %2246 = vmatpush2.bf16.msra.mxu0 0
    %2247 = vmatprep.subr.bf16.mxu0 0
    %2248 = vmatpush2.bf16.msra.mxu0 0
    %2249 = vmatprep.mubr.bf16.mxu0 0
    %2250 = vmatmul.mubr.bf16.gmra.mxu0 %v1995
    %v2251 = vpop.f32.mrf.mxu0
    %v2252 = vadd.f32 0.0, %v2251
    %v2253 = vpop.f32.mrf.mxu0
    %v2254 = vpop.f32.mrf.mxu0
    %v2255 = vpop.f32.mrf.mxu0
    %2256 = vdwg.mxu0
    %v2257 = vadd.f32 %v2216, %v2252
    %v2258 = vmul.f32 %v2257, 0.5
    %v2259 = vtanh.pop %v2258
    %v2260 = vmul.f32 %v2259, 0.5
    %v2261 = vadd.f32 %v2260, 0.5
    %v2262 = vtanh.pop %v2257
    %v2263 = vmul.f32 %v2261, %v1983
    %2265 = vrot.lane.b32.xlu0 %v2262, 64
    %v2266 = vpop.permute.xlu0 %2265
    %v2268 = vmul.f32 %v2261, %v2266
    %2270 = vrot.lane.b32.xlu0 %v2268, 32
    %v2271 = vpop.permute.xlu0 %2270
    %v2273 = vadd.f32 %v2263, %v2271
    %v2274 = vtanh.pop %v2273
    %2276 = vrot.lane.b32.xlu0 %v2274, 64
    %v2277 = vpop.permute.xlu0 %2276
    %v2279 = vmul.f32 %v2261, %v2277
    %v2280 = vpack.c.bf16 %v2279, %v2279
    %2282 = vrot.lane.b32.xlu0 %v2280, 32
    %v2283 = vpop.permute.xlu0 %2282
    %v2285 = vsel %vm159, %v2283, 0
    %2287 = vmatprep.subr.bf16.mxu0 0
    %2288 = vmatpush1.bf16.msra.mxu0 0
    %2289 = vmatprep.subr.bf16.mxu0 0
    %2290 = vmatpush1.bf16.msra.mxu0 0
    %2291 = vmatprep.subr.bf16.mxu0 0
    %2292 = vmatpush1.bf16.msra.mxu0 0
    %2293 = vmatprep.subr.bf16.mxu0 0
    %2294 = vmatpush1.bf16.msra.mxu0 0
    %2295 = vmatprep.subr.bf16.mxu0 0
    %2296 = vmatpush1.bf16.msra.mxu0 0
    %2297 = vmatprep.subr.bf16.mxu0 0
    %2298 = vmatpush1.bf16.msra.mxu0 0
    %2299 = vmatprep.subr.bf16.mxu0 0
    %2300 = vmatpush1.bf16.msra.mxu0 %v243
    %2301 = vmatprep.subr.bf16.mxu0 0
    %2302 = vmatpush1.bf16.msra.mxu0 %v242
    %2303 = vmatprep.subr.bf16.mxu0 0
    %2304 = vmatpush2.bf16.msra.mxu0 0
    %2305 = vmatprep.subr.bf16.mxu0 0
    %2306 = vmatpush2.bf16.msra.mxu0 0
    %2307 = vmatprep.subr.bf16.mxu0 0
    %2308 = vmatpush2.bf16.msra.mxu0 0
    %2309 = vmatprep.subr.bf16.mxu0 0
    %2310 = vmatpush2.bf16.msra.mxu0 0
    %2311 = vmatprep.subr.bf16.mxu0 0
    %2312 = vmatpush2.bf16.msra.mxu0 0
    %2313 = vmatprep.subr.bf16.mxu0 0
    %2314 = vmatpush2.bf16.msra.mxu0 0
    %2315 = vmatprep.subr.bf16.mxu0 0
    %2316 = vmatpush2.bf16.msra.mxu0 0
    %2317 = vmatprep.subr.bf16.mxu0 0
    %2318 = vmatpush2.bf16.msra.mxu0 0
    %2319 = vmatprep.mubr.bf16.mxu0 0
    %2320 = vmatmul.mubr.bf16.gmra.mxu0 %v2285
    %v2321 = vpop.f32.mrf.mxu0
    %v2322 = vadd.f32 %v122, %v2321
    %v2323 = vpop.f32.mrf.mxu0
    %v2324 = vpop.f32.mrf.mxu0
    %v2325 = vpop.f32.mrf.mxu0
    %2326 = vdwg.mxu0
    %v2327 = vmul.f32 %v2322, 0.5
    %v2328 = vtanh.pop %v2327
    %v2329 = vmul.f32 %v2328, 0.5
    %v2330 = vadd.f32 %v2329, 0.5
    %s2331 = scalar_lea.vmem %s1, 56
    %v2332 = vld [vmem:[%s2331] sm:$0xff]
    %v2333 = vsub.f32 %v2332, %v2330
    %v2334 = vmul.f32 %v2043, %v2043
    %2335 = vadd.xlane.f32.xlu0 %v2334
    %v2336 = vpop.xlane.xlu0 %2335
    %v2337 = vrsqrt.pop %v2336
    %v2338 = vmul.f32 %v2336, %v2337
    %vm2339 = vcmp.eq.f32.partialorder %v2336, inf
    %v2340 = vsel %vm2339, %v2336, %v2338
    %vm2341 = vcmp.eq.f32.partialorder %v2336, 0.0
    %v2342 = vand.u32 %v2336, 2147483648
    %v2343 = vsel %vm2341, %v2342, %v2340
    %2344 = vmatprep.subr.mxu0 0.0
    %2345 = vmatpush1.msra.mxu0 %v139
    %2346 = vmatprep.subr.mxu0 0.0
    %2347 = vmatpush1.msra.mxu0 %v138
    %2348 = vmatprep.subr.mxu0 0.0
    %2349 = vmatpush1.msra.mxu0 %v137
    %2350 = vmatprep.subr.mxu0 0.0
    %2351 = vmatpush1.msra.mxu0 %v136
    %2352 = vmatprep.subr.mxu0 0.0
    %2353 = vmatpush1.msra.mxu0 %v135
    %2354 = vmatprep.subr.mxu0 0.0
    %2355 = vmatpush1.msra.mxu0 %v134
    %2356 = vmatprep.subr.mxu0 0.0
    %2357 = vmatpush1.msra.mxu0 %v133
    %2358 = vmatprep.subr.mxu0 0.0
    %2359 = vmatpush1.msra.mxu0 %v132
    %2360 = vmatprep.subr.mxu0 0.0
    %2361 = vmatpush1.msra.mxu0 %v131
    %2362 = vmatprep.subr.mxu0 0.0
    %2363 = vmatpush1.msra.mxu0 %v130
    %2364 = vmatprep.subr.mxu0 0.0
    %2365 = vmatpush1.msra.mxu0 %v129
    %2366 = vmatprep.subr.mxu0 0.0
    %2367 = vmatpush1.msra.mxu0 %v128
    %2368 = vmatprep.subr.mxu0 0.0
    %2369 = vmatpush1.msra.mxu0 %v127
    %2370 = vmatprep.subr.mxu0 0.0
    %2371 = vmatpush1.msra.mxu0 %v126
    %2372 = vmatprep.subr.mxu0 0.0
    %2373 = vmatpush1.msra.mxu0 %v125
    %2374 = vmatprep.subr.mxu0 0.0
    %2375 = vmatpush1.msra.mxu0 %v124
    %2376 = vmatprep.subr.mxu0 0.0
    %2377 = vmatpush2.msra.mxu0 0.0
    %2378 = vmatprep.subr.mxu0 0.0
    %2379 = vmatpush2.msra.mxu0 0.0
    %2380 = vmatprep.subr.mxu0 0.0
    %2381 = vmatpush2.msra.mxu0 0.0
    %2382 = vmatprep.subr.mxu0 0.0
    %2383 = vmatpush2.msra.mxu0 0.0
    %2384 = vmatprep.subr.mxu0 0.0
    %2385 = vmatpush2.msra.mxu0 0.0
    %2386 = vmatprep.subr.mxu0 0.0
    %2387 = vmatpush2.msra.mxu0 0.0
    %2388 = vmatprep.subr.mxu0 0.0
    %2389 = vmatpush2.msra.mxu0 0.0
    %2390 = vmatprep.subr.mxu0 0.0
    %2391 = vmatpush2.msra.mxu0 0.0
    %2392 = vmatprep.subr.mxu0 0.0
    %2393 = vmatpush2.msra.mxu0 0.0
    %2394 = vmatprep.subr.mxu0 0.0
    %2395 = vmatpush2.msra.mxu0 0.0
    %2396 = vmatprep.subr.mxu0 0.0
    %2397 = vmatpush2.msra.mxu0 0.0
    %2398 = vmatprep.subr.mxu0 0.0
    %2399 = vmatpush2.msra.mxu0 0.0
    %2400 = vmatprep.subr.mxu0 0.0
    %2401 = vmatpush2.msra.mxu0 0.0
    %2402 = vmatprep.subr.mxu0 0.0
    %2403 = vmatpush2.msra.mxu0 0.0
    %2404 = vmatprep.subr.mxu0 0.0
    %2405 = vmatpush2.msra.mxu0 0.0
    %2406 = vmatprep.subr.mxu0 0.0
    %2407 = vmatpush2.msra.mxu0 0.0
    %2408 = vmatprep.mubr.f32.mxu0 0.0
    %2409 = vmatmul.mubr.f32.gmra.mxu0 %v2043
    %v2410 = vpop.f32.mrf.mxu0
    %v2411 = vadd.f32 0.0, %v2410
    %v2412 = vpop.f32.mrf.mxu0
    %2413 = vdwg.mxu0
    %v2414 = vmul.f32 %v2343, %v379
    %v2415 = vmax.f32 %v2414, 1e-08
    %v2416 = vrcp.pop %v2415
    %v2417 = vmul.f32 %v2411, %v2416
    %v2418 = vsel %vm385, %v2417, -inf
    %2419 = vmax.xlane.f32.xlu0 %v2418
    %v2420 = vpop.xlane.xlu0 %2419
    %v2421 = vsub.f32 %v2417, %v2420
    %v2422 = vmul.f32 %v2421, 1.442695
    %v2423 = vpow.pop %v2422
    %v2424 = vsel %vm385, %v2423, 0.0
    %2425 = vadd.xlane.f32.xlu0 %v2424
    %v2426 = vpop.xlane.xlu0 %2425
    %v2427 = vrcp.pop %v2426
    %v2428 = vmul.f32 %v2423, %v2427
    %v2430 = vsel %vm385, %v2428, 0
    %2432 = vmatprep.subr.mxu0 0.0
    %2433 = vmatpush1.msra.mxu0 0.0
    %2434 = vmatprep.subr.mxu0 0.0
    %2435 = vmatpush1.msra.mxu0 0.0
    %2436 = vmatprep.subr.mxu0 0.0
    %2437 = vmatpush1.msra.mxu0 0.0
    %2438 = vmatprep.subr.mxu0 0.0
    %2439 = vmatpush1.msra.mxu0 0.0
    %2440 = vmatprep.subr.mxu0 0.0
    %2441 = vmatpush1.msra.mxu0 0.0
    %2442 = vmatprep.subr.mxu0 0.0
    %2443 = vmatpush1.msra.mxu0 0.0
    %2444 = vmatprep.subr.mxu0 0.0
    %2445 = vmatpush1.msra.mxu0 0.0
    %2446 = vmatprep.subr.mxu0 0.0
    %2447 = vmatpush1.msra.mxu0 0.0
    %2448 = vmatprep.subr.mxu0 0.0
    %2449 = vmatpush1.msra.mxu0 0.0
    %2450 = vmatprep.subr.mxu0 0.0
    %2451 = vmatpush1.msra.mxu0 0.0
    %2452 = vmatprep.subr.mxu0 0.0
    %2453 = vmatpush1.msra.mxu0 0.0
    %2454 = vmatprep.subr.mxu0 0.0
    %2455 = vmatpush1.msra.mxu0 0.0
    %2456 = vmatprep.subr.mxu0 0.0
    %2457 = vmatpush1.msra.mxu0 0.0
    %2458 = vmatprep.subr.mxu0 0.0
    %2459 = vmatpush1.msra.mxu0 0.0
    %2460 = vmatprep.subr.mxu0 0.0
    %2461 = vmatpush1.msra.mxu0 0.0
    %2462 = vmatprep.subr.mxu0 0.0
    %2463 = vmatpush1.msra.mxu0 %v140
    %2464 = vmatprep.subr.mxu0 0.0
    %2465 = vmatpush2.msra.mxu0 0.0
    %2466 = vmatprep.subr.mxu0 0.0
    %2467 = vmatpush2.msra.mxu0 0.0
    %2468 = vmatprep.subr.mxu0 0.0
    %2469 = vmatpush2.msra.mxu0 0.0
    %2470 = vmatprep.subr.mxu0 0.0
    %2471 = vmatpush2.msra.mxu0 0.0
    %2472 = vmatprep.subr.mxu0 0.0
    %2473 = vmatpush2.msra.mxu0 0.0
    %2474 = vmatprep.subr.mxu0 0.0
    %2475 = vmatpush2.msra.mxu0 0.0
    %2476 = vmatprep.subr.mxu0 0.0
    %2477 = vmatpush2.msra.mxu0 0.0
    %2478 = vmatprep.subr.mxu0 0.0
    %2479 = vmatpush2.msra.mxu0 0.0
    %2480 = vmatprep.subr.mxu0 0.0
    %2481 = vmatpush2.msra.mxu0 0.0
    %2482 = vmatprep.subr.mxu0 0.0
    %2483 = vmatpush2.msra.mxu0 0.0
    %2484 = vmatprep.subr.mxu0 0.0
    %2485 = vmatpush2.msra.mxu0 0.0
    %2486 = vmatprep.subr.mxu0 0.0
    %2487 = vmatpush2.msra.mxu0 0.0
    %2488 = vmatprep.subr.mxu0 0.0
    %2489 = vmatpush2.msra.mxu0 0.0
    %2490 = vmatprep.subr.mxu0 0.0
    %2491 = vmatpush2.msra.mxu0 0.0
    %2492 = vmatprep.subr.mxu0 0.0
    %2493 = vmatpush2.msra.mxu0 0.0
    %2494 = vmatprep.subr.mxu0 0.0
    %2495 = vmatpush2.msra.mxu0 0.0
    %2496 = vmatprep.mubr.f32.mxu0 0.0
    %2497 = vmatmul.mubr.f32.gmra.mxu0 %v2430
    %v2498 = vpop.f32.mrf.mxu0
    %v2499 = vadd.f32 0.0, %v2498
    %v2500 = vpop.f32.mrf.mxu0
    %2501 = vdwg.mxu0
    %v2502 = vadd.f32 %v2330, %v2499
    %s2503 = scalar_lea.vmem [#allocation14], 56
    %2504 = vst [vmem:[%s2503] sm:$0xff] %v2502
    %2506 = vrot.lane.b32.xlu0 %v2279, 32
    %v2507 = vpop.permute.xlu0 %2506
    %2509 = vst.msk [vmem:[#allocation2] sm:$0xff] %vm159, %v2507
    %2511 = vrot.lane.b32.xlu0 %v2273, 96
    %v2512 = vpop.permute.xlu0 %2511
    %2514 = vst.msk [vmem:[#allocation3] sm:$0xff] %vm159, %v2512
    %2515 = vst [vmem:[#allocation4] sm:$0xff] %v2333
    // Predicated region
    $region66: #{tpu_custom_call.1} parent=1 // pred_check
      _
    $region67: #{tpu_custom_call.1} parent=1 // pred_check_branch
      %2517 = sbr.rel (0) target = $region69
    $region68: #{tpu_custom_call.1} parent=1 // pred_region
      %s2519 = ssub.s32 1024, 1024
      %2520 = vsyncadd [#allocation7], %s2519
      %s2521 = sshll.u32 [#allocation14], 4
      %s2522 = int_to_ptr.vmem [resolvable:$true] %s2521
      %2527 = dma.vmem_to_hbm [thread:$0]  %s2522, 1024, %s10, [#allocation7], 128, 128, 8
    $region69: #{tpu_custom_call.1} parent=1 // pred_fallthru
      _
    // Predicated region
    $region70: #{tpu_custom_call.1} parent=1 // pred_check
      _
    $region71: #{tpu_custom_call.1} parent=1 // pred_check_branch
      %2529 = sbr.rel (0) target = $region73
    $region72: #{tpu_custom_call.1} parent=1 // pred_region
      %2530 = dma.done [#allocation7], 1024
    $region73: #{tpu_custom_call.1} parent=1 // pred_fallthru
      _
    %2531 = vsyncpa [#allocation6], 1
    %2532 = vsyncpa [#allocation9], 1
    %2533 = vsyncpa [#allocation12], 1
    %2534 = vsyncpa [#allocation7], 1

</llo_original>
